<compile_context>
chip_gen: v6e
topology: v6e:2x2x1
jax: 0.10.0
libtpu: 0.0.40
codegen_flags: <defaults>
</compile_context>

<pallas_src>
import jax
import jax.numpy as jnp
from jax import lax
from jax.experimental import pallas as pl
from jax.experimental.pallas import tpu as pltpu


CPAD = 128  # lane-dense channel padding for all layers


def _fused_kernel(x_ref, w1_ref, w2_ref, w3_ref, sb1_ref, sb2_ref, sb3_ref,
                  o_ref, acta_ref, actb_ref):
    """Fused conv/BN/ReLU x3 for one image.

    x_ref:          (1, H, W, CPAD)       input image, channels zero-padded
    w{1,2,3}_ref:   (9*CPAD, CPAD) bf16   im2col-packed conv weights
    sb{1,2,3}_ref:  (2, CPAD) f32         row 0 = folded BN scale, row 1 = bias
    o_ref:          (1, H, W, CPAD)       lane-dense output (padded channels)
    acta/actb_ref:  (H+2, W+2, CPAD) f32  VMEM ping-pong activations (with halo)
    """
    H = o_ref.shape[1]
    W = o_ref.shape[2]
    C = o_ref.shape[3]

    # Zero halo + padded channels once, then place the input in the interior.
    # (The conv's padding=1 lives entirely in VMEM -- no HBM pad traffic.)
    acta_ref[...] = jnp.zeros_like(acta_ref)
    actb_ref[...] = jnp.zeros_like(actb_ref)
    acta_ref[1:H + 1, 1:W + 1, :] = x_ref[0]

    def conv_bn_relu(src_ref, w_ref, sb_ref):
        # bf16 for the MXU (f32 accumulation); cast once on the padded tile.
        xb = src_ref[...].astype(jnp.bfloat16)                 # (H+2, W+2, C)
        taps = []
        for dy in range(3):
            for dx in range(3):
                taps.append(xb[dy:dy + H, dx:dx + W, :].reshape(H * W, C))
        # Lane-tile-aligned im2col: 9 blocks of exactly 128 lanes each.
        patches = jnp.concatenate(taps, axis=-1)               # (H*W, 9*C)
        # Single wide-K MXU matmul per layer.
        acc = jnp.dot(patches, w_ref[...],
                      preferred_element_type=jnp.float32)      # (H*W, C) f32
        # Folded conv-bias + eval-mode BN, then ReLU (f32 epilogue).
        y = jnp.maximum(acc * sb_ref[0:1, :] + sb_ref[1:2, :], 0.0)
        return y.reshape(H, W, C)

    # Layer 1: acta -> actb ; Layer 2: actb -> acta ; Layer 3: acta -> out.
    actb_ref[1:H + 1, 1:W + 1, :] = conv_bn_relu(acta_ref, w1_ref, sb1_ref)
    acta_ref[1:H + 1, 1:W + 1, :] = conv_bn_relu(actb_ref, w2_ref, sb2_ref)
    o_ref[0] = conv_bn_relu(acta_ref, w3_ref, sb3_ref)


def _fold_and_pack(w, b, gamma, beta, mean, var, eps=1e-5):
    """Pad to CPAD channels, fold conv-bias + eval-mode BN, pack for the kernel."""
    _, _, cin, cout = w.shape
    wp = jnp.zeros((3, 3, CPAD, CPAD), jnp.float32)
    wp = wp.at[:, :, :cin, :cout].set(w)
    # Row order (dy, dx, cin) matches the kernel's im2col concat order.
    wp = wp.reshape(9 * CPAD, CPAD).astype(jnp.bfloat16)
    inv_std = gamma / jnp.sqrt(var + eps)
    scale = jnp.zeros((CPAD,), jnp.float32).at[:cout].set(inv_std)
    bias = jnp.zeros((CPAD,), jnp.float32).at[:cout].set(
        (b - mean) * inv_std + beta)
    sb = jnp.stack([scale, bias], axis=0)                      # (2, CPAD)
    return wp, sb


@jax.jit
def model_viz_forward(x_nchw, params):
    """Full modelViz forward. Input/output NCHW like PyTorch."""
    x = jnp.transpose(x_nchw, (0, 2, 3, 1))                    # NCHW -> NHWC
    N, H, W, cin0 = x.shape
    cout_final = params[-1][0].shape[-1]

    # One-time, tiny (6 KiB -> lane-dense) channel pad of the network input.
    xp = jnp.pad(x, ((0, 0), (0, 0), (0, 0), (0, CPAD - cin0)))
    (w1, sb1), (w2, sb2), (w3, sb3) = [_fold_and_pack(*p) for p in params]

    out_pad = pl.pallas_call(
        _fused_kernel,
        out_shape=jax.ShapeDtypeStruct((N, H, W, CPAD), jnp.float32),
        grid_spec=pltpu.PrefetchScalarGridSpec(
            num_scalar_prefetch=0,
            grid=(N,),
            in_specs=[
                pl.BlockSpec((1, H, W, CPAD), lambda n: (n, 0, 0, 0)),
                pl.BlockSpec((9 * CPAD, CPAD), lambda n: (0, 0)),
                pl.BlockSpec((9 * CPAD, CPAD), lambda n: (0, 0)),
                pl.BlockSpec((9 * CPAD, CPAD), lambda n: (0, 0)),
                pl.BlockSpec((2, CPAD), lambda n: (0, 0)),
                pl.BlockSpec((2, CPAD), lambda n: (0, 0)),
                pl.BlockSpec((2, CPAD), lambda n: (0, 0)),
            ],
            out_specs=pl.BlockSpec((1, H, W, CPAD), lambda n: (n, 0, 0, 0)),
            scratch_shapes=[
                pltpu.VMEM((H + 2, W + 2, CPAD), jnp.float32),
                pltpu.VMEM((H + 2, W + 2, CPAD), jnp.float32),
            ],
        ),
        compiler_params=pltpu.CompilerParams(
            dimension_semantics=("parallel",)
        ),
    )(xp, w1, w2, w3, sb1, sb2, sb3)

    out = out_pad[..., :cout_final]                            # strip channel pad
    return jnp.transpose(out, (0, 3, 1, 2))                    # NHWC -> NCHW


def _make_layer_params(key, cin, cout):
    """Deterministic synthetic parameters for conv + BN of one layer."""
    kw, kb, kg, kbt, km, kv = jax.random.split(key, 6)
    fan_in = cin * 9
    w = jax.random.normal(kw, (3, 3, cin, cout), jnp.float32) / jnp.sqrt(fan_in)
    b = 0.1 * jax.random.normal(kb, (cout,), jnp.float32)
    gamma = 1.0 + 0.1 * jax.random.normal(kg, (cout,), jnp.float32)
    beta = 0.1 * jax.random.normal(kbt, (cout,), jnp.float32)
    mean = 0.05 * jax.random.normal(km, (cout,), jnp.float32)
    var = 1.0 + 0.1 * jnp.abs(jax.random.normal(kv, (cout,), jnp.float32))
    return w, b, gamma, beta, mean, var


def _reference_forward(x_nchw, params, eps=1e-5):
    """Pure-JAX reference matching the kernel's numerics (bf16 conv, f32 accum)."""
    x = x_nchw
    for (w, b, gamma, beta, mean, var) in params:
        y = lax.conv_general_dilated(
            x.astype(jnp.bfloat16), w.astype(jnp.bfloat16),
            window_strides=(1, 1), padding="SAME",
            dimension_numbers=("NCHW", "HWIO", "NCHW"),
            preferred_element_type=jnp.float32,
        )
        y = y + b[None, :, None, None]
        inv_std = 1.0 / jnp.sqrt(var + eps)
        y = (y - mean[None, :, None, None]) * (gamma * inv_std)[None, :, None, None]
        y = y + beta[None, :, None, None]
        x = jnp.maximum(y, 0.0)
    return x


if __name__ == "__main__":
    key = jax.random.PRNGKey(0)
    kx, k1, k2, k3 = jax.random.split(key, 4)

    # Small deterministic input, NCHW like PyTorch: (batch=2, C=3, H=16, W=16)
    x = jax.random.normal(kx, (2, 3, 16, 16), jnp.float32)

    params = (
        _make_layer_params(k1, 3, 16),
        _make_layer_params(k2, 16, 64),
        _make_layer_params(k3, 64, 10),
    )

    out = model_viz_forward(x, params)
    out = jax.block_until_ready(out)

    ref = _reference_forward(x, params)
    assert out.shape == (2, 10, 16, 16), out.shape
    # Kernel and reference both use bf16 conv inputs with f32 accumulation, so
    # remaining differences are only f32 accumulation-order noise.
    assert jnp.allclose(out, ref, atol=1e-3, rtol=1e-3), (
        float(jnp.max(jnp.abs(out - ref)))
    )

    print("KERNEL_OK")
</pallas_src>

<mosaic_0001>
module attributes {stable_mosaic.version = 11 : i64} {
  func.func @_fused_kernel(%arg0: i32, %arg1: memref<1x16x16x128xf32, #tpu.memory_space<vmem>>, %arg2: memref<1152x128xbf16, #tpu.memory_space<vmem>>, %arg3: memref<1152x128xbf16, #tpu.memory_space<vmem>>, %arg4: memref<1152x128xbf16, #tpu.memory_space<vmem>>, %arg5: memref<2x128xf32, #tpu.memory_space<vmem>>, %arg6: memref<2x128xf32, #tpu.memory_space<vmem>>, %arg7: memref<2x128xf32, #tpu.memory_space<vmem>>, %arg8: memref<1x16x16x128xf32, #tpu.memory_space<vmem>>, %arg9: memref<18x18x128xf32, #tpu.memory_space<vmem>>, %arg10: memref<18x18x128xf32, #tpu.memory_space<vmem>>) attributes {dimension_semantics = [#tpu.dimension_semantics<parallel>], iteration_bounds = array<i64: 2>, scalar_prefetch = 0 : i64, scratch_operands = 2 : i64, tpu.core_type = #tpu.core_type<tc>, window_params = [{transform_indices = @transform_0, window_bounds = array<i64: 1, 16, 16, 128>}, {pipeline_mode = #tpu.pipeline_mode<synchronous>, transform_indices = @transform_1, window_bounds = array<i64: 1152, 128>}, {pipeline_mode = #tpu.pipeline_mode<synchronous>, transform_indices = @transform_2, window_bounds = array<i64: 1152, 128>}, {pipeline_mode = #tpu.pipeline_mode<synchronous>, transform_indices = @transform_3, window_bounds = array<i64: 1152, 128>}, {pipeline_mode = #tpu.pipeline_mode<synchronous>, transform_indices = @transform_4, window_bounds = array<i64: 2, 128>}, {pipeline_mode = #tpu.pipeline_mode<synchronous>, transform_indices = @transform_5, window_bounds = array<i64: 2, 128>}, {pipeline_mode = #tpu.pipeline_mode<synchronous>, transform_indices = @transform_6, window_bounds = array<i64: 2, 128>}, {transform_indices = @transform_7, window_bounds = array<i64: 1, 16, 16, 128>}]} {
    %cst = arith.constant 0.000000e+00 : f32
    %0 = vector.broadcast %cst : f32 to vector<18x18x128xf32>
    %c0 = arith.constant 0 : index
    %c0_0 = arith.constant 0 : index
    %c0_1 = arith.constant 0 : index
    %1 = vector.load %arg9[%c0, %c0_0, %c0_1] : memref<18x18x128xf32, #tpu.memory_space<vmem>>, vector<18x18x128xf32>
    tpu.vector_store %arg9[%c0, %c0_0, %c0_1], %0 {strides = array<i32>} : memref<18x18x128xf32, #tpu.memory_space<vmem>>, vector<18x18x128xf32>,
    %cst_2 = arith.constant 0.000000e+00 : f32
    %2 = vector.broadcast %cst_2 : f32 to vector<18x18x128xf32>
    %c0_3 = arith.constant 0 : index
    %c0_4 = arith.constant 0 : index
    %c0_5 = arith.constant 0 : index
    %3 = vector.load %arg10[%c0_3, %c0_4, %c0_5] : memref<18x18x128xf32, #tpu.memory_space<vmem>>, vector<18x18x128xf32>
    tpu.vector_store %arg10[%c0_3, %c0_4, %c0_5], %2 {strides = array<i32>} : memref<18x18x128xf32, #tpu.memory_space<vmem>>, vector<18x18x128xf32>,
    %c0_6 = arith.constant 0 : index
    %c0_7 = arith.constant 0 : index
    %c0_8 = arith.constant 0 : index
    %c0_9 = arith.constant 0 : index
    %4 = vector.load %arg1[%c0_6, %c0_7, %c0_8, %c0_9] : memref<1x16x16x128xf32, #tpu.memory_space<vmem>>, vector<1x16x16x128xf32>
    %5 = vector.shape_cast %4 : vector<1x16x16x128xf32> to vector<16x16x128xf32>
    %c1 = arith.constant 1 : index
    %c1_10 = arith.constant 1 : index
    %c0_11 = arith.constant 0 : index
    %6 = vector.load %arg9[%c1, %c1_10, %c0_11] : memref<18x18x128xf32, #tpu.memory_space<vmem>>, vector<16x16x128xf32>
    tpu.vector_store %arg9[%c1, %c1_10, %c0_11], %5 {strides = array<i32>} : memref<18x18x128xf32, #tpu.memory_space<vmem>>, vector<16x16x128xf32>,
    %c0_12 = arith.constant 0 : index
    %c0_13 = arith.constant 0 : index
    %c0_14 = arith.constant 0 : index
    %7 = vector.load %arg9[%c0_12, %c0_13, %c0_14] : memref<18x18x128xf32, #tpu.memory_space<vmem>>, vector<18x18x128xf32>
    %8 = arith.truncf %7 : vector<18x18x128xf32> to vector<18x18x128xbf16>
    %9 = vector.extract_strided_slice %8 {offsets = [0, 0, 0], sizes = [16, 16, 128], strides = [1, 1, 1]} : vector<18x18x128xbf16> to vector<16x16x128xbf16>
    %10 = vector.shape_cast %9 : vector<16x16x128xbf16> to vector<256x128xbf16>
    %11 = vector.extract_strided_slice %8 {offsets = [0, 1, 0], sizes = [16, 16, 128], strides = [1, 1, 1]} : vector<18x18x128xbf16> to vector<16x16x128xbf16>
    %12 = vector.shape_cast %11 : vector<16x16x128xbf16> to vector<256x128xbf16>
    %13 = vector.extract_strided_slice %8 {offsets = [0, 2, 0], sizes = [16, 16, 128], strides = [1, 1, 1]} : vector<18x18x128xbf16> to vector<16x16x128xbf16>
    %14 = vector.shape_cast %13 : vector<16x16x128xbf16> to vector<256x128xbf16>
    %15 = vector.extract_strided_slice %8 {offsets = [1, 0, 0], sizes = [16, 16, 128], strides = [1, 1, 1]} : vector<18x18x128xbf16> to vector<16x16x128xbf16>
    %16 = vector.shape_cast %15 : vector<16x16x128xbf16> to vector<256x128xbf16>
    %17 = vector.extract_strided_slice %8 {offsets = [1, 1, 0], sizes = [16, 16, 128], strides = [1, 1, 1]} : vector<18x18x128xbf16> to vector<16x16x128xbf16>
    %18 = vector.shape_cast %17 : vector<16x16x128xbf16> to vector<256x128xbf16>
    %19 = vector.extract_strided_slice %8 {offsets = [1, 2, 0], sizes = [16, 16, 128], strides = [1, 1, 1]} : vector<18x18x128xbf16> to vector<16x16x128xbf16>
    %20 = vector.shape_cast %19 : vector<16x16x128xbf16> to vector<256x128xbf16>
    %21 = vector.extract_strided_slice %8 {offsets = [2, 0, 0], sizes = [16, 16, 128], strides = [1, 1, 1]} : vector<18x18x128xbf16> to vector<16x16x128xbf16>
    %22 = vector.shape_cast %21 : vector<16x16x128xbf16> to vector<256x128xbf16>
    %23 = vector.extract_strided_slice %8 {offsets = [2, 1, 0], sizes = [16, 16, 128], strides = [1, 1, 1]} : vector<18x18x128xbf16> to vector<16x16x128xbf16>
    %24 = vector.shape_cast %23 : vector<16x16x128xbf16> to vector<256x128xbf16>
    %25 = vector.extract_strided_slice %8 {offsets = [2, 2, 0], sizes = [16, 16, 128], strides = [1, 1, 1]} : vector<18x18x128xbf16> to vector<16x16x128xbf16>
    %26 = vector.shape_cast %25 : vector<16x16x128xbf16> to vector<256x128xbf16>
    %27 = tpu.concatenate %10, %12, %14, %16, %18, %20, %22, %24, %26 in 1 : vector<256x128xbf16>, vector<256x128xbf16>, vector<256x128xbf16>, vector<256x128xbf16>, vector<256x128xbf16>, vector<256x128xbf16>, vector<256x128xbf16>, vector<256x128xbf16>, vector<256x128xbf16> -> vector<256x1152xbf16>
    %c0_15 = arith.constant 0 : index
    %c0_16 = arith.constant 0 : index
    %28 = vector.load %arg2[%c0_15, %c0_16] : memref<1152x128xbf16, #tpu.memory_space<vmem>>, vector<1152x128xbf16>
    %cst_17 = arith.constant dense<0.000000e+00> : vector<256x128xf32>
    %29 = tpu.matmul %27, %28, %cst_17 {dimension_numbers = #tpu.dot_dimension_numbers<[1], [0], [0], [1], [0, 0, 1, 1], [], []>} : vector<256x1152xbf16>, vector<1152x128xbf16>, vector<256x128xf32> -> vector<256x128xf32>
    %c0_18 = arith.constant 0 : index
    %c0_19 = arith.constant 0 : index
    %30 = vector.load %arg5[%c0_18, %c0_19] : memref<2x128xf32, #tpu.memory_space<vmem>>, vector<1x128xf32>
    %31 = vector.broadcast %30 : vector<1x128xf32> to vector<256x128xf32>
    %32 = arith.mulf %29, %31 : vector<256x128xf32>
    %c1_20 = arith.constant 1 : index
    %c0_21 = arith.constant 0 : index
    %33 = vector.load %arg5[%c1_20, %c0_21] : memref<2x128xf32, #tpu.memory_space<vmem>>, vector<1x128xf32>
    %34 = vector.broadcast %33 : vector<1x128xf32> to vector<256x128xf32>
    %35 = arith.addf %32, %34 : vector<256x128xf32>
    %cst_22 = arith.constant 0.000000e+00 : f32
    %36 = vector.broadcast %cst_22 : f32 to vector<256x128xf32>
    %37 = arith.maximumf %35, %36 : vector<256x128xf32>
    %38 = vector.shape_cast %37 : vector<256x128xf32> to vector<16x16x128xf32>
    %c1_23 = arith.constant 1 : index
    %c1_24 = arith.constant 1 : index
    %c0_25 = arith.constant 0 : index
    %39 = vector.load %arg10[%c1_23, %c1_24, %c0_25] : memref<18x18x128xf32, #tpu.memory_space<vmem>>, vector<16x16x128xf32>
    tpu.vector_store %arg10[%c1_23, %c1_24, %c0_25], %38 {strides = array<i32>} : memref<18x18x128xf32, #tpu.memory_space<vmem>>, vector<16x16x128xf32>,
    %c0_26 = arith.constant 0 : index
    %c0_27 = arith.constant 0 : index
    %c0_28 = arith.constant 0 : index
    %40 = vector.load %arg10[%c0_26, %c0_27, %c0_28] : memref<18x18x128xf32, #tpu.memory_space<vmem>>, vector<18x18x128xf32>
    %41 = arith.truncf %40 : vector<18x18x128xf32> to vector<18x18x128xbf16>
    %42 = vector.extract_strided_slice %41 {offsets = [0, 0, 0], sizes = [16, 16, 128], strides = [1, 1, 1]} : vector<18x18x128xbf16> to vector<16x16x128xbf16>
    %43 = vector.shape_cast %42 : vector<16x16x128xbf16> to vector<256x128xbf16>
    %44 = vector.extract_strided_slice %41 {offsets = [0, 1, 0], sizes = [16, 16, 128], strides = [1, 1, 1]} : vector<18x18x128xbf16> to vector<16x16x128xbf16>
    %45 = vector.shape_cast %44 : vector<16x16x128xbf16> to vector<256x128xbf16>
    %46 = vector.extract_strided_slice %41 {offsets = [0, 2, 0], sizes = [16, 16, 128], strides = [1, 1, 1]} : vector<18x18x128xbf16> to vector<16x16x128xbf16>
    %47 = vector.shape_cast %46 : vector<16x16x128xbf16> to vector<256x128xbf16>
    %48 = vector.extract_strided_slice %41 {offsets = [1, 0, 0], sizes = [16, 16, 128], strides = [1, 1, 1]} : vector<18x18x128xbf16> to vector<16x16x128xbf16>
    %49 = vector.shape_cast %48 : vector<16x16x128xbf16> to vector<256x128xbf16>
    %50 = vector.extract_strided_slice %41 {offsets = [1, 1, 0], sizes = [16, 16, 128], strides = [1, 1, 1]} : vector<18x18x128xbf16> to vector<16x16x128xbf16>
    %51 = vector.shape_cast %50 : vector<16x16x128xbf16> to vector<256x128xbf16>
    %52 = vector.extract_strided_slice %41 {offsets = [1, 2, 0], sizes = [16, 16, 128], strides = [1, 1, 1]} : vector<18x18x128xbf16> to vector<16x16x128xbf16>
    %53 = vector.shape_cast %52 : vector<16x16x128xbf16> to vector<256x128xbf16>
    %54 = vector.extract_strided_slice %41 {offsets = [2, 0, 0], sizes = [16, 16, 128], strides = [1, 1, 1]} : vector<18x18x128xbf16> to vector<16x16x128xbf16>
    %55 = vector.shape_cast %54 : vector<16x16x128xbf16> to vector<256x128xbf16>
    %56 = vector.extract_strided_slice %41 {offsets = [2, 1, 0], sizes = [16, 16, 128], strides = [1, 1, 1]} : vector<18x18x128xbf16> to vector<16x16x128xbf16>
    %57 = vector.shape_cast %56 : vector<16x16x128xbf16> to vector<256x128xbf16>
    %58 = vector.extract_strided_slice %41 {offsets = [2, 2, 0], sizes = [16, 16, 128], strides = [1, 1, 1]} : vector<18x18x128xbf16> to vector<16x16x128xbf16>
    %59 = vector.shape_cast %58 : vector<16x16x128xbf16> to vector<256x128xbf16>
    %60 = tpu.concatenate %43, %45, %47, %49, %51, %53, %55, %57, %59 in 1 : vector<256x128xbf16>, vector<256x128xbf16>, vector<256x128xbf16>, vector<256x128xbf16>, vector<256x128xbf16>, vector<256x128xbf16>, vector<256x128xbf16>, vector<256x128xbf16>, vector<256x128xbf16> -> vector<256x1152xbf16>
    %c0_29 = arith.constant 0 : index
    %c0_30 = arith.constant 0 : index
    %61 = vector.load %arg3[%c0_29, %c0_30] : memref<1152x128xbf16, #tpu.memory_space<vmem>>, vector<1152x128xbf16>
    %cst_31 = arith.constant dense<0.000000e+00> : vector<256x128xf32>
    %62 = tpu.matmul %60, %61, %cst_31 {dimension_numbers = #tpu.dot_dimension_numbers<[1], [0], [0], [1], [0, 0, 1, 1], [], []>} : vector<256x1152xbf16>, vector<1152x128xbf16>, vector<256x128xf32> -> vector<256x128xf32>
    %c0_32 = arith.constant 0 : index
    %c0_33 = arith.constant 0 : index
    %63 = vector.load %arg6[%c0_32, %c0_33] : memref<2x128xf32, #tpu.memory_space<vmem>>, vector<1x128xf32>
    %64 = vector.broadcast %63 : vector<1x128xf32> to vector<256x128xf32>
    %65 = arith.mulf %62, %64 : vector<256x128xf32>
    %c1_34 = arith.constant 1 : index
    %c0_35 = arith.constant 0 : index
    %66 = vector.load %arg6[%c1_34, %c0_35] : memref<2x128xf32, #tpu.memory_space<vmem>>, vector<1x128xf32>
    %67 = vector.broadcast %66 : vector<1x128xf32> to vector<256x128xf32>
    %68 = arith.addf %65, %67 : vector<256x128xf32>
    %cst_36 = arith.constant 0.000000e+00 : f32
    %69 = vector.broadcast %cst_36 : f32 to vector<256x128xf32>
    %70 = arith.maximumf %68, %69 : vector<256x128xf32>
    %71 = vector.shape_cast %70 : vector<256x128xf32> to vector<16x16x128xf32>
    %c1_37 = arith.constant 1 : index
    %c1_38 = arith.constant 1 : index
    %c0_39 = arith.constant 0 : index
    %72 = vector.load %arg9[%c1_37, %c1_38, %c0_39] : memref<18x18x128xf32, #tpu.memory_space<vmem>>, vector<16x16x128xf32>
    tpu.vector_store %arg9[%c1_37, %c1_38, %c0_39], %71 {strides = array<i32>} : memref<18x18x128xf32, #tpu.memory_space<vmem>>, vector<16x16x128xf32>,
    %c0_40 = arith.constant 0 : index
    %c0_41 = arith.constant 0 : index
    %c0_42 = arith.constant 0 : index
    %73 = vector.load %arg9[%c0_40, %c0_41, %c0_42] : memref<18x18x128xf32, #tpu.memory_space<vmem>>, vector<18x18x128xf32>
    %74 = arith.truncf %73 : vector<18x18x128xf32> to vector<18x18x128xbf16>
    %75 = vector.extract_strided_slice %74 {offsets = [0, 0, 0], sizes = [16, 16, 128], strides = [1, 1, 1]} : vector<18x18x128xbf16> to vector<16x16x128xbf16>
    %76 = vector.shape_cast %75 : vector<16x16x128xbf16> to vector<256x128xbf16>
    %77 = vector.extract_strided_slice %74 {offsets = [0, 1, 0], sizes = [16, 16, 128], strides = [1, 1, 1]} : vector<18x18x128xbf16> to vector<16x16x128xbf16>
    %78 = vector.shape_cast %77 : vector<16x16x128xbf16> to vector<256x128xbf16>
    %79 = vector.extract_strided_slice %74 {offsets = [0, 2, 0], sizes = [16, 16, 128], strides = [1, 1, 1]} : vector<18x18x128xbf16> to vector<16x16x128xbf16>
    %80 = vector.shape_cast %79 : vector<16x16x128xbf16> to vector<256x128xbf16>
    %81 = vector.extract_strided_slice %74 {offsets = [1, 0, 0], sizes = [16, 16, 128], strides = [1, 1, 1]} : vector<18x18x128xbf16> to vector<16x16x128xbf16>
    %82 = vector.shape_cast %81 : vector<16x16x128xbf16> to vector<256x128xbf16>
    %83 = vector.extract_strided_slice %74 {offsets = [1, 1, 0], sizes = [16, 16, 128], strides = [1, 1, 1]} : vector<18x18x128xbf16> to vector<16x16x128xbf16>
    %84 = vector.shape_cast %83 : vector<16x16x128xbf16> to vector<256x128xbf16>
    %85 = vector.extract_strided_slice %74 {offsets = [1, 2, 0], sizes = [16, 16, 128], strides = [1, 1, 1]} : vector<18x18x128xbf16> to vector<16x16x128xbf16>
    %86 = vector.shape_cast %85 : vector<16x16x128xbf16> to vector<256x128xbf16>
    %87 = vector.extract_strided_slice %74 {offsets = [2, 0, 0], sizes = [16, 16, 128], strides = [1, 1, 1]} : vector<18x18x128xbf16> to vector<16x16x128xbf16>
    %88 = vector.shape_cast %87 : vector<16x16x128xbf16> to vector<256x128xbf16>
    %89 = vector.extract_strided_slice %74 {offsets = [2, 1, 0], sizes = [16, 16, 128], strides = [1, 1, 1]} : vector<18x18x128xbf16> to vector<16x16x128xbf16>
    %90 = vector.shape_cast %89 : vector<16x16x128xbf16> to vector<256x128xbf16>
    %91 = vector.extract_strided_slice %74 {offsets = [2, 2, 0], sizes = [16, 16, 128], strides = [1, 1, 1]} : vector<18x18x128xbf16> to vector<16x16x128xbf16>
    %92 = vector.shape_cast %91 : vector<16x16x128xbf16> to vector<256x128xbf16>
    %93 = tpu.concatenate %76, %78, %80, %82, %84, %86, %88, %90, %92 in 1 : vector<256x128xbf16>, vector<256x128xbf16>, vector<256x128xbf16>, vector<256x128xbf16>, vector<256x128xbf16>, vector<256x128xbf16>, vector<256x128xbf16>, vector<256x128xbf16>, vector<256x128xbf16> -> vector<256x1152xbf16>
    %c0_43 = arith.constant 0 : index
    %c0_44 = arith.constant 0 : index
    %94 = vector.load %arg4[%c0_43, %c0_44] : memref<1152x128xbf16, #tpu.memory_space<vmem>>, vector<1152x128xbf16>
    %cst_45 = arith.constant dense<0.000000e+00> : vector<256x128xf32>
    %95 = tpu.matmul %93, %94, %cst_45 {dimension_numbers = #tpu.dot_dimension_numbers<[1], [0], [0], [1], [0, 0, 1, 1], [], []>} : vector<256x1152xbf16>, vector<1152x128xbf16>, vector<256x128xf32> -> vector<256x128xf32>
    %c0_46 = arith.constant 0 : index
    %c0_47 = arith.constant 0 : index
    %96 = vector.load %arg7[%c0_46, %c0_47] : memref<2x128xf32, #tpu.memory_space<vmem>>, vector<1x128xf32>
    %97 = vector.broadcast %96 : vector<1x128xf32> to vector<256x128xf32>
    %98 = arith.mulf %95, %97 : vector<256x128xf32>
    %c1_48 = arith.constant 1 : index
    %c0_49 = arith.constant 0 : index
    %99 = vector.load %arg7[%c1_48, %c0_49] : memref<2x128xf32, #tpu.memory_space<vmem>>, vector<1x128xf32>
    %100 = vector.broadcast %99 : vector<1x128xf32> to vector<256x128xf32>
    %101 = arith.addf %98, %100 : vector<256x128xf32>
    %cst_50 = arith.constant 0.000000e+00 : f32
    %102 = vector.broadcast %cst_50 : f32 to vector<256x128xf32>
    %103 = arith.maximumf %101, %102 : vector<256x128xf32>
    %104 = vector.shape_cast %103 : vector<256x128xf32> to vector<16x16x128xf32>
    %c0_51 = arith.constant 0 : index
    %c0_52 = arith.constant 0 : index
    %c0_53 = arith.constant 0 : index
    %c0_54 = arith.constant 0 : index
    %105 = vector.load %arg8[%c0_51, %c0_52, %c0_53, %c0_54] : memref<1x16x16x128xf32, #tpu.memory_space<vmem>>, vector<1x16x16x128xf32>
    %106 = vector.shape_cast %105 : vector<1x16x16x128xf32> to vector<16x16x128xf32>
    %107 = vector.shape_cast %104 : vector<16x16x128xf32> to vector<1x16x16x128xf32>
    tpu.vector_store %arg8[%c0_51, %c0_52, %c0_53, %c0_54], %107 {strides = array<i32>} : memref<1x16x16x128xf32, #tpu.memory_space<vmem>>, vector<1x16x16x128xf32>,
    return
  }
  func.func @transform_0(%arg0: i32) -> (i32, i32, i32, i32) {
    %c0_i32 = arith.constant 0 : i32
    %c0_i32_0 = arith.constant 0 : i32
    %c0_i32_1 = arith.constant 0 : i32
    %c0_i32_2 = arith.constant 0 : i32
    return %arg0, %c0_i32, %c0_i32_0, %c0_i32_1 : i32, i32, i32, i32
  }
  func.func @transform_1(%arg0: i32) -> (i32, i32) {
    %c0_i32 = arith.constant 0 : i32
    %c0_i32_0 = arith.constant 0 : i32
    %c0_i32_1 = arith.constant 0 : i32
    return %c0_i32, %c0_i32_0 : i32, i32
  }
  func.func @transform_2(%arg0: i32) -> (i32, i32) {
    %c0_i32 = arith.constant 0 : i32
    %c0_i32_0 = arith.constant 0 : i32
    %c0_i32_1 = arith.constant 0 : i32
    return %c0_i32, %c0_i32_0 : i32, i32
  }
  func.func @transform_3(%arg0: i32) -> (i32, i32) {
    %c0_i32 = arith.constant 0 : i32
    %c0_i32_0 = arith.constant 0 : i32
    %c0_i32_1 = arith.constant 0 : i32
    return %c0_i32, %c0_i32_0 : i32, i32
  }
  func.func @transform_4(%arg0: i32) -> (i32, i32) {
    %c0_i32 = arith.constant 0 : i32
    %c0_i32_0 = arith.constant 0 : i32
    %c0_i32_1 = arith.constant 0 : i32
    return %c0_i32, %c0_i32_0 : i32, i32
  }
  func.func @transform_5(%arg0: i32) -> (i32, i32) {
    %c0_i32 = arith.constant 0 : i32
    %c0_i32_0 = arith.constant 0 : i32
    %c0_i32_1 = arith.constant 0 : i32
    return %c0_i32, %c0_i32_0 : i32, i32
  }
  func.func @transform_6(%arg0: i32) -> (i32, i32) {
    %c0_i32 = arith.constant 0 : i32
    %c0_i32_0 = arith.constant 0 : i32
    %c0_i32_1 = arith.constant 0 : i32
    return %c0_i32, %c0_i32_0 : i32, i32
  }
  func.func @transform_7(%arg0: i32) -> (i32, i32, i32, i32) {
    %c0_i32 = arith.constant 0 : i32
    %c0_i32_0 = arith.constant 0 : i32
    %c0_i32_1 = arith.constant 0 : i32
    %c0_i32_2 = arith.constant 0 : i32
    return %arg0, %c0_i32, %c0_i32_0, %c0_i32_1 : i32, i32, i32, i32
  }
}

</mosaic_0001>

<llo_original>
// kernel: model_viz_forward.1
$region0: #{model_viz_forward.1}
  #allocation0 [shape = 'u32[]', space=smem, size = 0x4, offset = 0x4, fixed_abs, tag = 'smem constant byte address 0x4 - core index']
  #allocation1 [shape = 'u32[144,128]{1,0:T(1,128)}', space=vmem, size = 0x12000, scoped, tag = 'internal scratch']
  #allocation2 [shape = 'f32[18,18,128]{2,1,0:T(8,128)}', space=vmem, size = 0x36000, scoped, tag = 'scratch operand']
  #allocation3 [shape = 'f32[18,18,128]{2,1,0:T(8,128)}', space=vmem, size = 0x36000, scoped, tag = 'scratch operand']
  %s0 = inlined_call_operand.vmem [shape: f32[2,16,16,128], index: 0, kind: input, shape index: {}]
  %s1 = inlined_call_operand.vmem [shape: bf16[1152,128], index: 1, kind: input, shape index: {}]
  %s2 = inlined_call_operand.vmem [shape: bf16[1152,128], index: 2, kind: input, shape index: {}]
  %s3 = inlined_call_operand.vmem [shape: bf16[1152,128], index: 3, kind: input, shape index: {}]
  %s4 = inlined_call_operand.vmem [shape: f32[2,128], index: 4, kind: input, shape index: {}]
  %s5 = inlined_call_operand.vmem [shape: f32[2,128], index: 5, kind: input, shape index: {}]
  %s6 = inlined_call_operand.vmem [shape: f32[2,128], index: 6, kind: input, shape index: {}]
  %s7 = inlined_call_operand.vmem [shape: f32[2,16,16,128], index: 7, kind: output, shape index: {}]
  %s8 = sld [smem:[#allocation0]]
  $region61: #{model_viz_forward.1} parent=0
    _
  %s10 = ssub.s32 1, %s8
  %s11 = scalar_select 0, %s10, %s8
  loop: start=0, step=1, limit=4
  $region2: #{model_viz_forward.1} parent=0 // loop_pre_header
    _
  $region3: #{model_viz_forward.1} parent=0 // loop_header
    %s13 = sphi 0, %s17
    %p14 = scmp.ge.s32.totalorder %s13, 4
    %s23 = sphi 0, %s25
    %s26 = sphi 0, %s23
    %s27 = sphi 0, %s26
    %s43 = sphi 0, %s27
    %s47 = sphi 0, %s47
    %s49 = sphi 0, %s47
    %s50 = sphi 0, %s49
    %s64 = sphi 0, %s50
    %s68 = sphi 0, %s68
    %s70 = sphi 0, %s68
    %s71 = sphi 0, %s70
    %s85 = sphi 0, %s71
    %s89 = sphi 0, %s89
    %s91 = sphi 0, %s89
    %s92 = sphi 0, %s91
    %s106 = sphi 0, %s92
    %s110 = sphi 0, %s110
    %s112 = sphi 0, %s110
    %s113 = sphi 0, %s112
    %s127 = sphi 0, %s113
    %s131 = sphi 0, %s131
    %s133 = sphi 0, %s131
    %s134 = sphi 0, %s133
    %s148 = sphi 0, %s134
    %s152 = sphi 0, %s152
    %s154 = sphi 0, %s152
    %s155 = sphi 0, %s154
    %s169 = sphi 0, %s155
    %s175 = sphi 0, %s177
    %s178 = sphi 0, %s175
    %s179 = sphi 0, %s178
    %s195 = sphi 0, %s179
  $region4: #{model_viz_forward.1} parent=0 // loop_header_branch
    %16 = sbr.rel (%p14) target = $region8
  $region5: #{model_viz_forward.1} parent=0 // loop_body
    %s18 = ssub.s32 %s13, 1
    %s19 = ssub.s32 %s13, 2
    %s20 = sadd.s32 %s13, 1
    %s21 = ssub.s32 %s13, %s20
    %p22 = scmp.eq.s32.totalorder %s21, 0
    %s24 = sadd.s32 %s23, 1
    %s25 = scalar_select %p22, %s23, %s24
    %p28 = pneg %p22
    %p29 = scmp.eq.s32.totalorder %s13, 1
    %p30 = por %p28, %p29
    %p31 = scmp.ne.s32.totalorder %s23, %s26
    %p32 = scmp.eq.s32.totalorder %s13, 0
    %p33 = por %p31, %p32
    %p34 = scmp.ne.s32.totalorder %s23, %s26
    %p35 = scmp.eq.s32.totalorder %s18, 1
    %p36 = por %p34, %p35
    %p37 = scmp.ne.s32.totalorder %s26, %s27
    %p38 = scmp.eq.s32.totalorder %s18, 0
    %p39 = por %p37, %p38
    %p40 = scmp.ne.s32.totalorder %s26, %s27
    %p41 = scmp.eq.s32.totalorder %s19, 1
    %p42 = por %p40, %p41
    %p44 = scmp.ne.s32.totalorder %s27, %s43
    %p45 = scmp.eq.s32.totalorder %s19, 0
    %p46 = por %p44, %p45
    %s48 = sadd.s32 %s47, 1
    %p51 = scmp.eq.s32.totalorder %s13, 1
    %p52 = scmp.ne.s32.totalorder %s47, %s49
    %p53 = scmp.eq.s32.totalorder %s13, 0
    %p54 = por %p52, %p53
    %p55 = scmp.ne.s32.totalorder %s47, %s49
    %p56 = scmp.eq.s32.totalorder %s18, 1
    %p57 = por %p55, %p56
    %p58 = scmp.ne.s32.totalorder %s49, %s50
    %p59 = scmp.eq.s32.totalorder %s18, 0
    %p60 = por %p58, %p59
    %p61 = scmp.ne.s32.totalorder %s49, %s50
    %p62 = scmp.eq.s32.totalorder %s19, 1
    %p63 = por %p61, %p62
    %p65 = scmp.ne.s32.totalorder %s50, %s64
    %p66 = scmp.eq.s32.totalorder %s19, 0
    %p67 = por %p65, %p66
    %s69 = sadd.s32 %s68, 1
    %p72 = scmp.eq.s32.totalorder %s13, 1
    %p73 = scmp.ne.s32.totalorder %s68, %s70
    %p74 = scmp.eq.s32.totalorder %s13, 0
    %p75 = por %p73, %p74
    %p76 = scmp.ne.s32.totalorder %s68, %s70
    %p77 = scmp.eq.s32.totalorder %s18, 1
    %p78 = por %p76, %p77
    %p79 = scmp.ne.s32.totalorder %s70, %s71
    %p80 = scmp.eq.s32.totalorder %s18, 0
    %p81 = por %p79, %p80
    %p82 = scmp.ne.s32.totalorder %s70, %s71
    %p83 = scmp.eq.s32.totalorder %s19, 1
    %p84 = por %p82, %p83
    %p86 = scmp.ne.s32.totalorder %s71, %s85
    %p87 = scmp.eq.s32.totalorder %s19, 0
    %p88 = por %p86, %p87
    %s90 = sadd.s32 %s89, 1
    %p93 = scmp.eq.s32.totalorder %s13, 1
    %p94 = scmp.ne.s32.totalorder %s89, %s91
    %p95 = scmp.eq.s32.totalorder %s13, 0
    %p96 = por %p94, %p95
    %p97 = scmp.ne.s32.totalorder %s89, %s91
    %p98 = scmp.eq.s32.totalorder %s18, 1
    %p99 = por %p97, %p98
    %p100 = scmp.ne.s32.totalorder %s91, %s92
    %p101 = scmp.eq.s32.totalorder %s18, 0
    %p102 = por %p100, %p101
    %p103 = scmp.ne.s32.totalorder %s91, %s92
    %p104 = scmp.eq.s32.totalorder %s19, 1
    %p105 = por %p103, %p104
    %p107 = scmp.ne.s32.totalorder %s92, %s106
    %p108 = scmp.eq.s32.totalorder %s19, 0
    %p109 = por %p107, %p108
    %s111 = sadd.s32 %s110, 1
    %p114 = scmp.eq.s32.totalorder %s13, 1
    %p115 = scmp.ne.s32.totalorder %s110, %s112
    %p116 = scmp.eq.s32.totalorder %s13, 0
    %p117 = por %p115, %p116
    %p118 = scmp.ne.s32.totalorder %s110, %s112
    %p119 = scmp.eq.s32.totalorder %s18, 1
    %p120 = por %p118, %p119
    %p121 = scmp.ne.s32.totalorder %s112, %s113
    %p122 = scmp.eq.s32.totalorder %s18, 0
    %p123 = por %p121, %p122
    %p124 = scmp.ne.s32.totalorder %s112, %s113
    %p125 = scmp.eq.s32.totalorder %s19, 1
    %p126 = por %p124, %p125
    %p128 = scmp.ne.s32.totalorder %s113, %s127
    %p129 = scmp.eq.s32.totalorder %s19, 0
    %p130 = por %p128, %p129
    %s132 = sadd.s32 %s131, 1
    %p135 = scmp.eq.s32.totalorder %s13, 1
    %p136 = scmp.ne.s32.totalorder %s131, %s133
    %p137 = scmp.eq.s32.totalorder %s13, 0
    %p138 = por %p136, %p137
    %p139 = scmp.ne.s32.totalorder %s131, %s133
    %p140 = scmp.eq.s32.totalorder %s18, 1
    %p141 = por %p139, %p140
    %p142 = scmp.ne.s32.totalorder %s133, %s134
    %p143 = scmp.eq.s32.totalorder %s18, 0
    %p144 = por %p142, %p143
    %p145 = scmp.ne.s32.totalorder %s133, %s134
    %p146 = scmp.eq.s32.totalorder %s19, 1
    %p147 = por %p145, %p146
    %p149 = scmp.ne.s32.totalorder %s134, %s148
    %p150 = scmp.eq.s32.totalorder %s19, 0
    %p151 = por %p149, %p150
    %s153 = sadd.s32 %s152, 1
    %p156 = scmp.eq.s32.totalorder %s13, 1
    %p157 = scmp.ne.s32.totalorder %s152, %s154
    %p158 = scmp.eq.s32.totalorder %s13, 0
    %p159 = por %p157, %p158
    %p160 = scmp.ne.s32.totalorder %s152, %s154
    %p161 = scmp.eq.s32.totalorder %s18, 1
    %p162 = por %p160, %p161
    %p163 = scmp.ne.s32.totalorder %s154, %s155
    %p164 = scmp.eq.s32.totalorder %s18, 0
    %p165 = por %p163, %p164
    %p166 = scmp.ne.s32.totalorder %s154, %s155
    %p167 = scmp.eq.s32.totalorder %s19, 1
    %p168 = por %p166, %p167
    %p170 = scmp.ne.s32.totalorder %s155, %s169
    %p171 = scmp.eq.s32.totalorder %s19, 0
    %p172 = por %p170, %p171
    %s173 = ssub.s32 %s13, %s20
    %p174 = scmp.eq.s32.totalorder %s173, 0
    %s176 = sadd.s32 %s175, 1
    %s177 = scalar_select %p174, %s175, %s176
    %p180 = pneg %p174
    %p181 = scmp.eq.s32.totalorder %s13, 1
    %p182 = por %p180, %p181
    %p183 = scmp.ne.s32.totalorder %s175, %s178
    %p184 = scmp.eq.s32.totalorder %s13, 0
    %p185 = por %p183, %p184
    %p186 = scmp.ne.s32.totalorder %s175, %s178
    %p187 = scmp.eq.s32.totalorder %s18, 1
    %p188 = por %p186, %p187
    %p189 = scmp.ne.s32.totalorder %s178, %s179
    %p190 = scmp.eq.s32.totalorder %s18, 0
    %p191 = por %p189, %p190
    %p192 = scmp.ne.s32.totalorder %s178, %s179
    %p193 = scmp.eq.s32.totalorder %s19, 1
    %p194 = por %p192, %p193
    %p196 = scmp.ne.s32.totalorder %s179, %s195
    %p197 = scmp.eq.s32.totalorder %s19, 0
    %p198 = por %p196, %p197
    %p199 = scmp.le.s32.totalorder 1, %s13
    %p200 = scmp.lt.s32.totalorder %s13, 3
    %p201 = pnand %p199, %p200
    %p202 = pneg %p201
    // Predicated region
    $region9: #{model_viz_forward.1} parent=5 // pred_check
      _
    $region10: #{model_viz_forward.1} parent=5 // pred_check_branch
      %204 = sbr.rel (%p201) target = $region12
    $region11: #{model_viz_forward.1} parent=5 // pred_region
      %s205 = ssub.s32 %s13, 1
      // Predicated region
      $region13: #{model_viz_forward.1} parent=11 // pred_check
        %p206 = pneg %p60
      $region14: #{model_viz_forward.1} parent=11 // pred_check_branch
        %208 = sbr.rel (%p206) target = $region16
      $region15: #{model_viz_forward.1} parent=11 // pred_region
        _
      $region16: #{model_viz_forward.1} parent=11 // pred_fallthru
        _
      // Predicated region
      $region17: #{model_viz_forward.1} parent=11 // pred_check
        %p209 = pneg %p81
      $region18: #{model_viz_forward.1} parent=11 // pred_check_branch
        %211 = sbr.rel (%p209) target = $region20
      $region19: #{model_viz_forward.1} parent=11 // pred_region
        _
      $region20: #{model_viz_forward.1} parent=11 // pred_fallthru
        _
      // Predicated region
      $region21: #{model_viz_forward.1} parent=11 // pred_check
        %p212 = pneg %p102
      $region22: #{model_viz_forward.1} parent=11 // pred_check_branch
        %214 = sbr.rel (%p212) target = $region24
      $region23: #{model_viz_forward.1} parent=11 // pred_region
        _
      $region24: #{model_viz_forward.1} parent=11 // pred_fallthru
        _
      // Predicated region
      $region25: #{model_viz_forward.1} parent=11 // pred_check
        %p215 = pneg %p123
      $region26: #{model_viz_forward.1} parent=11 // pred_check_branch
        %217 = sbr.rel (%p215) target = $region28
      $region27: #{model_viz_forward.1} parent=11 // pred_region
        _
      $region28: #{model_viz_forward.1} parent=11 // pred_fallthru
        _
      // Predicated region
      $region29: #{model_viz_forward.1} parent=11 // pred_check
        %p218 = pneg %p144
      $region30: #{model_viz_forward.1} parent=11 // pred_check_branch
        %220 = sbr.rel (%p218) target = $region32
      $region31: #{model_viz_forward.1} parent=11 // pred_region
        _
      $region32: #{model_viz_forward.1} parent=11 // pred_fallthru
        _
      // Predicated region
      $region33: #{model_viz_forward.1} parent=11 // pred_check
        %p221 = pneg %p165
      $region34: #{model_viz_forward.1} parent=11 // pred_check_branch
        %223 = sbr.rel (%p221) target = $region36
      $region35: #{model_viz_forward.1} parent=11 // pred_region
        _
      $region36: #{model_viz_forward.1} parent=11 // pred_fallthru
        _
    $region12: #{model_viz_forward.1} parent=5 // pred_fallthru
      _
    %p224 = scmp.lt.s32.totalorder %s13, 2
    // Predicated region
    $region37: #{model_viz_forward.1} parent=5 // pred_check
      %p225 = pneg %p224
    $region38: #{model_viz_forward.1} parent=5 // pred_check_branch
      %227 = sbr.rel (%p225) target = $region40
    $region39: #{model_viz_forward.1} parent=5 // pred_region
      // Predicated region
      $region41: #{model_viz_forward.1} parent=39 // pred_check
        %p228 = pneg %p33
      $region42: #{model_viz_forward.1} parent=39 // pred_check_branch
        %230 = sbr.rel (%p228) target = $region44
      $region43: #{model_viz_forward.1} parent=39 // pred_region
        %p231 = scmp.lt.s32.totalorder %s13, 1
        %s232 = scalar_select %p231, %s13, 1
        %s233 = smul.addr %s232, 32
        %s234 = smul.addr %s233, 8
        %s235 = scalar_lea.vmem %s0, %s234
      $region44: #{model_viz_forward.1} parent=39 // pred_fallthru
        _
    $region40: #{model_viz_forward.1} parent=5 // pred_fallthru
      _
    %p236 = scmp.le.s32.totalorder 1, %s13
    %p237 = scmp.lt.s32.totalorder %s13, 3
    %p238 = pnand %p236, %p237
    %p239 = pneg %p238
    // Predicated region
    $region45: #{model_viz_forward.1} parent=5 // pred_check
      _
    $region46: #{model_viz_forward.1} parent=5 // pred_check_branch
      %241 = sbr.rel (%p238) target = $region48
    $region47: #{model_viz_forward.1} parent=5 // pred_region
      %s242 = ssub.s32 %s13, 1
      %p243 = scmp.lt.s32.totalorder %s18, 1
      %s244 = scalar_select %p243, %s18, 1
      %s245 = smul.addr %s244, 32
      %s246 = smul.addr %s245, 8
      %s247 = scalar_lea.vmem %s0, %s246
      %p248 = pneg %p39
      %p249 = pneg %p36
      %p250 = pneg %p60
      %p251 = pneg %p57
      %p252 = pneg %p81
      %p253 = pneg %p78
      %p254 = pneg %p102
      %p255 = pneg %p99
      %p256 = pneg %p123
      %p257 = pneg %p120
      %p258 = pneg %p144
      %p259 = pneg %p141
      %p260 = pneg %p165
      %p261 = pneg %p162
      %p262 = pneg %p191
      %p263 = pneg %p188
      %p264 = scmp.lt.s32.totalorder %s18, 1
      %s265 = scalar_select %p264, %s18, 1
      %s266 = smul.addr %s265, 32
      %s267 = smul.addr %s266, 8
      %s268 = scalar_lea.vmem %s7, %s267
      %p269 = scmp.lt.s32.totalorder %s18, 1
      %s270 = scalar_select %p269, %s18, 1
      %s271 = smul.addr %s270, 32
      %s272 = smul.addr %s271, 8
      %s273 = scalar_lea.vmem %s0, %s272
      %p274 = scmp.lt.s32.totalorder %s18, 1
      %s275 = scalar_select %p274, %s18, 1
      %s276 = smul.addr %s275, 32
      %s277 = smul.addr %s276, 8
      %s278 = scalar_lea.vmem %s7, %s277
      %280 = vst [vmem:[#allocation2] sm:$0xff] 0.0
      %281 = vst [vmem:[#allocation2 + $0x8] sm:$0xff] 0.0
      %282 = vst [vmem:[#allocation2 + $0x10] sm:$0x3] 0.0
      %283 = vst [vmem:[#allocation2 + $0x18] sm:$0xff] 0.0
      %284 = vst [vmem:[#allocation2 + $0x20] sm:$0xff] 0.0
      %285 = vst [vmem:[#allocation2 + $0x28] sm:$0x3] 0.0
      %286 = vst [vmem:[#allocation2 + $0x30] sm:$0xff] 0.0
      %287 = vst [vmem:[#allocation2 + $0x38] sm:$0xff] 0.0
      %288 = vst [vmem:[#allocation2 + $0x40] sm:$0x3] 0.0
      %289 = vst [vmem:[#allocation2 + $0x48] sm:$0xff] 0.0
      %290 = vst [vmem:[#allocation2 + $0x50] sm:$0xff] 0.0
      %291 = vst [vmem:[#allocation2 + $0x58] sm:$0x3] 0.0
      %292 = vst [vmem:[#allocation2 + $0x60] sm:$0xff] 0.0
      %293 = vst [vmem:[#allocation2 + $0x68] sm:$0xff] 0.0
      %294 = vst [vmem:[#allocation2 + $0x70] sm:$0x3] 0.0
      %295 = vst [vmem:[#allocation2 + $0x78] sm:$0xff] 0.0
      %296 = vst [vmem:[#allocation2 + $0x80] sm:$0xff] 0.0
      %297 = vst [vmem:[#allocation2 + $0x88] sm:$0x3] 0.0
      %298 = vst [vmem:[#allocation2 + $0x90] sm:$0xff] 0.0
      %299 = vst [vmem:[#allocation2 + $0x98] sm:$0xff] 0.0
      %300 = vst [vmem:[#allocation2 + $0xa0] sm:$0x3] 0.0
      %301 = vst [vmem:[#allocation2 + $0xa8] sm:$0xff] 0.0
      %302 = vst [vmem:[#allocation2 + $0xb0] sm:$0xff] 0.0
      %303 = vst [vmem:[#allocation2 + $0xb8] sm:$0x3] 0.0
      %304 = vst [vmem:[#allocation2 + $0xc0] sm:$0xff] 0.0
      %305 = vst [vmem:[#allocation2 + $0xc8] sm:$0xff] 0.0
      %306 = vst [vmem:[#allocation2 + $0xd0] sm:$0x3] 0.0
      %307 = vst [vmem:[#allocation2 + $0xd8] sm:$0xff] 0.0
      %308 = vst [vmem:[#allocation2 + $0xe0] sm:$0xff] 0.0
      %309 = vst [vmem:[#allocation2 + $0xe8] sm:$0x3] 0.0
      %310 = vst [vmem:[#allocation2 + $0xf0] sm:$0xff] 0.0
      %311 = vst [vmem:[#allocation2 + $0xf8] sm:$0xff] 0.0
      %312 = vst [vmem:[#allocation2 + $0x100] sm:$0x3] 0.0
      %313 = vst [vmem:[#allocation2 + $0x108] sm:$0xff] 0.0
      %314 = vst [vmem:[#allocation2 + $0x110] sm:$0xff] 0.0
      %315 = vst [vmem:[#allocation2 + $0x118] sm:$0x3] 0.0
      %316 = vst [vmem:[#allocation2 + $0x120] sm:$0xff] 0.0
      %317 = vst [vmem:[#allocation2 + $0x128] sm:$0xff] 0.0
      %318 = vst [vmem:[#allocation2 + $0x130] sm:$0x3] 0.0
      %319 = vst [vmem:[#allocation2 + $0x138] sm:$0xff] 0.0
      %320 = vst [vmem:[#allocation2 + $0x140] sm:$0xff] 0.0
      %321 = vst [vmem:[#allocation2 + $0x148] sm:$0x3] 0.0
      %322 = vst [vmem:[#allocation2 + $0x150] sm:$0xff] 0.0
      %323 = vst [vmem:[#allocation2 + $0x158] sm:$0xff] 0.0
      %324 = vst [vmem:[#allocation2 + $0x160] sm:$0x3] 0.0
      %325 = vst [vmem:[#allocation2 + $0x168] sm:$0xff] 0.0
      %326 = vst [vmem:[#allocation2 + $0x170] sm:$0xff] 0.0
      %327 = vst [vmem:[#allocation2 + $0x178] sm:$0x3] 0.0
      %328 = vst [vmem:[#allocation2 + $0x180] sm:$0xff] 0.0
      %329 = vst [vmem:[#allocation2 + $0x188] sm:$0xff] 0.0
      %330 = vst [vmem:[#allocation2 + $0x190] sm:$0x3] 0.0
      %331 = vst [vmem:[#allocation2 + $0x198] sm:$0xff] 0.0
      %332 = vst [vmem:[#allocation2 + $0x1a0] sm:$0xff] 0.0
      %333 = vst [vmem:[#allocation2 + $0x1a8] sm:$0x3] 0.0
      %334 = vst [vmem:[#allocation3] sm:$0xff] 0.0
      %335 = vst [vmem:[#allocation3 + $0x8] sm:$0xff] 0.0
      %336 = vst [vmem:[#allocation3 + $0x10] sm:$0x3] 0.0
      %337 = vst [vmem:[#allocation3 + $0x18] sm:$0xff] 0.0
      %338 = vst [vmem:[#allocation3 + $0x20] sm:$0xff] 0.0
      %339 = vst [vmem:[#allocation3 + $0x28] sm:$0x3] 0.0
      %340 = vst [vmem:[#allocation3 + $0x30] sm:$0xff] 0.0
      %341 = vst [vmem:[#allocation3 + $0x38] sm:$0xff] 0.0
      %342 = vst [vmem:[#allocation3 + $0x40] sm:$0x3] 0.0
      %343 = vst [vmem:[#allocation3 + $0x48] sm:$0xff] 0.0
      %344 = vst [vmem:[#allocation3 + $0x50] sm:$0xff] 0.0
      %345 = vst [vmem:[#allocation3 + $0x58] sm:$0x3] 0.0
      %346 = vst [vmem:[#allocation3 + $0x60] sm:$0xff] 0.0
      %347 = vst [vmem:[#allocation3 + $0x68] sm:$0xff] 0.0
      %348 = vst [vmem:[#allocation3 + $0x70] sm:$0x3] 0.0
      %349 = vst [vmem:[#allocation3 + $0x78] sm:$0xff] 0.0
      %350 = vst [vmem:[#allocation3 + $0x80] sm:$0xff] 0.0
      %351 = vst [vmem:[#allocation3 + $0x88] sm:$0x3] 0.0
      %352 = vst [vmem:[#allocation3 + $0x90] sm:$0xff] 0.0
      %353 = vst [vmem:[#allocation3 + $0x98] sm:$0xff] 0.0
      %354 = vst [vmem:[#allocation3 + $0xa0] sm:$0x3] 0.0
      %355 = vst [vmem:[#allocation3 + $0xa8] sm:$0xff] 0.0
      %356 = vst [vmem:[#allocation3 + $0xb0] sm:$0xff] 0.0
      %357 = vst [vmem:[#allocation3 + $0xb8] sm:$0x3] 0.0
      %358 = vst [vmem:[#allocation3 + $0xc0] sm:$0xff] 0.0
      %359 = vst [vmem:[#allocation3 + $0xc8] sm:$0xff] 0.0
      %360 = vst [vmem:[#allocation3 + $0xd0] sm:$0x3] 0.0
      %361 = vst [vmem:[#allocation3 + $0xd8] sm:$0xff] 0.0
      %362 = vst [vmem:[#allocation3 + $0xe0] sm:$0xff] 0.0
      %363 = vst [vmem:[#allocation3 + $0xe8] sm:$0x3] 0.0
      %364 = vst [vmem:[#allocation3 + $0xf0] sm:$0xff] 0.0
      %365 = vst [vmem:[#allocation3 + $0xf8] sm:$0xff] 0.0
      %366 = vst [vmem:[#allocation3 + $0x100] sm:$0x3] 0.0
      %367 = vst [vmem:[#allocation3 + $0x108] sm:$0xff] 0.0
      %368 = vst [vmem:[#allocation3 + $0x110] sm:$0xff] 0.0
      %369 = vst [vmem:[#allocation3 + $0x118] sm:$0x3] 0.0
      %370 = vst [vmem:[#allocation3 + $0x120] sm:$0xff] 0.0
      %371 = vst [vmem:[#allocation3 + $0x128] sm:$0xff] 0.0
      %372 = vst [vmem:[#allocation3 + $0x130] sm:$0x3] 0.0
      %373 = vst [vmem:[#allocation3 + $0x138] sm:$0xff] 0.0
      %374 = vst [vmem:[#allocation3 + $0x140] sm:$0xff] 0.0
      %375 = vst [vmem:[#allocation3 + $0x148] sm:$0x3] 0.0
      %376 = vst [vmem:[#allocation3 + $0x150] sm:$0xff] 0.0
      %377 = vst [vmem:[#allocation3 + $0x158] sm:$0xff] 0.0
      %378 = vst [vmem:[#allocation3 + $0x160] sm:$0x3] 0.0
      %379 = vst [vmem:[#allocation3 + $0x168] sm:$0xff] 0.0
      %380 = vst [vmem:[#allocation3 + $0x170] sm:$0xff] 0.0
      %381 = vst [vmem:[#allocation3 + $0x178] sm:$0x3] 0.0
      %382 = vst [vmem:[#allocation3 + $0x180] sm:$0xff] 0.0
      %383 = vst [vmem:[#allocation3 + $0x188] sm:$0xff] 0.0
      %384 = vst [vmem:[#allocation3 + $0x190] sm:$0x3] 0.0
      %385 = vst [vmem:[#allocation3 + $0x198] sm:$0xff] 0.0
      %386 = vst [vmem:[#allocation3 + $0x1a0] sm:$0xff] 0.0
      %387 = vst [vmem:[#allocation3 + $0x1a8] sm:$0x3] 0.0
      %v388 = vld [vmem:[%s273] sm:$0xff]
      %v389 = vld [vmem:[%s273 + $0x8] sm:$0xff]
      %v390 = vld [vmem:[%s273 + $0x10] sm:$0xff]
      %v391 = vld [vmem:[%s273 + $0x18] sm:$0xff]
      %v392 = vld [vmem:[%s273 + $0x20] sm:$0xff]
      %v393 = vld [vmem:[%s273 + $0x28] sm:$0xff]
      %v394 = vld [vmem:[%s273 + $0x30] sm:$0xff]
      %v395 = vld [vmem:[%s273 + $0x38] sm:$0xff]
      %v396 = vld [vmem:[%s273 + $0x40] sm:$0xff]
      %v397 = vld [vmem:[%s273 + $0x48] sm:$0xff]
      %v398 = vld [vmem:[%s273 + $0x50] sm:$0xff]
      %v399 = vld [vmem:[%s273 + $0x58] sm:$0xff]
      %v400 = vld [vmem:[%s273 + $0x60] sm:$0xff]
      %v401 = vld [vmem:[%s273 + $0x68] sm:$0xff]
      %v402 = vld [vmem:[%s273 + $0x70] sm:$0xff]
      %v403 = vld [vmem:[%s273 + $0x78] sm:$0xff]
      %v404 = vld [vmem:[%s273 + $0x80] sm:$0xff]
      %v405 = vld [vmem:[%s273 + $0x88] sm:$0xff]
      %v406 = vld [vmem:[%s273 + $0x90] sm:$0xff]
      %v407 = vld [vmem:[%s273 + $0x98] sm:$0xff]
      %v408 = vld [vmem:[%s273 + $0xa0] sm:$0xff]
      %v409 = vld [vmem:[%s273 + $0xa8] sm:$0xff]
      %v410 = vld [vmem:[%s273 + $0xb0] sm:$0xff]
      %v411 = vld [vmem:[%s273 + $0xb8] sm:$0xff]
      %v412 = vld [vmem:[%s273 + $0xc0] sm:$0xff]
      %v413 = vld [vmem:[%s273 + $0xc8] sm:$0xff]
      %v414 = vld [vmem:[%s273 + $0xd0] sm:$0xff]
      %v415 = vld [vmem:[%s273 + $0xd8] sm:$0xff]
      %v416 = vld [vmem:[%s273 + $0xe0] sm:$0xff]
      %v417 = vld [vmem:[%s273 + $0xe8] sm:$0xff]
      %v418 = vld [vmem:[%s273 + $0xf0] sm:$0xff]
      %v419 = vld [vmem:[%s273 + $0xf8] sm:$0xff]
      %s420 = scalar_lea.vmem [#allocation2], 24
      %421 = vst [vmem:[%s420 + $0x1] sm:$0xff] %v388
      %422 = vst [vmem:[%s420 + $0x9] sm:$0xff] %v389
      %423 = vst [vmem:[%s420 + $0x19] sm:$0xff] %v390
      %424 = vst [vmem:[%s420 + $0x21] sm:$0xff] %v391
      %425 = vst [vmem:[%s420 + $0x31] sm:$0xff] %v392
      %426 = vst [vmem:[%s420 + $0x39] sm:$0xff] %v393
      %427 = vst [vmem:[%s420 + $0x49] sm:$0xff] %v394
      %428 = vst [vmem:[%s420 + $0x51] sm:$0xff] %v395
      %429 = vst [vmem:[%s420 + $0x61] sm:$0xff] %v396
      %430 = vst [vmem:[%s420 + $0x69] sm:$0xff] %v397
      %431 = vst [vmem:[%s420 + $0x79] sm:$0xff] %v398
      %432 = vst [vmem:[%s420 + $0x81] sm:$0xff] %v399
      %433 = vst [vmem:[%s420 + $0x91] sm:$0xff] %v400
      %434 = vst [vmem:[%s420 + $0x99] sm:$0xff] %v401
      %435 = vst [vmem:[%s420 + $0xa9] sm:$0xff] %v402
      %436 = vst [vmem:[%s420 + $0xb1] sm:$0xff] %v403
      %437 = vst [vmem:[%s420 + $0xc1] sm:$0xff] %v404
      %438 = vst [vmem:[%s420 + $0xc9] sm:$0xff] %v405
      %439 = vst [vmem:[%s420 + $0xd9] sm:$0xff] %v406
      %440 = vst [vmem:[%s420 + $0xe1] sm:$0xff] %v407
      %441 = vst [vmem:[%s420 + $0xf1] sm:$0xff] %v408
      %442 = vst [vmem:[%s420 + $0xf9] sm:$0xff] %v409
      %443 = vst [vmem:[%s420 + $0x109] sm:$0xff] %v410
      %444 = vst [vmem:[%s420 + $0x111] sm:$0xff] %v411
      %445 = vst [vmem:[%s420 + $0x121] sm:$0xff] %v412
      %446 = vst [vmem:[%s420 + $0x129] sm:$0xff] %v413
      %447 = vst [vmem:[%s420 + $0x139] sm:$0xff] %v414
      %448 = vst [vmem:[%s420 + $0x141] sm:$0xff] %v415
      %449 = vst [vmem:[%s420 + $0x151] sm:$0xff] %v416
      %450 = vst [vmem:[%s420 + $0x159] sm:$0xff] %v417
      %451 = vst [vmem:[%s420 + $0x169] sm:$0xff] %v418
      %452 = vst [vmem:[%s420 + $0x171] sm:$0xff] %v419
      %v453 = vld [vmem:[#allocation2] sm:$0xff]
      %v454 = vld [vmem:[#allocation2 + $0x8] sm:$0xff]
      %v455 = vld [vmem:[#allocation2 + $0x10] sm:$0x3]
      %v456 = vld [vmem:[#allocation2 + $0x18] sm:$0xff]
      %v457 = vld [vmem:[#allocation2 + $0x20] sm:$0xff]
      %v458 = vld [vmem:[#allocation2 + $0x28] sm:$0x3]
      %v459 = vld [vmem:[#allocation2 + $0x30] sm:$0xff]
      %v460 = vld [vmem:[#allocation2 + $0x38] sm:$0xff]
      %v461 = vld [vmem:[#allocation2 + $0x40] sm:$0x3]
      %v462 = vld [vmem:[#allocation2 + $0x48] sm:$0xff]
      %v463 = vld [vmem:[#allocation2 + $0x50] sm:$0xff]
      %v464 = vld [vmem:[#allocation2 + $0x58] sm:$0x3]
      %v465 = vld [vmem:[#allocation2 + $0x60] sm:$0xff]
      %v466 = vld [vmem:[#allocation2 + $0x68] sm:$0xff]
      %v467 = vld [vmem:[#allocation2 + $0x70] sm:$0x3]
      %v468 = vld [vmem:[#allocation2 + $0x78] sm:$0xff]
      %v469 = vld [vmem:[#allocation2 + $0x80] sm:$0xff]
      %v470 = vld [vmem:[#allocation2 + $0x88] sm:$0x3]
      %v471 = vld [vmem:[#allocation2 + $0x90] sm:$0xff]
      %v472 = vld [vmem:[#allocation2 + $0x98] sm:$0xff]
      %v473 = vld [vmem:[#allocation2 + $0xa0] sm:$0x3]
      %v474 = vld [vmem:[#allocation2 + $0xa8] sm:$0xff]
      %v475 = vld [vmem:[#allocation2 + $0xb0] sm:$0xff]
      %v476 = vld [vmem:[#allocation2 + $0xb8] sm:$0x3]
      %v477 = vld [vmem:[#allocation2 + $0xc0] sm:$0xff]
      %v478 = vld [vmem:[#allocation2 + $0xc8] sm:$0xff]
      %v479 = vld [vmem:[#allocation2 + $0xd0] sm:$0x3]
      %v480 = vld [vmem:[#allocation2 + $0xd8] sm:$0xff]
      %v481 = vld [vmem:[#allocation2 + $0xe0] sm:$0xff]
      %v482 = vld [vmem:[#allocation2 + $0xe8] sm:$0x3]
      %v483 = vld [vmem:[#allocation2 + $0xf0] sm:$0xff]
      %v484 = vld [vmem:[#allocation2 + $0xf8] sm:$0xff]
      %v485 = vld [vmem:[#allocation2 + $0x100] sm:$0x3]
      %v486 = vld [vmem:[#allocation2 + $0x108] sm:$0xff]
      %v487 = vld [vmem:[#allocation2 + $0x110] sm:$0xff]
      %v488 = vld [vmem:[#allocation2 + $0x118] sm:$0x3]
      %v489 = vld [vmem:[#allocation2 + $0x120] sm:$0xff]
      %v490 = vld [vmem:[#allocation2 + $0x128] sm:$0xff]
      %v491 = vld [vmem:[#allocation2 + $0x130] sm:$0x3]
      %v492 = vld [vmem:[#allocation2 + $0x138] sm:$0xff]
      %v493 = vld [vmem:[#allocation2 + $0x140] sm:$0xff]
      %v494 = vld [vmem:[#allocation2 + $0x148] sm:$0x3]
      %v495 = vld [vmem:[#allocation2 + $0x150] sm:$0xff]
      %v496 = vld [vmem:[#allocation2 + $0x158] sm:$0xff]
      %v497 = vld [vmem:[#allocation2 + $0x160] sm:$0x3]
      %v498 = vld [vmem:[#allocation2 + $0x168] sm:$0xff]
      %v499 = vld [vmem:[#allocation2 + $0x170] sm:$0xff]
      %v500 = vld [vmem:[#allocation2 + $0x178] sm:$0x3]
      %v501 = vld [vmem:[#allocation2 + $0x180] sm:$0xff]
      %v502 = vld [vmem:[#allocation2 + $0x188] sm:$0xff]
      %v503 = vld [vmem:[#allocation2 + $0x190] sm:$0x3]
      %v504 = vld [vmem:[#allocation2 + $0x198] sm:$0xff]
      %v505 = vld [vmem:[#allocation2 + $0x1a0] sm:$0xff]
      %v506 = vld [vmem:[#allocation2 + $0x1a8] sm:$0x3]
      %v507 = vpack.c.bf16 %v454, %v453
      %v508 = vpack.c.bf16 %v455, %v455
      %v509 = vpack.c.bf16 %v457, %v456
      %v510 = vpack.c.bf16 %v458, %v458
      %v511 = vpack.c.bf16 %v460, %v459
      %v512 = vpack.c.bf16 %v461, %v461
      %v513 = vpack.c.bf16 %v463, %v462
      %v514 = vpack.c.bf16 %v464, %v464
      %v515 = vpack.c.bf16 %v466, %v465
      %v516 = vpack.c.bf16 %v467, %v467
      %v517 = vpack.c.bf16 %v469, %v468
      %v518 = vpack.c.bf16 %v470, %v470
      %v519 = vpack.c.bf16 %v472, %v471
      %v520 = vpack.c.bf16 %v473, %v473
      %v521 = vpack.c.bf16 %v475, %v474
      %v522 = vpack.c.bf16 %v476, %v476
      %v523 = vpack.c.bf16 %v478, %v477
      %v524 = vpack.c.bf16 %v479, %v479
      %v525 = vpack.c.bf16 %v481, %v480
      %v526 = vpack.c.bf16 %v482, %v482
      %v527 = vpack.c.bf16 %v484, %v483
      %v528 = vpack.c.bf16 %v485, %v485
      %v529 = vpack.c.bf16 %v487, %v486
      %v530 = vpack.c.bf16 %v488, %v488
      %v531 = vpack.c.bf16 %v490, %v489
      %v532 = vpack.c.bf16 %v491, %v491
      %v533 = vpack.c.bf16 %v493, %v492
      %v534 = vpack.c.bf16 %v494, %v494
      %v535 = vpack.c.bf16 %v496, %v495
      %v536 = vpack.c.bf16 %v497, %v497
      %v537 = vpack.c.bf16 %v499, %v498
      %v538 = vpack.c.bf16 %v500, %v500
      %v539 = vpack.c.bf16 %v502, %v501
      %v540 = vpack.c.bf16 %v503, %v503
      %v541 = vpack.c.bf16 %v505, %v504
      %v542 = vpack.c.bf16 %v506, %v506
      %vm543 = vsmask.f32 7424
      %v545 = vshrl.u32 %v507, 16
      %v547 = vshll.u32 %v507, 16
      %v549 = vrot.slane %v547, 1
      %v550 = vor.u32 %v545, %v549
      %v552 = vshll.u32 %v508, 16
      %v554 = vrot.slane %v552, 1
      %v555 = vsel %vm543, %v550, %v554
      %v557 = vshrl.u32 %v509, 16
      %v559 = vshll.u32 %v509, 16
      %v561 = vrot.slane %v559, 1
      %v562 = vor.u32 %v557, %v561
      %v564 = vshll.u32 %v510, 16
      %v566 = vrot.slane %v564, 1
      %v567 = vsel %vm543, %v562, %v566
      %v569 = vshrl.u32 %v511, 16
      %v571 = vshll.u32 %v511, 16
      %v573 = vrot.slane %v571, 1
      %v574 = vor.u32 %v569, %v573
      %v576 = vshll.u32 %v512, 16
      %v578 = vrot.slane %v576, 1
      %v579 = vsel %vm543, %v574, %v578
      %v581 = vshrl.u32 %v513, 16
      %v583 = vshll.u32 %v513, 16
      %v585 = vrot.slane %v583, 1
      %v586 = vor.u32 %v581, %v585
      %v588 = vshll.u32 %v514, 16
      %v590 = vrot.slane %v588, 1
      %v591 = vsel %vm543, %v586, %v590
      %v593 = vshrl.u32 %v515, 16
      %v595 = vshll.u32 %v515, 16
      %v597 = vrot.slane %v595, 1
      %v598 = vor.u32 %v593, %v597
      %v600 = vshll.u32 %v516, 16
      %v602 = vrot.slane %v600, 1
      %v603 = vsel %vm543, %v598, %v602
      %v605 = vshrl.u32 %v517, 16
      %v607 = vshll.u32 %v517, 16
      %v609 = vrot.slane %v607, 1
      %v610 = vor.u32 %v605, %v609
      %v612 = vshll.u32 %v518, 16
      %v614 = vrot.slane %v612, 1
      %v615 = vsel %vm543, %v610, %v614
      %v617 = vshrl.u32 %v519, 16
      %v619 = vshll.u32 %v519, 16
      %v621 = vrot.slane %v619, 1
      %v622 = vor.u32 %v617, %v621
      %v624 = vshll.u32 %v520, 16
      %v626 = vrot.slane %v624, 1
      %v627 = vsel %vm543, %v622, %v626
      %v629 = vshrl.u32 %v521, 16
      %v631 = vshll.u32 %v521, 16
      %v633 = vrot.slane %v631, 1
      %v634 = vor.u32 %v629, %v633
      %v636 = vshll.u32 %v522, 16
      %v638 = vrot.slane %v636, 1
      %v639 = vsel %vm543, %v634, %v638
      %v641 = vshrl.u32 %v523, 16
      %v643 = vshll.u32 %v523, 16
      %v645 = vrot.slane %v643, 1
      %v646 = vor.u32 %v641, %v645
      %v648 = vshll.u32 %v524, 16
      %v650 = vrot.slane %v648, 1
      %v651 = vsel %vm543, %v646, %v650
      %v653 = vshrl.u32 %v525, 16
      %v655 = vshll.u32 %v525, 16
      %v657 = vrot.slane %v655, 1
      %v658 = vor.u32 %v653, %v657
      %v660 = vshll.u32 %v526, 16
      %v662 = vrot.slane %v660, 1
      %v663 = vsel %vm543, %v658, %v662
      %v665 = vshrl.u32 %v527, 16
      %v667 = vshll.u32 %v527, 16
      %v669 = vrot.slane %v667, 1
      %v670 = vor.u32 %v665, %v669
      %v672 = vshll.u32 %v528, 16
      %v674 = vrot.slane %v672, 1
      %v675 = vsel %vm543, %v670, %v674
      %v677 = vshrl.u32 %v529, 16
      %v679 = vshll.u32 %v529, 16
      %v681 = vrot.slane %v679, 1
      %v682 = vor.u32 %v677, %v681
      %v684 = vshll.u32 %v530, 16
      %v686 = vrot.slane %v684, 1
      %v687 = vsel %vm543, %v682, %v686
      %v689 = vshrl.u32 %v531, 16
      %v691 = vshll.u32 %v531, 16
      %v693 = vrot.slane %v691, 1
      %v694 = vor.u32 %v689, %v693
      %v696 = vshll.u32 %v532, 16
      %v698 = vrot.slane %v696, 1
      %v699 = vsel %vm543, %v694, %v698
      %v701 = vshrl.u32 %v533, 16
      %v703 = vshll.u32 %v533, 16
      %v705 = vrot.slane %v703, 1
      %v706 = vor.u32 %v701, %v705
      %v708 = vshll.u32 %v534, 16
      %v710 = vrot.slane %v708, 1
      %v711 = vsel %vm543, %v706, %v710
      %v713 = vshrl.u32 %v535, 16
      %v715 = vshll.u32 %v535, 16
      %v717 = vrot.slane %v715, 1
      %v718 = vor.u32 %v713, %v717
      %v720 = vshll.u32 %v536, 16
      %v722 = vrot.slane %v720, 1
      %v723 = vsel %vm543, %v718, %v722
      %v725 = vshrl.u32 %v537, 16
      %v727 = vshll.u32 %v537, 16
      %v729 = vrot.slane %v727, 1
      %v730 = vor.u32 %v725, %v729
      %v732 = vshll.u32 %v538, 16
      %v734 = vrot.slane %v732, 1
      %v735 = vsel %vm543, %v730, %v734
      %vm784 = vcmask 1046528
      %v785 = vrot.slane %v507, 1
      %v786 = vrot.slane %v508, 1
      %v787 = vsel %vm784, %v785, %v786
      %v788 = vrot.slane %v509, 1
      %v789 = vrot.slane %v510, 1
      %v790 = vsel %vm784, %v788, %v789
      %v791 = vrot.slane %v511, 1
      %v792 = vrot.slane %v512, 1
      %v793 = vsel %vm784, %v791, %v792
      %v794 = vrot.slane %v513, 1
      %v795 = vrot.slane %v514, 1
      %v796 = vsel %vm784, %v794, %v795
      %v797 = vrot.slane %v515, 1
      %v798 = vrot.slane %v516, 1
      %v799 = vsel %vm784, %v797, %v798
      %v800 = vrot.slane %v517, 1
      %v801 = vrot.slane %v518, 1
      %v802 = vsel %vm784, %v800, %v801
      %v803 = vrot.slane %v519, 1
      %v804 = vrot.slane %v520, 1
      %v805 = vsel %vm784, %v803, %v804
      %v806 = vrot.slane %v521, 1
      %v807 = vrot.slane %v522, 1
      %v808 = vsel %vm784, %v806, %v807
      %v809 = vrot.slane %v523, 1
      %v810 = vrot.slane %v524, 1
      %v811 = vsel %vm784, %v809, %v810
      %v812 = vrot.slane %v525, 1
      %v813 = vrot.slane %v526, 1
      %v814 = vsel %vm784, %v812, %v813
      %v815 = vrot.slane %v527, 1
      %v816 = vrot.slane %v528, 1
      %v817 = vsel %vm784, %v815, %v816
      %v818 = vrot.slane %v529, 1
      %v819 = vrot.slane %v530, 1
      %v820 = vsel %vm784, %v818, %v819
      %v821 = vrot.slane %v531, 1
      %v822 = vrot.slane %v532, 1
      %v823 = vsel %vm784, %v821, %v822
      %v824 = vrot.slane %v533, 1
      %v825 = vrot.slane %v534, 1
      %v826 = vsel %vm784, %v824, %v825
      %v827 = vrot.slane %v535, 1
      %v828 = vrot.slane %v536, 1
      %v829 = vsel %vm784, %v827, %v828
      %v830 = vrot.slane %v537, 1
      %v831 = vrot.slane %v538, 1
      %v832 = vsel %vm784, %v830, %v831
      %v850 = vshrl.u32 %v539, 16
      %v852 = vshll.u32 %v539, 16
      %v854 = vrot.slane %v852, 1
      %v855 = vor.u32 %v850, %v854
      %v857 = vshll.u32 %v540, 16
      %v859 = vrot.slane %v857, 1
      %v860 = vsel %vm543, %v855, %v859
      %v864 = vrot.slane %v539, 1
      %v865 = vrot.slane %v540, 1
      %v866 = vsel %vm784, %v864, %v865
      %v869 = vshrl.u32 %v541, 16
      %v871 = vshll.u32 %v541, 16
      %v873 = vrot.slane %v871, 1
      %v874 = vor.u32 %v869, %v873
      %v876 = vshll.u32 %v542, 16
      %v878 = vrot.slane %v876, 1
      %v879 = vsel %vm543, %v874, %v878
      %v883 = vrot.slane %v541, 1
      %v884 = vrot.slane %v542, 1
      %v885 = vsel %vm784, %v883, %v884
      %v887 = vld [vmem:[%s1] sm:$0xf]
      %v888 = vld [vmem:[%s1 + $0x4] sm:$0xf]
      %v889 = vld [vmem:[%s1 + $0x8] sm:$0xf]
      %v890 = vld [vmem:[%s1 + $0xc] sm:$0xf]
      %v891 = vld [vmem:[%s1 + $0x10] sm:$0xf]
      %v892 = vld [vmem:[%s1 + $0x14] sm:$0xf]
      %v893 = vld [vmem:[%s1 + $0x18] sm:$0xf]
      %v894 = vld [vmem:[%s1 + $0x1c] sm:$0xf]
      %v895 = vld [vmem:[%s1 + $0x20] sm:$0xf]
      %v896 = vld [vmem:[%s1 + $0x24] sm:$0xf]
      %v897 = vld [vmem:[%s1 + $0x28] sm:$0xf]
      %v898 = vld [vmem:[%s1 + $0x2c] sm:$0xf]
      %v899 = vld [vmem:[%s1 + $0x30] sm:$0xf]
      %v900 = vld [vmem:[%s1 + $0x34] sm:$0xf]
      %v901 = vld [vmem:[%s1 + $0x38] sm:$0xf]
      %v902 = vld [vmem:[%s1 + $0x3c] sm:$0xf]
      %v903 = vld [vmem:[%s1 + $0x40] sm:$0xf]
      %v904 = vld [vmem:[%s1 + $0x44] sm:$0xf]
      %v905 = vld [vmem:[%s1 + $0x48] sm:$0xf]
      %v906 = vld [vmem:[%s1 + $0x4c] sm:$0xf]
      %v907 = vld [vmem:[%s1 + $0x50] sm:$0xf]
      %v908 = vld [vmem:[%s1 + $0x54] sm:$0xf]
      %v909 = vld [vmem:[%s1 + $0x58] sm:$0xf]
      %v910 = vld [vmem:[%s1 + $0x5c] sm:$0xf]
      %v911 = vld [vmem:[%s1 + $0x60] sm:$0xf]
      %v912 = vld [vmem:[%s1 + $0x64] sm:$0xf]
      %v913 = vld [vmem:[%s1 + $0x68] sm:$0xf]
      %v914 = vld [vmem:[%s1 + $0x6c] sm:$0xf]
      %v915 = vld [vmem:[%s1 + $0x70] sm:$0xf]
      %v916 = vld [vmem:[%s1 + $0x74] sm:$0xf]
      %v917 = vld [vmem:[%s1 + $0x78] sm:$0xf]
      %v918 = vld [vmem:[%s1 + $0x7c] sm:$0xf]
      %v919 = vld [vmem:[%s1 + $0x80] sm:$0xf]
      %v920 = vld [vmem:[%s1 + $0x84] sm:$0xf]
      %v921 = vld [vmem:[%s1 + $0x88] sm:$0xf]
      %v922 = vld [vmem:[%s1 + $0x8c] sm:$0xf]
      %v923 = vld [vmem:[%s1 + $0x90] sm:$0xf]
      %v924 = vld [vmem:[%s1 + $0x94] sm:$0xf]
      %v925 = vld [vmem:[%s1 + $0x98] sm:$0xf]
      %v926 = vld [vmem:[%s1 + $0x9c] sm:$0xf]
      %v927 = vld [vmem:[%s1 + $0xa0] sm:$0xf]
      %v928 = vld [vmem:[%s1 + $0xa4] sm:$0xf]
      %v929 = vld [vmem:[%s1 + $0xa8] sm:$0xf]
      %v930 = vld [vmem:[%s1 + $0xac] sm:$0xf]
      %v931 = vld [vmem:[%s1 + $0xb0] sm:$0xf]
      %v932 = vld [vmem:[%s1 + $0xb4] sm:$0xf]
      %v933 = vld [vmem:[%s1 + $0xb8] sm:$0xf]
      %v934 = vld [vmem:[%s1 + $0xbc] sm:$0xf]
      %v935 = vld [vmem:[%s1 + $0xc0] sm:$0xf]
      %v936 = vld [vmem:[%s1 + $0xc4] sm:$0xf]
      %v937 = vld [vmem:[%s1 + $0xc8] sm:$0xf]
      %v938 = vld [vmem:[%s1 + $0xcc] sm:$0xf]
      %v939 = vld [vmem:[%s1 + $0xd0] sm:$0xf]
      %v940 = vld [vmem:[%s1 + $0xd4] sm:$0xf]
      %v941 = vld [vmem:[%s1 + $0xd8] sm:$0xf]
      %v942 = vld [vmem:[%s1 + $0xdc] sm:$0xf]
      %v943 = vld [vmem:[%s1 + $0xe0] sm:$0xf]
      %v944 = vld [vmem:[%s1 + $0xe4] sm:$0xf]
      %v945 = vld [vmem:[%s1 + $0xe8] sm:$0xf]
      %v946 = vld [vmem:[%s1 + $0xec] sm:$0xf]
      %v947 = vld [vmem:[%s1 + $0xf0] sm:$0xf]
      %v948 = vld [vmem:[%s1 + $0xf4] sm:$0xf]
      %v949 = vld [vmem:[%s1 + $0xf8] sm:$0xf]
      %v950 = vld [vmem:[%s1 + $0xfc] sm:$0xf]
      %v951 = vld [vmem:[%s1 + $0x100] sm:$0xf]
      %v952 = vld [vmem:[%s1 + $0x104] sm:$0xf]
      %v953 = vld [vmem:[%s1 + $0x108] sm:$0xf]
      %v954 = vld [vmem:[%s1 + $0x10c] sm:$0xf]
      %v955 = vld [vmem:[%s1 + $0x110] sm:$0xf]
      %v956 = vld [vmem:[%s1 + $0x114] sm:$0xf]
      %v957 = vld [vmem:[%s1 + $0x118] sm:$0xf]
      %v958 = vld [vmem:[%s1 + $0x11c] sm:$0xf]
      %v959 = vld [vmem:[%s1 + $0x120] sm:$0xf]
      %v960 = vld [vmem:[%s1 + $0x124] sm:$0xf]
      %v961 = vld [vmem:[%s1 + $0x128] sm:$0xf]
      %v962 = vld [vmem:[%s1 + $0x12c] sm:$0xf]
      %v963 = vld [vmem:[%s1 + $0x130] sm:$0xf]
      %v964 = vld [vmem:[%s1 + $0x134] sm:$0xf]
      %v965 = vld [vmem:[%s1 + $0x138] sm:$0xf]
      %v966 = vld [vmem:[%s1 + $0x13c] sm:$0xf]
      %v967 = vld [vmem:[%s1 + $0x140] sm:$0xf]
      %v968 = vld [vmem:[%s1 + $0x144] sm:$0xf]
      %v969 = vld [vmem:[%s1 + $0x148] sm:$0xf]
      %v970 = vld [vmem:[%s1 + $0x14c] sm:$0xf]
      %v971 = vld [vmem:[%s1 + $0x150] sm:$0xf]
      %v972 = vld [vmem:[%s1 + $0x154] sm:$0xf]
      %v973 = vld [vmem:[%s1 + $0x158] sm:$0xf]
      %v974 = vld [vmem:[%s1 + $0x15c] sm:$0xf]
      %v975 = vld [vmem:[%s1 + $0x160] sm:$0xf]
      %v976 = vld [vmem:[%s1 + $0x164] sm:$0xf]
      %v977 = vld [vmem:[%s1 + $0x168] sm:$0xf]
      %v978 = vld [vmem:[%s1 + $0x16c] sm:$0xf]
      %v979 = vld [vmem:[%s1 + $0x170] sm:$0xf]
      %v980 = vld [vmem:[%s1 + $0x174] sm:$0xf]
      %v981 = vld [vmem:[%s1 + $0x178] sm:$0xf]
      %v982 = vld [vmem:[%s1 + $0x17c] sm:$0xf]
      %v983 = vld [vmem:[%s1 + $0x180] sm:$0xf]
      %v984 = vld [vmem:[%s1 + $0x184] sm:$0xf]
      %v985 = vld [vmem:[%s1 + $0x188] sm:$0xf]
      %v986 = vld [vmem:[%s1 + $0x18c] sm:$0xf]
      %v987 = vld [vmem:[%s1 + $0x190] sm:$0xf]
      %v988 = vld [vmem:[%s1 + $0x194] sm:$0xf]
      %v989 = vld [vmem:[%s1 + $0x198] sm:$0xf]
      %v990 = vld [vmem:[%s1 + $0x19c] sm:$0xf]
      %v991 = vld [vmem:[%s1 + $0x1a0] sm:$0xf]
      %v992 = vld [vmem:[%s1 + $0x1a4] sm:$0xf]
      %v993 = vld [vmem:[%s1 + $0x1a8] sm:$0xf]
      %v994 = vld [vmem:[%s1 + $0x1ac] sm:$0xf]
      %v995 = vld [vmem:[%s1 + $0x1b0] sm:$0xf]
      %v996 = vld [vmem:[%s1 + $0x1b4] sm:$0xf]
      %v997 = vld [vmem:[%s1 + $0x1b8] sm:$0xf]
      %v998 = vld [vmem:[%s1 + $0x1bc] sm:$0xf]
      %v999 = vld [vmem:[%s1 + $0x1c0] sm:$0xf]
      %v1000 = vld [vmem:[%s1 + $0x1c4] sm:$0xf]
      %v1001 = vld [vmem:[%s1 + $0x1c8] sm:$0xf]
      %v1002 = vld [vmem:[%s1 + $0x1cc] sm:$0xf]
      %v1003 = vld [vmem:[%s1 + $0x1d0] sm:$0xf]
      %v1004 = vld [vmem:[%s1 + $0x1d4] sm:$0xf]
      %v1005 = vld [vmem:[%s1 + $0x1d8] sm:$0xf]
      %v1006 = vld [vmem:[%s1 + $0x1dc] sm:$0xf]
      %v1007 = vld [vmem:[%s1 + $0x1e0] sm:$0xf]
      %v1008 = vld [vmem:[%s1 + $0x1e4] sm:$0xf]
      %v1009 = vld [vmem:[%s1 + $0x1e8] sm:$0xf]
      %v1010 = vld [vmem:[%s1 + $0x1ec] sm:$0xf]
      %v1011 = vld [vmem:[%s1 + $0x1f0] sm:$0xf]
      %v1012 = vld [vmem:[%s1 + $0x1f4] sm:$0xf]
      %v1013 = vld [vmem:[%s1 + $0x1f8] sm:$0xf]
      %v1014 = vld [vmem:[%s1 + $0x1fc] sm:$0xf]
      %v1015 = vld [vmem:[%s1 + $0x200] sm:$0xf]
      %v1016 = vld [vmem:[%s1 + $0x204] sm:$0xf]
      %v1017 = vld [vmem:[%s1 + $0x208] sm:$0xf]
      %v1018 = vld [vmem:[%s1 + $0x20c] sm:$0xf]
      %v1019 = vld [vmem:[%s1 + $0x210] sm:$0xf]
      %v1020 = vld [vmem:[%s1 + $0x214] sm:$0xf]
      %v1021 = vld [vmem:[%s1 + $0x218] sm:$0xf]
      %v1022 = vld [vmem:[%s1 + $0x21c] sm:$0xf]
      %v1023 = vld [vmem:[%s1 + $0x220] sm:$0xf]
      %v1024 = vld [vmem:[%s1 + $0x224] sm:$0xf]
      %v1025 = vld [vmem:[%s1 + $0x228] sm:$0xf]
      %v1026 = vld [vmem:[%s1 + $0x22c] sm:$0xf]
      %v1027 = vld [vmem:[%s1 + $0x230] sm:$0xf]
      %v1028 = vld [vmem:[%s1 + $0x234] sm:$0xf]
      %v1029 = vld [vmem:[%s1 + $0x238] sm:$0xf]
      %v1030 = vld [vmem:[%s1 + $0x23c] sm:$0xf]
      %v1175 = vunpack.c.l.b16 %v887
      %v1176 = vunpack.c.l.b16 %v888
      %v1177 = vunpack.c.l.b16 %v889
      %v1178 = vunpack.c.l.b16 %v890
      %v1179 = vunpack.c.l.b16 %v891
      %v1180 = vunpack.c.l.b16 %v892
      %v1181 = vunpack.c.l.b16 %v893
      %v1182 = vunpack.c.l.b16 %v894
      %v1183 = vunpack.c.l.b16 %v895
      %v1184 = vunpack.c.l.b16 %v896
      %v1185 = vunpack.c.l.b16 %v897
      %v1186 = vunpack.c.l.b16 %v898
      %v1187 = vunpack.c.l.b16 %v899
      %v1188 = vunpack.c.l.b16 %v900
      %v1189 = vunpack.c.l.b16 %v901
      %v1190 = vunpack.c.l.b16 %v902
      %v1191 = vunpack.c.l.b16 %v903
      %v1192 = vunpack.c.l.b16 %v904
      %v1193 = vunpack.c.l.b16 %v905
      %v1194 = vunpack.c.l.b16 %v906
      %v1195 = vunpack.c.l.b16 %v907
      %v1196 = vunpack.c.l.b16 %v908
      %v1197 = vunpack.c.l.b16 %v909
      %v1198 = vunpack.c.l.b16 %v910
      %v1199 = vunpack.c.l.b16 %v911
      %v1200 = vunpack.c.l.b16 %v912
      %v1201 = vunpack.c.l.b16 %v913
      %v1202 = vunpack.c.l.b16 %v914
      %v1203 = vunpack.c.l.b16 %v915
      %v1204 = vunpack.c.l.b16 %v916
      %v1205 = vunpack.c.l.b16 %v917
      %v1206 = vunpack.c.l.b16 %v918
      %v1207 = vunpack.c.l.b16 %v919
      %v1208 = vunpack.c.l.b16 %v920
      %v1209 = vunpack.c.l.b16 %v921
      %v1210 = vunpack.c.l.b16 %v922
      %v1211 = vunpack.c.l.b16 %v923
      %v1212 = vunpack.c.l.b16 %v924
      %v1213 = vunpack.c.l.b16 %v925
      %v1214 = vunpack.c.l.b16 %v926
      %v1215 = vunpack.c.l.b16 %v927
      %v1216 = vunpack.c.l.b16 %v928
      %v1217 = vunpack.c.l.b16 %v929
      %v1218 = vunpack.c.l.b16 %v930
      %v1219 = vunpack.c.l.b16 %v931
      %v1220 = vunpack.c.l.b16 %v932
      %v1221 = vunpack.c.l.b16 %v933
      %v1222 = vunpack.c.l.b16 %v934
      %v1223 = vunpack.c.l.b16 %v935
      %v1224 = vunpack.c.l.b16 %v936
      %v1225 = vunpack.c.l.b16 %v937
      %v1226 = vunpack.c.l.b16 %v938
      %v1227 = vunpack.c.l.b16 %v939
      %v1228 = vunpack.c.l.b16 %v940
      %v1229 = vunpack.c.l.b16 %v941
      %v1230 = vunpack.c.l.b16 %v942
      %v1231 = vunpack.c.l.b16 %v943
      %v1232 = vunpack.c.l.b16 %v944
      %v1233 = vunpack.c.l.b16 %v945
      %v1234 = vunpack.c.l.b16 %v946
      %v1235 = vunpack.c.l.b16 %v947
      %v1236 = vunpack.c.l.b16 %v948
      %v1237 = vunpack.c.l.b16 %v949
      %v1238 = vunpack.c.l.b16 %v950
      %v1239 = vunpack.c.l.b16 %v951
      %v1240 = vunpack.c.l.b16 %v952
      %v1241 = vunpack.c.l.b16 %v953
      %v1242 = vunpack.c.l.b16 %v954
      %v1243 = vunpack.c.l.b16 %v955
      %v1244 = vunpack.c.l.b16 %v956
      %v1245 = vunpack.c.l.b16 %v957
      %v1246 = vunpack.c.l.b16 %v958
      %v1247 = vunpack.c.l.b16 %v959
      %v1248 = vunpack.c.l.b16 %v960
      %v1249 = vunpack.c.l.b16 %v961
      %v1250 = vunpack.c.l.b16 %v962
      %v1251 = vunpack.c.l.b16 %v963
      %v1252 = vunpack.c.l.b16 %v964
      %v1253 = vunpack.c.l.b16 %v965
      %v1254 = vunpack.c.l.b16 %v966
      %v1255 = vunpack.c.l.b16 %v967
      %v1256 = vunpack.c.l.b16 %v968
      %v1257 = vunpack.c.l.b16 %v969
      %v1258 = vunpack.c.l.b16 %v970
      %v1259 = vunpack.c.l.b16 %v971
      %v1260 = vunpack.c.l.b16 %v972
      %v1261 = vunpack.c.l.b16 %v973
      %v1262 = vunpack.c.l.b16 %v974
      %v1263 = vunpack.c.l.b16 %v975
      %v1264 = vunpack.c.l.b16 %v976
      %v1265 = vunpack.c.l.b16 %v977
      %v1266 = vunpack.c.l.b16 %v978
      %v1267 = vunpack.c.l.b16 %v979
      %v1268 = vunpack.c.l.b16 %v980
      %v1269 = vunpack.c.l.b16 %v981
      %v1270 = vunpack.c.l.b16 %v982
      %v1271 = vunpack.c.l.b16 %v983
      %v1272 = vunpack.c.l.b16 %v984
      %v1273 = vunpack.c.l.b16 %v985
      %v1274 = vunpack.c.l.b16 %v986
      %v1275 = vunpack.c.l.b16 %v987
      %v1276 = vunpack.c.l.b16 %v988
      %v1277 = vunpack.c.l.b16 %v989
      %v1278 = vunpack.c.l.b16 %v990
      %v1279 = vunpack.c.l.b16 %v991
      %v1280 = vunpack.c.l.b16 %v992
      %v1281 = vunpack.c.l.b16 %v993
      %v1282 = vunpack.c.l.b16 %v994
      %v1283 = vunpack.c.l.b16 %v995
      %v1284 = vunpack.c.l.b16 %v996
      %v1285 = vunpack.c.l.b16 %v997
      %v1286 = vunpack.c.l.b16 %v998
      %v1287 = vunpack.c.l.b16 %v999
      %v1288 = vunpack.c.l.b16 %v1000
      %v1289 = vunpack.c.l.b16 %v1001
      %v1290 = vunpack.c.l.b16 %v1002
      %v1291 = vunpack.c.l.b16 %v1003
      %v1292 = vunpack.c.l.b16 %v1004
      %v1293 = vunpack.c.l.b16 %v1005
      %v1294 = vunpack.c.l.b16 %v1006
      %v1295 = vunpack.c.l.b16 %v1007
      %v1296 = vunpack.c.l.b16 %v1008
      %v1297 = vunpack.c.l.b16 %v1009
      %v1298 = vunpack.c.l.b16 %v1010
      %v1299 = vunpack.c.l.b16 %v1011
      %v1300 = vunpack.c.l.b16 %v1012
      %v1301 = vunpack.c.l.b16 %v1013
      %v1302 = vunpack.c.l.b16 %v1014
      %v1303 = vunpack.c.l.b16 %v1015
      %v1304 = vunpack.c.l.b16 %v1016
      %v1305 = vunpack.c.l.b16 %v1017
      %v1306 = vunpack.c.l.b16 %v1018
      %v1307 = vunpack.c.l.b16 %v1019
      %v1308 = vunpack.c.l.b16 %v1020
      %v1309 = vunpack.c.l.b16 %v1021
      %v1310 = vunpack.c.l.b16 %v1022
      %v1311 = vunpack.c.l.b16 %v1023
      %v1312 = vunpack.c.l.b16 %v1024
      %v1313 = vunpack.c.l.b16 %v1025
      %v1314 = vunpack.c.l.b16 %v1026
      %v1315 = vunpack.c.l.b16 %v1027
      %v1316 = vunpack.c.l.b16 %v1028
      %v1317 = vunpack.c.l.b16 %v1029
      %v1318 = vunpack.c.l.b16 %v1030
      %v1319 = vpack.c.b16 %v1176, %v1175
      %v1320 = vpack.c.b16 %v1178, %v1177
      %v1321 = vpack.c.b16 %v1180, %v1179
      %v1322 = vpack.c.b16 %v1182, %v1181
      %v1323 = vpack.c.b16 %v1184, %v1183
      %v1324 = vpack.c.b16 %v1186, %v1185
      %v1325 = vpack.c.b16 %v1188, %v1187
      %v1326 = vpack.c.b16 %v1190, %v1189
      %v1327 = vpack.c.b16 %v1192, %v1191
      %v1328 = vpack.c.b16 %v1194, %v1193
      %v1329 = vpack.c.b16 %v1196, %v1195
      %v1330 = vpack.c.b16 %v1198, %v1197
      %v1331 = vpack.c.b16 %v1200, %v1199
      %v1332 = vpack.c.b16 %v1202, %v1201
      %v1333 = vpack.c.b16 %v1204, %v1203
      %v1334 = vpack.c.b16 %v1206, %v1205
      %v1335 = vpack.c.b16 %v1208, %v1207
      %v1336 = vpack.c.b16 %v1210, %v1209
      %v1337 = vpack.c.b16 %v1212, %v1211
      %v1338 = vpack.c.b16 %v1214, %v1213
      %v1339 = vpack.c.b16 %v1216, %v1215
      %v1340 = vpack.c.b16 %v1218, %v1217
      %v1341 = vpack.c.b16 %v1220, %v1219
      %v1342 = vpack.c.b16 %v1222, %v1221
      %v1343 = vpack.c.b16 %v1224, %v1223
      %v1344 = vpack.c.b16 %v1226, %v1225
      %v1345 = vpack.c.b16 %v1228, %v1227
      %v1346 = vpack.c.b16 %v1230, %v1229
      %v1347 = vpack.c.b16 %v1232, %v1231
      %v1348 = vpack.c.b16 %v1234, %v1233
      %v1349 = vpack.c.b16 %v1236, %v1235
      %v1350 = vpack.c.b16 %v1238, %v1237
      %v1351 = vpack.c.b16 %v1240, %v1239
      %v1352 = vpack.c.b16 %v1242, %v1241
      %v1353 = vpack.c.b16 %v1244, %v1243
      %v1354 = vpack.c.b16 %v1246, %v1245
      %v1355 = vpack.c.b16 %v1248, %v1247
      %v1356 = vpack.c.b16 %v1250, %v1249
      %v1357 = vpack.c.b16 %v1252, %v1251
      %v1358 = vpack.c.b16 %v1254, %v1253
      %v1359 = vpack.c.b16 %v1256, %v1255
      %v1360 = vpack.c.b16 %v1258, %v1257
      %v1361 = vpack.c.b16 %v1260, %v1259
      %v1362 = vpack.c.b16 %v1262, %v1261
      %v1363 = vpack.c.b16 %v1264, %v1263
      %v1364 = vpack.c.b16 %v1266, %v1265
      %v1365 = vpack.c.b16 %v1268, %v1267
      %v1366 = vpack.c.b16 %v1270, %v1269
      %v1367 = vpack.c.b16 %v1272, %v1271
      %v1368 = vpack.c.b16 %v1274, %v1273
      %v1369 = vpack.c.b16 %v1276, %v1275
      %v1370 = vpack.c.b16 %v1278, %v1277
      %v1371 = vpack.c.b16 %v1280, %v1279
      %v1372 = vpack.c.b16 %v1282, %v1281
      %v1373 = vpack.c.b16 %v1284, %v1283
      %v1374 = vpack.c.b16 %v1286, %v1285
      %v1375 = vpack.c.b16 %v1288, %v1287
      %v1376 = vpack.c.b16 %v1290, %v1289
      %v1377 = vpack.c.b16 %v1292, %v1291
      %v1378 = vpack.c.b16 %v1294, %v1293
      %v1379 = vpack.c.b16 %v1296, %v1295
      %v1380 = vpack.c.b16 %v1298, %v1297
      %v1381 = vpack.c.b16 %v1300, %v1299
      %v1382 = vpack.c.b16 %v1302, %v1301
      %v1383 = vpack.c.b16 %v1304, %v1303
      %v1384 = vpack.c.b16 %v1306, %v1305
      %v1385 = vpack.c.b16 %v1308, %v1307
      %v1386 = vpack.c.b16 %v1310, %v1309
      %v1387 = vpack.c.b16 %v1312, %v1311
      %v1388 = vpack.c.b16 %v1314, %v1313
      %v1389 = vpack.c.b16 %v1316, %v1315
      %v1390 = vpack.c.b16 %v1318, %v1317
      %1463 = vmatprep.subr.bf16.mxu0 0
      %1464 = vmatpush1.bf16.msra.mxu0 %v1326
      %1465 = vmatprep.subr.bf16.mxu0 0
      %1466 = vmatpush1.bf16.msra.mxu0 %v1325
      %1467 = vmatprep.subr.bf16.mxu0 0
      %1468 = vmatpush1.bf16.msra.mxu0 %v1324
      %1469 = vmatprep.subr.bf16.mxu0 0
      %1470 = vmatpush1.bf16.msra.mxu0 %v1323
      %1471 = vmatprep.subr.bf16.mxu0 0
      %1472 = vmatpush1.bf16.msra.mxu0 %v1322
      %1473 = vmatprep.subr.bf16.mxu0 0
      %1474 = vmatpush1.bf16.msra.mxu0 %v1321
      %1475 = vmatprep.subr.bf16.mxu0 0
      %1476 = vmatpush1.bf16.msra.mxu0 %v1320
      %1477 = vmatprep.subr.bf16.mxu0 0
      %1478 = vmatpush1.bf16.msra.mxu0 %v1319
      %1479 = vmatprep.subr.bf16.mxu0 0
      %1480 = vmatpush2.bf16.msra.mxu0 %v1334
      %1481 = vmatprep.subr.bf16.mxu0 0
      %1482 = vmatpush2.bf16.msra.mxu0 %v1333
      %1483 = vmatprep.subr.bf16.mxu0 0
      %1484 = vmatpush2.bf16.msra.mxu0 %v1332
      %1485 = vmatprep.subr.bf16.mxu0 0
      %1486 = vmatpush2.bf16.msra.mxu0 %v1331
      %1487 = vmatprep.subr.bf16.mxu0 0
      %1488 = vmatpush2.bf16.msra.mxu0 %v1330
      %1489 = vmatprep.subr.bf16.mxu0 0
      %1490 = vmatpush2.bf16.msra.mxu0 %v1329
      %1491 = vmatprep.subr.bf16.mxu0 0
      %1492 = vmatpush2.bf16.msra.mxu0 %v1328
      %1493 = vmatprep.subr.bf16.mxu0 0
      %1494 = vmatpush2.bf16.msra.mxu0 %v1327
      %1495 = vmatprep.mubr.bf16.mxu0 %v555
      %1496 = vmatmul.mubr.bf16.gmra.mxu0 %v507
      %v1497 = vpop.f32.mrf.mxu0
      %v1498 = vadd.f32 0.0, %v1497
      %v1499 = vpop.f32.mrf.mxu0
      %v1500 = vpop.f32.mrf.mxu0
      %v1501 = vadd.f32 0.0, %v1500
      %v1502 = vpop.f32.mrf.mxu0
      %1503 = vmatprep.mubr.bf16.mxu0 %v567
      %1504 = vmatmul.mubr.bf16.gmra.mxu0 %v509
      %v1505 = vpop.f32.mrf.mxu0
      %v1506 = vadd.f32 0.0, %v1505
      %v1507 = vpop.f32.mrf.mxu0
      %v1508 = vpop.f32.mrf.mxu0
      %v1509 = vadd.f32 0.0, %v1508
      %v1510 = vpop.f32.mrf.mxu0
      %1511 = vmatprep.mubr.bf16.mxu0 %v579
      %1512 = vmatmul.mubr.bf16.gmra.mxu0 %v511
      %v1513 = vpop.f32.mrf.mxu0
      %v1514 = vadd.f32 0.0, %v1513
      %v1515 = vpop.f32.mrf.mxu0
      %v1516 = vpop.f32.mrf.mxu0
      %v1517 = vadd.f32 0.0, %v1516
      %v1518 = vpop.f32.mrf.mxu0
      %1519 = vmatprep.mubr.bf16.mxu0 %v591
      %1520 = vmatmul.mubr.bf16.gmra.mxu0 %v513
      %v1521 = vpop.f32.mrf.mxu0
      %v1522 = vadd.f32 0.0, %v1521
      %v1523 = vpop.f32.mrf.mxu0
      %v1524 = vpop.f32.mrf.mxu0
      %v1525 = vadd.f32 0.0, %v1524
      %v1526 = vpop.f32.mrf.mxu0
      %1527 = vmatprep.mubr.bf16.mxu0 %v603
      %1528 = vmatmul.mubr.bf16.gmra.mxu0 %v515
      %v1529 = vpop.f32.mrf.mxu0
      %v1530 = vadd.f32 0.0, %v1529
      %v1531 = vpop.f32.mrf.mxu0
      %v1532 = vpop.f32.mrf.mxu0
      %v1533 = vadd.f32 0.0, %v1532
      %v1534 = vpop.f32.mrf.mxu0
      %1535 = vmatprep.mubr.bf16.mxu0 %v615
      %1536 = vmatmul.mubr.bf16.gmra.mxu0 %v517
      %v1537 = vpop.f32.mrf.mxu0
      %v1538 = vadd.f32 0.0, %v1537
      %v1539 = vpop.f32.mrf.mxu0
      %v1540 = vpop.f32.mrf.mxu0
      %v1541 = vadd.f32 0.0, %v1540
      %v1542 = vpop.f32.mrf.mxu0
      %1543 = vmatprep.mubr.bf16.mxu0 %v627
      %1544 = vmatmul.mubr.bf16.gmra.mxu0 %v519
      %v1545 = vpop.f32.mrf.mxu0
      %v1546 = vadd.f32 0.0, %v1545
      %v1547 = vpop.f32.mrf.mxu0
      %v1548 = vpop.f32.mrf.mxu0
      %v1549 = vadd.f32 0.0, %v1548
      %v1550 = vpop.f32.mrf.mxu0
      %1551 = vmatprep.mubr.bf16.mxu0 %v639
      %1552 = vmatmul.mubr.bf16.gmra.mxu0 %v521
      %v1553 = vpop.f32.mrf.mxu0
      %v1554 = vadd.f32 0.0, %v1553
      %v1555 = vpop.f32.mrf.mxu0
      %v1556 = vpop.f32.mrf.mxu0
      %v1557 = vadd.f32 0.0, %v1556
      %v1558 = vpop.f32.mrf.mxu0
      %1559 = vmatprep.mubr.bf16.mxu0 %v651
      %1560 = vmatmul.mubr.bf16.gmra.mxu0 %v523
      %v1561 = vpop.f32.mrf.mxu0
      %v1562 = vadd.f32 0.0, %v1561
      %v1563 = vpop.f32.mrf.mxu0
      %v1564 = vpop.f32.mrf.mxu0
      %v1565 = vadd.f32 0.0, %v1564
      %v1566 = vpop.f32.mrf.mxu0
      %1567 = vmatprep.mubr.bf16.mxu0 %v663
      %1568 = vmatmul.mubr.bf16.gmra.mxu0 %v525
      %v1569 = vpop.f32.mrf.mxu0
      %v1570 = vadd.f32 0.0, %v1569
      %v1571 = vpop.f32.mrf.mxu0
      %v1572 = vpop.f32.mrf.mxu0
      %v1573 = vadd.f32 0.0, %v1572
      %v1574 = vpop.f32.mrf.mxu0
      %1575 = vmatprep.mubr.bf16.mxu0 %v675
      %1576 = vmatmul.mubr.bf16.gmra.mxu0 %v527
      %v1577 = vpop.f32.mrf.mxu0
      %v1578 = vadd.f32 0.0, %v1577
      %v1579 = vpop.f32.mrf.mxu0
      %v1580 = vpop.f32.mrf.mxu0
      %v1581 = vadd.f32 0.0, %v1580
      %v1582 = vpop.f32.mrf.mxu0
      %1583 = vmatprep.mubr.bf16.mxu0 %v687
      %1584 = vmatmul.mubr.bf16.gmra.mxu0 %v529
      %v1585 = vpop.f32.mrf.mxu0
      %v1586 = vadd.f32 0.0, %v1585
      %v1587 = vpop.f32.mrf.mxu0
      %v1588 = vpop.f32.mrf.mxu0
      %v1589 = vadd.f32 0.0, %v1588
      %v1590 = vpop.f32.mrf.mxu0
      %1591 = vmatprep.mubr.bf16.mxu0 %v699
      %1592 = vmatmul.mubr.bf16.gmra.mxu0 %v531
      %v1593 = vpop.f32.mrf.mxu0
      %v1594 = vadd.f32 0.0, %v1593
      %v1595 = vpop.f32.mrf.mxu0
      %v1596 = vpop.f32.mrf.mxu0
      %v1597 = vadd.f32 0.0, %v1596
      %v1598 = vpop.f32.mrf.mxu0
      %1599 = vmatprep.mubr.bf16.mxu0 %v711
      %1600 = vmatmul.mubr.bf16.gmra.mxu0 %v533
      %v1601 = vpop.f32.mrf.mxu0
      %v1602 = vadd.f32 0.0, %v1601
      %v1603 = vpop.f32.mrf.mxu0
      %v1604 = vpop.f32.mrf.mxu0
      %v1605 = vadd.f32 0.0, %v1604
      %v1606 = vpop.f32.mrf.mxu0
      %1607 = vmatprep.mubr.bf16.mxu0 %v723
      %1608 = vmatmul.mubr.bf16.gmra.mxu0 %v535
      %v1609 = vpop.f32.mrf.mxu0
      %v1610 = vadd.f32 0.0, %v1609
      %v1611 = vpop.f32.mrf.mxu0
      %v1612 = vpop.f32.mrf.mxu0
      %v1613 = vadd.f32 0.0, %v1612
      %v1614 = vpop.f32.mrf.mxu0
      %1615 = vmatprep.mubr.bf16.mxu0 %v735
      %1616 = vmatmul.mubr.bf16.gmra.mxu0 %v537
      %v1617 = vpop.f32.mrf.mxu0
      %v1618 = vadd.f32 0.0, %v1617
      %v1619 = vpop.f32.mrf.mxu0
      %v1620 = vpop.f32.mrf.mxu0
      %v1621 = vadd.f32 0.0, %v1620
      %v1622 = vpop.f32.mrf.mxu0
      %1623 = vdwg.mxu0
      %1624 = vmatprep.subr.bf16.mxu0 0
      %1625 = vmatpush1.bf16.msra.mxu0 %v1342
      %1626 = vmatprep.subr.bf16.mxu0 0
      %1627 = vmatpush1.bf16.msra.mxu0 %v1341
      %1628 = vmatprep.subr.bf16.mxu0 0
      %1629 = vmatpush1.bf16.msra.mxu0 %v1340
      %1630 = vmatprep.subr.bf16.mxu0 0
      %1631 = vmatpush1.bf16.msra.mxu0 %v1339
      %1632 = vmatprep.subr.bf16.mxu0 0
      %1633 = vmatpush1.bf16.msra.mxu0 %v1338
      %1634 = vmatprep.subr.bf16.mxu0 0
      %1635 = vmatpush1.bf16.msra.mxu0 %v1337
      %1636 = vmatprep.subr.bf16.mxu0 0
      %1637 = vmatpush1.bf16.msra.mxu0 %v1336
      %1638 = vmatprep.subr.bf16.mxu0 0
      %1639 = vmatpush1.bf16.msra.mxu0 %v1335
      %1640 = vmatprep.subr.bf16.mxu0 0
      %1641 = vmatpush2.bf16.msra.mxu0 %v1350
      %1642 = vmatprep.subr.bf16.mxu0 0
      %1643 = vmatpush2.bf16.msra.mxu0 %v1349
      %1644 = vmatprep.subr.bf16.mxu0 0
      %1645 = vmatpush2.bf16.msra.mxu0 %v1348
      %1646 = vmatprep.subr.bf16.mxu0 0
      %1647 = vmatpush2.bf16.msra.mxu0 %v1347
      %1648 = vmatprep.subr.bf16.mxu0 0
      %1649 = vmatpush2.bf16.msra.mxu0 %v1346
      %1650 = vmatprep.subr.bf16.mxu0 0
      %1651 = vmatpush2.bf16.msra.mxu0 %v1345
      %1652 = vmatprep.subr.bf16.mxu0 0
      %1653 = vmatpush2.bf16.msra.mxu0 %v1344
      %1654 = vmatprep.subr.bf16.mxu0 0
      %1655 = vmatpush2.bf16.msra.mxu0 %v1343
      %1656 = vmatprep.mubr.bf16.mxu0 %v509
      %1657 = vmatmul.mubr.bf16.gmra.mxu0 %v787
      %v1658 = vpop.f32.mrf.mxu0
      %v1659 = vadd.f32 %v1498, %v1658
      %v1660 = vpop.f32.mrf.mxu0
      %v1661 = vpop.f32.mrf.mxu0
      %v1662 = vadd.f32 %v1501, %v1661
      %v1663 = vpop.f32.mrf.mxu0
      %1664 = vmatprep.mubr.bf16.mxu0 %v511
      %1665 = vmatmul.mubr.bf16.gmra.mxu0 %v790
      %v1666 = vpop.f32.mrf.mxu0
      %v1667 = vadd.f32 %v1506, %v1666
      %v1668 = vpop.f32.mrf.mxu0
      %v1669 = vpop.f32.mrf.mxu0
      %v1670 = vadd.f32 %v1509, %v1669
      %v1671 = vpop.f32.mrf.mxu0
      %1672 = vmatprep.mubr.bf16.mxu0 %v513
      %1673 = vmatmul.mubr.bf16.gmra.mxu0 %v793
      %v1674 = vpop.f32.mrf.mxu0
      %v1675 = vadd.f32 %v1514, %v1674
      %v1676 = vpop.f32.mrf.mxu0
      %v1677 = vpop.f32.mrf.mxu0
      %v1678 = vadd.f32 %v1517, %v1677
      %v1679 = vpop.f32.mrf.mxu0
      %1680 = vmatprep.mubr.bf16.mxu0 %v515
      %1681 = vmatmul.mubr.bf16.gmra.mxu0 %v796
      %v1682 = vpop.f32.mrf.mxu0
      %v1683 = vadd.f32 %v1522, %v1682
      %v1684 = vpop.f32.mrf.mxu0
      %v1685 = vpop.f32.mrf.mxu0
      %v1686 = vadd.f32 %v1525, %v1685
      %v1687 = vpop.f32.mrf.mxu0
      %1688 = vmatprep.mubr.bf16.mxu0 %v517
      %1689 = vmatmul.mubr.bf16.gmra.mxu0 %v799
      %v1690 = vpop.f32.mrf.mxu0
      %v1691 = vadd.f32 %v1530, %v1690
      %v1692 = vpop.f32.mrf.mxu0
      %v1693 = vpop.f32.mrf.mxu0
      %v1694 = vadd.f32 %v1533, %v1693
      %v1695 = vpop.f32.mrf.mxu0
      %1696 = vmatprep.mubr.bf16.mxu0 %v519
      %1697 = vmatmul.mubr.bf16.gmra.mxu0 %v802
      %v1698 = vpop.f32.mrf.mxu0
      %v1699 = vadd.f32 %v1538, %v1698
      %v1700 = vpop.f32.mrf.mxu0
      %v1701 = vpop.f32.mrf.mxu0
      %v1702 = vadd.f32 %v1541, %v1701
      %v1703 = vpop.f32.mrf.mxu0
      %1704 = vmatprep.mubr.bf16.mxu0 %v521
      %1705 = vmatmul.mubr.bf16.gmra.mxu0 %v805
      %v1706 = vpop.f32.mrf.mxu0
      %v1707 = vadd.f32 %v1546, %v1706
      %v1708 = vpop.f32.mrf.mxu0
      %v1709 = vpop.f32.mrf.mxu0
      %v1710 = vadd.f32 %v1549, %v1709
      %v1711 = vpop.f32.mrf.mxu0
      %1712 = vmatprep.mubr.bf16.mxu0 %v523
      %1713 = vmatmul.mubr.bf16.gmra.mxu0 %v808
      %v1714 = vpop.f32.mrf.mxu0
      %v1715 = vadd.f32 %v1554, %v1714
      %v1716 = vpop.f32.mrf.mxu0
      %v1717 = vpop.f32.mrf.mxu0
      %v1718 = vadd.f32 %v1557, %v1717
      %v1719 = vpop.f32.mrf.mxu0
      %1720 = vmatprep.mubr.bf16.mxu0 %v525
      %1721 = vmatmul.mubr.bf16.gmra.mxu0 %v811
      %v1722 = vpop.f32.mrf.mxu0
      %v1723 = vadd.f32 %v1562, %v1722
      %v1724 = vpop.f32.mrf.mxu0
      %v1725 = vpop.f32.mrf.mxu0
      %v1726 = vadd.f32 %v1565, %v1725
      %v1727 = vpop.f32.mrf.mxu0
      %1728 = vmatprep.mubr.bf16.mxu0 %v527
      %1729 = vmatmul.mubr.bf16.gmra.mxu0 %v814
      %v1730 = vpop.f32.mrf.mxu0
      %v1731 = vadd.f32 %v1570, %v1730
      %v1732 = vpop.f32.mrf.mxu0
      %v1733 = vpop.f32.mrf.mxu0
      %v1734 = vadd.f32 %v1573, %v1733
      %v1735 = vpop.f32.mrf.mxu0
      %1736 = vmatprep.mubr.bf16.mxu0 %v529
      %1737 = vmatmul.mubr.bf16.gmra.mxu0 %v817
      %v1738 = vpop.f32.mrf.mxu0
      %v1739 = vadd.f32 %v1578, %v1738
      %v1740 = vpop.f32.mrf.mxu0
      %v1741 = vpop.f32.mrf.mxu0
      %v1742 = vadd.f32 %v1581, %v1741
      %v1743 = vpop.f32.mrf.mxu0
      %1744 = vmatprep.mubr.bf16.mxu0 %v531
      %1745 = vmatmul.mubr.bf16.gmra.mxu0 %v820
      %v1746 = vpop.f32.mrf.mxu0
      %v1747 = vadd.f32 %v1586, %v1746
      %v1748 = vpop.f32.mrf.mxu0
      %v1749 = vpop.f32.mrf.mxu0
      %v1750 = vadd.f32 %v1589, %v1749
      %v1751 = vpop.f32.mrf.mxu0
      %1752 = vmatprep.mubr.bf16.mxu0 %v533
      %1753 = vmatmul.mubr.bf16.gmra.mxu0 %v823
      %v1754 = vpop.f32.mrf.mxu0
      %v1755 = vadd.f32 %v1594, %v1754
      %v1756 = vpop.f32.mrf.mxu0
      %v1757 = vpop.f32.mrf.mxu0
      %v1758 = vadd.f32 %v1597, %v1757
      %v1759 = vpop.f32.mrf.mxu0
      %1760 = vmatprep.mubr.bf16.mxu0 %v535
      %1761 = vmatmul.mubr.bf16.gmra.mxu0 %v826
      %v1762 = vpop.f32.mrf.mxu0
      %v1763 = vadd.f32 %v1602, %v1762
      %v1764 = vpop.f32.mrf.mxu0
      %v1765 = vpop.f32.mrf.mxu0
      %v1766 = vadd.f32 %v1605, %v1765
      %v1767 = vpop.f32.mrf.mxu0
      %1768 = vmatprep.mubr.bf16.mxu0 %v537
      %1769 = vmatmul.mubr.bf16.gmra.mxu0 %v829
      %v1770 = vpop.f32.mrf.mxu0
      %v1771 = vadd.f32 %v1610, %v1770
      %v1772 = vpop.f32.mrf.mxu0
      %v1773 = vpop.f32.mrf.mxu0
      %v1774 = vadd.f32 %v1613, %v1773
      %v1775 = vpop.f32.mrf.mxu0
      %1776 = vmatprep.mubr.bf16.mxu0 %v539
      %1777 = vmatmul.mubr.bf16.gmra.mxu0 %v832
      %v1778 = vpop.f32.mrf.mxu0
      %v1779 = vadd.f32 %v1618, %v1778
      %v1780 = vpop.f32.mrf.mxu0
      %v1781 = vpop.f32.mrf.mxu0
      %v1782 = vadd.f32 %v1621, %v1781
      %v1783 = vpop.f32.mrf.mxu0
      %1784 = vdwg.mxu0
      %1785 = vmatprep.subr.bf16.mxu0 0
      %1786 = vmatpush1.bf16.msra.mxu0 %v1358
      %1787 = vmatprep.subr.bf16.mxu0 0
      %1788 = vmatpush1.bf16.msra.mxu0 %v1357
      %1789 = vmatprep.subr.bf16.mxu0 0
      %1790 = vmatpush1.bf16.msra.mxu0 %v1356
      %1791 = vmatprep.subr.bf16.mxu0 0
      %1792 = vmatpush1.bf16.msra.mxu0 %v1355
      %1793 = vmatprep.subr.bf16.mxu0 0
      %1794 = vmatpush1.bf16.msra.mxu0 %v1354
      %1795 = vmatprep.subr.bf16.mxu0 0
      %1796 = vmatpush1.bf16.msra.mxu0 %v1353
      %1797 = vmatprep.subr.bf16.mxu0 0
      %1798 = vmatpush1.bf16.msra.mxu0 %v1352
      %1799 = vmatprep.subr.bf16.mxu0 0
      %1800 = vmatpush1.bf16.msra.mxu0 %v1351
      %1801 = vmatprep.subr.bf16.mxu0 0
      %1802 = vmatpush2.bf16.msra.mxu0 %v1366
      %1803 = vmatprep.subr.bf16.mxu0 0
      %1804 = vmatpush2.bf16.msra.mxu0 %v1365
      %1805 = vmatprep.subr.bf16.mxu0 0
      %1806 = vmatpush2.bf16.msra.mxu0 %v1364
      %1807 = vmatprep.subr.bf16.mxu0 0
      %1808 = vmatpush2.bf16.msra.mxu0 %v1363
      %1809 = vmatprep.subr.bf16.mxu0 0
      %1810 = vmatpush2.bf16.msra.mxu0 %v1362
      %1811 = vmatprep.subr.bf16.mxu0 0
      %1812 = vmatpush2.bf16.msra.mxu0 %v1361
      %1813 = vmatprep.subr.bf16.mxu0 0
      %1814 = vmatpush2.bf16.msra.mxu0 %v1360
      %1815 = vmatprep.subr.bf16.mxu0 0
      %1816 = vmatpush2.bf16.msra.mxu0 %v1359
      %1817 = vmatprep.mubr.bf16.mxu0 %v790
      %1818 = vmatmul.mubr.bf16.gmra.mxu0 %v567
      %v1819 = vpop.f32.mrf.mxu0
      %v1820 = vadd.f32 %v1659, %v1819
      %v1821 = vpop.f32.mrf.mxu0
      %v1822 = vpop.f32.mrf.mxu0
      %v1823 = vadd.f32 %v1662, %v1822
      %v1824 = vpop.f32.mrf.mxu0
      %1825 = vmatprep.mubr.bf16.mxu0 %v793
      %1826 = vmatmul.mubr.bf16.gmra.mxu0 %v579
      %v1827 = vpop.f32.mrf.mxu0
      %v1828 = vadd.f32 %v1667, %v1827
      %v1829 = vpop.f32.mrf.mxu0
      %v1830 = vpop.f32.mrf.mxu0
      %v1831 = vadd.f32 %v1670, %v1830
      %v1832 = vpop.f32.mrf.mxu0
      %1833 = vmatprep.mubr.bf16.mxu0 %v796
      %1834 = vmatmul.mubr.bf16.gmra.mxu0 %v591
      %v1835 = vpop.f32.mrf.mxu0
      %v1836 = vadd.f32 %v1675, %v1835
      %v1837 = vpop.f32.mrf.mxu0
      %v1838 = vpop.f32.mrf.mxu0
      %v1839 = vadd.f32 %v1678, %v1838
      %v1840 = vpop.f32.mrf.mxu0
      %1841 = vmatprep.mubr.bf16.mxu0 %v799
      %1842 = vmatmul.mubr.bf16.gmra.mxu0 %v603
      %v1843 = vpop.f32.mrf.mxu0
      %v1844 = vadd.f32 %v1683, %v1843
      %v1845 = vpop.f32.mrf.mxu0
      %v1846 = vpop.f32.mrf.mxu0
      %v1847 = vadd.f32 %v1686, %v1846
      %v1848 = vpop.f32.mrf.mxu0
      %1849 = vmatprep.mubr.bf16.mxu0 %v802
      %1850 = vmatmul.mubr.bf16.gmra.mxu0 %v615
      %v1851 = vpop.f32.mrf.mxu0
      %v1852 = vadd.f32 %v1691, %v1851
      %v1853 = vpop.f32.mrf.mxu0
      %v1854 = vpop.f32.mrf.mxu0
      %v1855 = vadd.f32 %v1694, %v1854
      %v1856 = vpop.f32.mrf.mxu0
      %1857 = vmatprep.mubr.bf16.mxu0 %v805
      %1858 = vmatmul.mubr.bf16.gmra.mxu0 %v627
      %v1859 = vpop.f32.mrf.mxu0
      %v1860 = vadd.f32 %v1699, %v1859
      %v1861 = vpop.f32.mrf.mxu0
      %v1862 = vpop.f32.mrf.mxu0
      %v1863 = vadd.f32 %v1702, %v1862
      %v1864 = vpop.f32.mrf.mxu0
      %1865 = vmatprep.mubr.bf16.mxu0 %v808
      %1866 = vmatmul.mubr.bf16.gmra.mxu0 %v639
      %v1867 = vpop.f32.mrf.mxu0
      %v1868 = vadd.f32 %v1707, %v1867
      %v1869 = vpop.f32.mrf.mxu0
      %v1870 = vpop.f32.mrf.mxu0
      %v1871 = vadd.f32 %v1710, %v1870
      %v1872 = vpop.f32.mrf.mxu0
      %1873 = vmatprep.mubr.bf16.mxu0 %v811
      %1874 = vmatmul.mubr.bf16.gmra.mxu0 %v651
      %v1875 = vpop.f32.mrf.mxu0
      %v1876 = vadd.f32 %v1715, %v1875
      %v1877 = vpop.f32.mrf.mxu0
      %v1878 = vpop.f32.mrf.mxu0
      %v1879 = vadd.f32 %v1718, %v1878
      %v1880 = vpop.f32.mrf.mxu0
      %1881 = vmatprep.mubr.bf16.mxu0 %v814
      %1882 = vmatmul.mubr.bf16.gmra.mxu0 %v663
      %v1883 = vpop.f32.mrf.mxu0
      %v1884 = vadd.f32 %v1723, %v1883
      %v1885 = vpop.f32.mrf.mxu0
      %v1886 = vpop.f32.mrf.mxu0
      %v1887 = vadd.f32 %v1726, %v1886
      %v1888 = vpop.f32.mrf.mxu0
      %1889 = vmatprep.mubr.bf16.mxu0 %v817
      %1890 = vmatmul.mubr.bf16.gmra.mxu0 %v675
      %v1891 = vpop.f32.mrf.mxu0
      %v1892 = vadd.f32 %v1731, %v1891
      %v1893 = vpop.f32.mrf.mxu0
      %v1894 = vpop.f32.mrf.mxu0
      %v1895 = vadd.f32 %v1734, %v1894
      %v1896 = vpop.f32.mrf.mxu0
      %1897 = vmatprep.mubr.bf16.mxu0 %v820
      %1898 = vmatmul.mubr.bf16.gmra.mxu0 %v687
      %v1899 = vpop.f32.mrf.mxu0
      %v1900 = vadd.f32 %v1739, %v1899
      %v1901 = vpop.f32.mrf.mxu0
      %v1902 = vpop.f32.mrf.mxu0
      %v1903 = vadd.f32 %v1742, %v1902
      %v1904 = vpop.f32.mrf.mxu0
      %1905 = vmatprep.mubr.bf16.mxu0 %v823
      %1906 = vmatmul.mubr.bf16.gmra.mxu0 %v699
      %v1907 = vpop.f32.mrf.mxu0
      %v1908 = vadd.f32 %v1747, %v1907
      %v1909 = vpop.f32.mrf.mxu0
      %v1910 = vpop.f32.mrf.mxu0
      %v1911 = vadd.f32 %v1750, %v1910
      %v1912 = vpop.f32.mrf.mxu0
      %1913 = vmatprep.mubr.bf16.mxu0 %v826
      %1914 = vmatmul.mubr.bf16.gmra.mxu0 %v711
      %v1915 = vpop.f32.mrf.mxu0
      %v1916 = vadd.f32 %v1755, %v1915
      %v1917 = vpop.f32.mrf.mxu0
      %v1918 = vpop.f32.mrf.mxu0
      %v1919 = vadd.f32 %v1758, %v1918
      %v1920 = vpop.f32.mrf.mxu0
      %1921 = vmatprep.mubr.bf16.mxu0 %v829
      %1922 = vmatmul.mubr.bf16.gmra.mxu0 %v723
      %v1923 = vpop.f32.mrf.mxu0
      %v1924 = vadd.f32 %v1763, %v1923
      %v1925 = vpop.f32.mrf.mxu0
      %v1926 = vpop.f32.mrf.mxu0
      %v1927 = vadd.f32 %v1766, %v1926
      %v1928 = vpop.f32.mrf.mxu0
      %1929 = vmatprep.mubr.bf16.mxu0 %v832
      %1930 = vmatmul.mubr.bf16.gmra.mxu0 %v735
      %v1931 = vpop.f32.mrf.mxu0
      %v1932 = vadd.f32 %v1771, %v1931
      %v1933 = vpop.f32.mrf.mxu0
      %v1934 = vpop.f32.mrf.mxu0
      %v1935 = vadd.f32 %v1774, %v1934
      %v1936 = vpop.f32.mrf.mxu0
      %1937 = vmatprep.mubr.bf16.mxu0 %v866
      %1938 = vmatmul.mubr.bf16.gmra.mxu0 %v860
      %v1939 = vpop.f32.mrf.mxu0
      %v1940 = vadd.f32 %v1779, %v1939
      %v1941 = vpop.f32.mrf.mxu0
      %v1942 = vpop.f32.mrf.mxu0
      %v1943 = vadd.f32 %v1782, %v1942
      %v1944 = vpop.f32.mrf.mxu0
      %1945 = vdwg.mxu0
      %1946 = vmatprep.subr.bf16.mxu0 0
      %1947 = vmatpush1.bf16.msra.mxu0 %v1374
      %1948 = vmatprep.subr.bf16.mxu0 0
      %1949 = vmatpush1.bf16.msra.mxu0 %v1373
      %1950 = vmatprep.subr.bf16.mxu0 0
      %1951 = vmatpush1.bf16.msra.mxu0 %v1372
      %1952 = vmatprep.subr.bf16.mxu0 0
      %1953 = vmatpush1.bf16.msra.mxu0 %v1371
      %1954 = vmatprep.subr.bf16.mxu0 0
      %1955 = vmatpush1.bf16.msra.mxu0 %v1370
      %1956 = vmatprep.subr.bf16.mxu0 0
      %1957 = vmatpush1.bf16.msra.mxu0 %v1369
      %1958 = vmatprep.subr.bf16.mxu0 0
      %1959 = vmatpush1.bf16.msra.mxu0 %v1368
      %1960 = vmatprep.subr.bf16.mxu0 0
      %1961 = vmatpush1.bf16.msra.mxu0 %v1367
      %1962 = vmatprep.subr.bf16.mxu0 0
      %1963 = vmatpush2.bf16.msra.mxu0 %v1382
      %1964 = vmatprep.subr.bf16.mxu0 0
      %1965 = vmatpush2.bf16.msra.mxu0 %v1381
      %1966 = vmatprep.subr.bf16.mxu0 0
      %1967 = vmatpush2.bf16.msra.mxu0 %v1380
      %1968 = vmatprep.subr.bf16.mxu0 0
      %1969 = vmatpush2.bf16.msra.mxu0 %v1379
      %1970 = vmatprep.subr.bf16.mxu0 0
      %1971 = vmatpush2.bf16.msra.mxu0 %v1378
      %1972 = vmatprep.subr.bf16.mxu0 0
      %1973 = vmatpush2.bf16.msra.mxu0 %v1377
      %1974 = vmatprep.subr.bf16.mxu0 0
      %1975 = vmatpush2.bf16.msra.mxu0 %v1376
      %1976 = vmatprep.subr.bf16.mxu0 0
      %1977 = vmatpush2.bf16.msra.mxu0 %v1375
      %1978 = vmatprep.mubr.bf16.mxu0 %v579
      %1979 = vmatmul.mubr.bf16.gmra.mxu0 %v511
      %v1980 = vpop.f32.mrf.mxu0
      %v1981 = vadd.f32 %v1820, %v1980
      %v1982 = vpop.f32.mrf.mxu0
      %v1983 = vpop.f32.mrf.mxu0
      %v1984 = vadd.f32 %v1823, %v1983
      %v1985 = vpop.f32.mrf.mxu0
      %1986 = vmatprep.mubr.bf16.mxu0 %v591
      %1987 = vmatmul.mubr.bf16.gmra.mxu0 %v513
      %v1988 = vpop.f32.mrf.mxu0
      %v1989 = vadd.f32 %v1828, %v1988
      %v1990 = vpop.f32.mrf.mxu0
      %v1991 = vpop.f32.mrf.mxu0
      %v1992 = vadd.f32 %v1831, %v1991
      %v1993 = vpop.f32.mrf.mxu0
      %1994 = vmatprep.mubr.bf16.mxu0 %v603
      %1995 = vmatmul.mubr.bf16.gmra.mxu0 %v515
      %v1996 = vpop.f32.mrf.mxu0
      %v1997 = vadd.f32 %v1836, %v1996
      %v1998 = vpop.f32.mrf.mxu0
      %v1999 = vpop.f32.mrf.mxu0
      %v2000 = vadd.f32 %v1839, %v1999
      %v2001 = vpop.f32.mrf.mxu0
      %2002 = vmatprep.mubr.bf16.mxu0 %v615
      %2003 = vmatmul.mubr.bf16.gmra.mxu0 %v517
      %v2004 = vpop.f32.mrf.mxu0
      %v2005 = vadd.f32 %v1844, %v2004
      %v2006 = vpop.f32.mrf.mxu0
      %v2007 = vpop.f32.mrf.mxu0
      %v2008 = vadd.f32 %v1847, %v2007
      %v2009 = vpop.f32.mrf.mxu0
      %2010 = vmatprep.mubr.bf16.mxu0 %v627
      %2011 = vmatmul.mubr.bf16.gmra.mxu0 %v519
      %v2012 = vpop.f32.mrf.mxu0
      %v2013 = vadd.f32 %v1852, %v2012
      %v2014 = vpop.f32.mrf.mxu0
      %v2015 = vpop.f32.mrf.mxu0
      %v2016 = vadd.f32 %v1855, %v2015
      %v2017 = vpop.f32.mrf.mxu0
      %2018 = vmatprep.mubr.bf16.mxu0 %v639
      %2019 = vmatmul.mubr.bf16.gmra.mxu0 %v521
      %v2020 = vpop.f32.mrf.mxu0
      %v2021 = vadd.f32 %v1860, %v2020
      %v2022 = vpop.f32.mrf.mxu0
      %v2023 = vpop.f32.mrf.mxu0
      %v2024 = vadd.f32 %v1863, %v2023
      %v2025 = vpop.f32.mrf.mxu0
      %2026 = vmatprep.mubr.bf16.mxu0 %v651
      %2027 = vmatmul.mubr.bf16.gmra.mxu0 %v523
      %v2028 = vpop.f32.mrf.mxu0
      %v2029 = vadd.f32 %v1868, %v2028
      %v2030 = vpop.f32.mrf.mxu0
      %v2031 = vpop.f32.mrf.mxu0
      %v2032 = vadd.f32 %v1871, %v2031
      %v2033 = vpop.f32.mrf.mxu0
      %2034 = vmatprep.mubr.bf16.mxu0 %v663
      %2035 = vmatmul.mubr.bf16.gmra.mxu0 %v525
      %v2036 = vpop.f32.mrf.mxu0
      %v2037 = vadd.f32 %v1876, %v2036
      %v2038 = vpop.f32.mrf.mxu0
      %v2039 = vpop.f32.mrf.mxu0
      %v2040 = vadd.f32 %v1879, %v2039
      %v2041 = vpop.f32.mrf.mxu0
      %2042 = vmatprep.mubr.bf16.mxu0 %v675
      %2043 = vmatmul.mubr.bf16.gmra.mxu0 %v527
      %v2044 = vpop.f32.mrf.mxu0
      %v2045 = vadd.f32 %v1884, %v2044
      %v2046 = vpop.f32.mrf.mxu0
      %v2047 = vpop.f32.mrf.mxu0
      %v2048 = vadd.f32 %v1887, %v2047
      %v2049 = vpop.f32.mrf.mxu0
      %2050 = vmatprep.mubr.bf16.mxu0 %v687
      %2051 = vmatmul.mubr.bf16.gmra.mxu0 %v529
      %v2052 = vpop.f32.mrf.mxu0
      %v2053 = vadd.f32 %v1892, %v2052
      %v2054 = vpop.f32.mrf.mxu0
      %v2055 = vpop.f32.mrf.mxu0
      %v2056 = vadd.f32 %v1895, %v2055
      %v2057 = vpop.f32.mrf.mxu0
      %2058 = vmatprep.mubr.bf16.mxu0 %v699
      %2059 = vmatmul.mubr.bf16.gmra.mxu0 %v531
      %v2060 = vpop.f32.mrf.mxu0
      %v2061 = vadd.f32 %v1900, %v2060
      %v2062 = vpop.f32.mrf.mxu0
      %v2063 = vpop.f32.mrf.mxu0
      %v2064 = vadd.f32 %v1903, %v2063
      %v2065 = vpop.f32.mrf.mxu0
      %2066 = vmatprep.mubr.bf16.mxu0 %v711
      %2067 = vmatmul.mubr.bf16.gmra.mxu0 %v533
      %v2068 = vpop.f32.mrf.mxu0
      %v2069 = vadd.f32 %v1908, %v2068
      %v2070 = vpop.f32.mrf.mxu0
      %v2071 = vpop.f32.mrf.mxu0
      %v2072 = vadd.f32 %v1911, %v2071
      %v2073 = vpop.f32.mrf.mxu0
      %2074 = vmatprep.mubr.bf16.mxu0 %v723
      %2075 = vmatmul.mubr.bf16.gmra.mxu0 %v535
      %v2076 = vpop.f32.mrf.mxu0
      %v2077 = vadd.f32 %v1916, %v2076
      %v2078 = vpop.f32.mrf.mxu0
      %v2079 = vpop.f32.mrf.mxu0
      %v2080 = vadd.f32 %v1919, %v2079
      %v2081 = vpop.f32.mrf.mxu0
      %2082 = vmatprep.mubr.bf16.mxu0 %v735
      %2083 = vmatmul.mubr.bf16.gmra.mxu0 %v537
      %v2084 = vpop.f32.mrf.mxu0
      %v2085 = vadd.f32 %v1924, %v2084
      %v2086 = vpop.f32.mrf.mxu0
      %v2087 = vpop.f32.mrf.mxu0
      %v2088 = vadd.f32 %v1927, %v2087
      %v2089 = vpop.f32.mrf.mxu0
      %2090 = vmatprep.mubr.bf16.mxu0 %v860
      %2091 = vmatmul.mubr.bf16.gmra.mxu0 %v539
      %v2092 = vpop.f32.mrf.mxu0
      %v2093 = vadd.f32 %v1932, %v2092
      %v2094 = vpop.f32.mrf.mxu0
      %v2095 = vpop.f32.mrf.mxu0
      %v2096 = vadd.f32 %v1935, %v2095
      %v2097 = vpop.f32.mrf.mxu0
      %2098 = vmatprep.mubr.bf16.mxu0 %v879
      %2099 = vmatmul.mubr.bf16.gmra.mxu0 %v541
      %v2100 = vpop.f32.mrf.mxu0
      %v2101 = vadd.f32 %v1940, %v2100
      %v2102 = vpop.f32.mrf.mxu0
      %v2103 = vpop.f32.mrf.mxu0
      %v2104 = vadd.f32 %v1943, %v2103
      %v2105 = vpop.f32.mrf.mxu0
      %2106 = vdwg.mxu0
      %2107 = vmatprep.subr.bf16.mxu0 0
      %2108 = vmatpush1.bf16.msra.mxu0 %v1390
      %2109 = vmatprep.subr.bf16.mxu0 0
      %2110 = vmatpush1.bf16.msra.mxu0 %v1389
      %2111 = vmatprep.subr.bf16.mxu0 0
      %2112 = vmatpush1.bf16.msra.mxu0 %v1388
      %2113 = vmatprep.subr.bf16.mxu0 0
      %2114 = vmatpush1.bf16.msra.mxu0 %v1387
      %2115 = vmatprep.subr.bf16.mxu0 0
      %2116 = vmatpush1.bf16.msra.mxu0 %v1386
      %2117 = vmatprep.subr.bf16.mxu0 0
      %2118 = vmatpush1.bf16.msra.mxu0 %v1385
      %2119 = vmatprep.subr.bf16.mxu0 0
      %2120 = vmatpush1.bf16.msra.mxu0 %v1384
      %2121 = vmatprep.subr.bf16.mxu0 0
      %2122 = vmatpush1.bf16.msra.mxu0 %v1383
      %2123 = vmatprep.subr.bf16.mxu0 0
      %2124 = vmatpush2.bf16.msra.mxu0 0
      %2125 = vmatprep.subr.bf16.mxu0 0
      %2126 = vmatpush2.bf16.msra.mxu0 0
      %2127 = vmatprep.subr.bf16.mxu0 0
      %2128 = vmatpush2.bf16.msra.mxu0 0
      %2129 = vmatprep.subr.bf16.mxu0 0
      %2130 = vmatpush2.bf16.msra.mxu0 0
      %2131 = vmatprep.subr.bf16.mxu0 0
      %2132 = vmatpush2.bf16.msra.mxu0 0
      %2133 = vmatprep.subr.bf16.mxu0 0
      %2134 = vmatpush2.bf16.msra.mxu0 0
      %2135 = vmatprep.subr.bf16.mxu0 0
      %2136 = vmatpush2.bf16.msra.mxu0 0
      %2137 = vmatprep.subr.bf16.mxu0 0
      %2138 = vmatpush2.bf16.msra.mxu0 0
      %2139 = vmatprep.mubr.bf16.mxu0 0
      %2140 = vmatmul.mubr.bf16.gmra.mxu0 %v793
      %v2141 = vpop.f32.mrf.mxu0
      %v2142 = vadd.f32 %v1981, %v2141
      %v2143 = vpop.f32.mrf.mxu0
      %v2144 = vpop.f32.mrf.mxu0
      %v2145 = vadd.f32 %v1984, %v2144
      %v2146 = vpop.f32.mrf.mxu0
      %2147 = vmatprep.mubr.bf16.mxu0 0
      %2148 = vmatmul.mubr.bf16.gmra.mxu0 %v796
      %v2149 = vpop.f32.mrf.mxu0
      %v2150 = vadd.f32 %v1989, %v2149
      %v2151 = vpop.f32.mrf.mxu0
      %v2152 = vpop.f32.mrf.mxu0
      %v2153 = vadd.f32 %v1992, %v2152
      %v2154 = vpop.f32.mrf.mxu0
      %2155 = vmatprep.mubr.bf16.mxu0 0
      %2156 = vmatmul.mubr.bf16.gmra.mxu0 %v799
      %v2157 = vpop.f32.mrf.mxu0
      %v2158 = vadd.f32 %v1997, %v2157
      %v2159 = vpop.f32.mrf.mxu0
      %v2160 = vpop.f32.mrf.mxu0
      %v2161 = vadd.f32 %v2000, %v2160
      %v2162 = vpop.f32.mrf.mxu0
      %2163 = vmatprep.mubr.bf16.mxu0 0
      %2164 = vmatmul.mubr.bf16.gmra.mxu0 %v802
      %v2165 = vpop.f32.mrf.mxu0
      %v2166 = vadd.f32 %v2005, %v2165
      %v2167 = vpop.f32.mrf.mxu0
      %v2168 = vpop.f32.mrf.mxu0
      %v2169 = vadd.f32 %v2008, %v2168
      %v2170 = vpop.f32.mrf.mxu0
      %2171 = vmatprep.mubr.bf16.mxu0 0
      %2172 = vmatmul.mubr.bf16.gmra.mxu0 %v805
      %v2173 = vpop.f32.mrf.mxu0
      %v2174 = vadd.f32 %v2013, %v2173
      %v2175 = vpop.f32.mrf.mxu0
      %v2176 = vpop.f32.mrf.mxu0
      %v2177 = vadd.f32 %v2016, %v2176
      %v2178 = vpop.f32.mrf.mxu0
      %2179 = vmatprep.mubr.bf16.mxu0 0
      %2180 = vmatmul.mubr.bf16.gmra.mxu0 %v808
      %v2181 = vpop.f32.mrf.mxu0
      %v2182 = vadd.f32 %v2021, %v2181
      %v2183 = vpop.f32.mrf.mxu0
      %v2184 = vpop.f32.mrf.mxu0
      %v2185 = vadd.f32 %v2024, %v2184
      %v2186 = vpop.f32.mrf.mxu0
      %2187 = vmatprep.mubr.bf16.mxu0 0
      %2188 = vmatmul.mubr.bf16.gmra.mxu0 %v811
      %v2189 = vpop.f32.mrf.mxu0
      %v2190 = vadd.f32 %v2029, %v2189
      %v2191 = vpop.f32.mrf.mxu0
      %v2192 = vpop.f32.mrf.mxu0
      %v2193 = vadd.f32 %v2032, %v2192
      %v2194 = vpop.f32.mrf.mxu0
      %2195 = vmatprep.mubr.bf16.mxu0 0
      %2196 = vmatmul.mubr.bf16.gmra.mxu0 %v814
      %v2197 = vpop.f32.mrf.mxu0
      %v2198 = vadd.f32 %v2037, %v2197
      %v2199 = vpop.f32.mrf.mxu0
      %v2200 = vpop.f32.mrf.mxu0
      %v2201 = vadd.f32 %v2040, %v2200
      %v2202 = vpop.f32.mrf.mxu0
      %2203 = vmatprep.mubr.bf16.mxu0 0
      %2204 = vmatmul.mubr.bf16.gmra.mxu0 %v817
      %v2205 = vpop.f32.mrf.mxu0
      %v2206 = vadd.f32 %v2045, %v2205
      %v2207 = vpop.f32.mrf.mxu0
      %v2208 = vpop.f32.mrf.mxu0
      %v2209 = vadd.f32 %v2048, %v2208
      %v2210 = vpop.f32.mrf.mxu0
      %2211 = vmatprep.mubr.bf16.mxu0 0
      %2212 = vmatmul.mubr.bf16.gmra.mxu0 %v820
      %v2213 = vpop.f32.mrf.mxu0
      %v2214 = vadd.f32 %v2053, %v2213
      %v2215 = vpop.f32.mrf.mxu0
      %v2216 = vpop.f32.mrf.mxu0
      %v2217 = vadd.f32 %v2056, %v2216
      %v2218 = vpop.f32.mrf.mxu0
      %2219 = vmatprep.mubr.bf16.mxu0 0
      %2220 = vmatmul.mubr.bf16.gmra.mxu0 %v823
      %v2221 = vpop.f32.mrf.mxu0
      %v2222 = vadd.f32 %v2061, %v2221
      %v2223 = vpop.f32.mrf.mxu0
      %v2224 = vpop.f32.mrf.mxu0
      %v2225 = vadd.f32 %v2064, %v2224
      %v2226 = vpop.f32.mrf.mxu0
      %2227 = vmatprep.mubr.bf16.mxu0 0
      %2228 = vmatmul.mubr.bf16.gmra.mxu0 %v826
      %v2229 = vpop.f32.mrf.mxu0
      %v2230 = vadd.f32 %v2069, %v2229
      %v2231 = vpop.f32.mrf.mxu0
      %v2232 = vpop.f32.mrf.mxu0
      %v2233 = vadd.f32 %v2072, %v2232
      %v2234 = vpop.f32.mrf.mxu0
      %2235 = vmatprep.mubr.bf16.mxu0 0
      %2236 = vmatmul.mubr.bf16.gmra.mxu0 %v829
      %v2237 = vpop.f32.mrf.mxu0
      %v2238 = vadd.f32 %v2077, %v2237
      %v2239 = vpop.f32.mrf.mxu0
      %v2240 = vpop.f32.mrf.mxu0
      %v2241 = vadd.f32 %v2080, %v2240
      %v2242 = vpop.f32.mrf.mxu0
      %2243 = vmatprep.mubr.bf16.mxu0 0
      %2244 = vmatmul.mubr.bf16.gmra.mxu0 %v832
      %v2245 = vpop.f32.mrf.mxu0
      %v2246 = vadd.f32 %v2085, %v2245
      %v2247 = vpop.f32.mrf.mxu0
      %v2248 = vpop.f32.mrf.mxu0
      %v2249 = vadd.f32 %v2088, %v2248
      %v2250 = vpop.f32.mrf.mxu0
      %2251 = vmatprep.mubr.bf16.mxu0 0
      %2252 = vmatmul.mubr.bf16.gmra.mxu0 %v866
      %v2253 = vpop.f32.mrf.mxu0
      %v2254 = vadd.f32 %v2093, %v2253
      %v2255 = vpop.f32.mrf.mxu0
      %v2256 = vpop.f32.mrf.mxu0
      %v2257 = vadd.f32 %v2096, %v2256
      %v2258 = vpop.f32.mrf.mxu0
      %2259 = vmatprep.mubr.bf16.mxu0 0
      %2260 = vmatmul.mubr.bf16.gmra.mxu0 %v885
      %v2261 = vpop.f32.mrf.mxu0
      %v2262 = vadd.f32 %v2101, %v2261
      %v2263 = vpop.f32.mrf.mxu0
      %v2264 = vpop.f32.mrf.mxu0
      %v2265 = vadd.f32 %v2104, %v2264
      %v2266 = vpop.f32.mrf.mxu0
      %2267 = vdwg.mxu0
      %v2268 = vld [vmem:[%s4] sm:$0x1]
      %v2269 = vlaneseq
      %v2270 = vshrl.u32 %v2269, 7
      %v2271 = vsub.s32 0, %v2270
      %v2272 = vrot.slane %v2268, %v2271
      %v2273 = vmul.f32 %v2142, %v2272
      %v2274 = vmul.f32 %v2145, %v2272
      %v2275 = vmul.f32 %v2150, %v2272
      %v2276 = vmul.f32 %v2153, %v2272
      %v2277 = vmul.f32 %v2158, %v2272
      %v2278 = vmul.f32 %v2161, %v2272
      %v2279 = vmul.f32 %v2166, %v2272
      %v2280 = vmul.f32 %v2169, %v2272
      %v2281 = vmul.f32 %v2174, %v2272
      %v2282 = vmul.f32 %v2177, %v2272
      %v2283 = vmul.f32 %v2182, %v2272
      %v2284 = vmul.f32 %v2185, %v2272
      %v2285 = vmul.f32 %v2190, %v2272
      %v2286 = vmul.f32 %v2193, %v2272
      %v2287 = vmul.f32 %v2198, %v2272
      %v2288 = vmul.f32 %v2201, %v2272
      %v2289 = vmul.f32 %v2206, %v2272
      %v2290 = vmul.f32 %v2209, %v2272
      %v2291 = vmul.f32 %v2214, %v2272
      %v2292 = vmul.f32 %v2217, %v2272
      %v2293 = vmul.f32 %v2222, %v2272
      %v2294 = vmul.f32 %v2225, %v2272
      %v2295 = vmul.f32 %v2230, %v2272
      %v2296 = vmul.f32 %v2233, %v2272
      %v2297 = vmul.f32 %v2238, %v2272
      %v2298 = vmul.f32 %v2241, %v2272
      %v2299 = vmul.f32 %v2246, %v2272
      %v2300 = vmul.f32 %v2249, %v2272
      %v2301 = vmul.f32 %v2254, %v2272
      %v2302 = vmul.f32 %v2257, %v2272
      %v2303 = vmul.f32 %v2262, %v2272
      %v2304 = vmul.f32 %v2265, %v2272
      %v2305 = vld [vmem:[%s4 + $0x1] sm:$0x1]
      %v2306 = vlaneseq
      %v2307 = vshrl.u32 %v2306, 7
      %v2308 = vsub.s32 0, %v2307
      %v2309 = vrot.slane %v2305, %v2308
      %v2310 = vadd.f32 %v2273, %v2309
      %v2311 = vadd.f32 %v2274, %v2309
      %v2312 = vadd.f32 %v2275, %v2309
      %v2313 = vadd.f32 %v2276, %v2309
      %v2314 = vadd.f32 %v2277, %v2309
      %v2315 = vadd.f32 %v2278, %v2309
      %v2316 = vadd.f32 %v2279, %v2309
      %v2317 = vadd.f32 %v2280, %v2309
      %v2318 = vadd.f32 %v2281, %v2309
      %v2319 = vadd.f32 %v2282, %v2309
      %v2320 = vadd.f32 %v2283, %v2309
      %v2321 = vadd.f32 %v2284, %v2309
      %v2322 = vadd.f32 %v2285, %v2309
      %v2323 = vadd.f32 %v2286, %v2309
      %v2324 = vadd.f32 %v2287, %v2309
      %v2325 = vadd.f32 %v2288, %v2309
      %v2326 = vadd.f32 %v2289, %v2309
      %v2327 = vadd.f32 %v2290, %v2309
      %v2328 = vadd.f32 %v2291, %v2309
      %v2329 = vadd.f32 %v2292, %v2309
      %v2330 = vadd.f32 %v2293, %v2309
      %v2331 = vadd.f32 %v2294, %v2309
      %v2332 = vadd.f32 %v2295, %v2309
      %v2333 = vadd.f32 %v2296, %v2309
      %v2334 = vadd.f32 %v2297, %v2309
      %v2335 = vadd.f32 %v2298, %v2309
      %v2336 = vadd.f32 %v2299, %v2309
      %v2337 = vadd.f32 %v2300, %v2309
      %v2338 = vadd.f32 %v2301, %v2309
      %v2339 = vadd.f32 %v2302, %v2309
      %v2340 = vadd.f32 %v2303, %v2309
      %v2341 = vadd.f32 %v2304, %v2309
      %v2342 = vmax.f32 %v2310, 0.0
      %v2343 = vmax.f32 %v2311, 0.0
      %v2344 = vmax.f32 %v2312, 0.0
      %v2345 = vmax.f32 %v2313, 0.0
      %v2346 = vmax.f32 %v2314, 0.0
      %v2347 = vmax.f32 %v2315, 0.0
      %v2348 = vmax.f32 %v2316, 0.0
      %v2349 = vmax.f32 %v2317, 0.0
      %v2350 = vmax.f32 %v2318, 0.0
      %v2351 = vmax.f32 %v2319, 0.0
      %v2352 = vmax.f32 %v2320, 0.0
      %v2353 = vmax.f32 %v2321, 0.0
      %v2354 = vmax.f32 %v2322, 0.0
      %v2355 = vmax.f32 %v2323, 0.0
      %v2356 = vmax.f32 %v2324, 0.0
      %v2357 = vmax.f32 %v2325, 0.0
      %v2358 = vmax.f32 %v2326, 0.0
      %v2359 = vmax.f32 %v2327, 0.0
      %v2360 = vmax.f32 %v2328, 0.0
      %v2361 = vmax.f32 %v2329, 0.0
      %v2362 = vmax.f32 %v2330, 0.0
      %v2363 = vmax.f32 %v2331, 0.0
      %v2364 = vmax.f32 %v2332, 0.0
      %v2365 = vmax.f32 %v2333, 0.0
      %v2366 = vmax.f32 %v2334, 0.0
      %v2367 = vmax.f32 %v2335, 0.0
      %v2368 = vmax.f32 %v2336, 0.0
      %v2369 = vmax.f32 %v2337, 0.0
      %v2370 = vmax.f32 %v2338, 0.0
      %v2371 = vmax.f32 %v2339, 0.0
      %v2372 = vmax.f32 %v2340, 0.0
      %v2373 = vmax.f32 %v2341, 0.0
      %s2374 = scalar_lea.vmem [#allocation3], 24
      %2375 = vst [vmem:[%s2374 + $0x1] sm:$0xff] %v2342
      %2376 = vst [vmem:[%s2374 + $0x9] sm:$0xff] %v2343
      %2377 = vst [vmem:[%s2374 + $0x19] sm:$0xff] %v2344
      %2378 = vst [vmem:[%s2374 + $0x21] sm:$0xff] %v2345
      %2379 = vst [vmem:[%s2374 + $0x31] sm:$0xff] %v2346
      %2380 = vst [vmem:[%s2374 + $0x39] sm:$0xff] %v2347
      %2381 = vst [vmem:[%s2374 + $0x49] sm:$0xff] %v2348
      %2382 = vst [vmem:[%s2374 + $0x51] sm:$0xff] %v2349
      %2383 = vst [vmem:[%s2374 + $0x61] sm:$0xff] %v2350
      %2384 = vst [vmem:[%s2374 + $0x69] sm:$0xff] %v2351
      %2385 = vst [vmem:[%s2374 + $0x79] sm:$0xff] %v2352
      %2386 = vst [vmem:[%s2374 + $0x81] sm:$0xff] %v2353
      %2387 = vst [vmem:[%s2374 + $0x91] sm:$0xff] %v2354
      %2388 = vst [vmem:[%s2374 + $0x99] sm:$0xff] %v2355
      %2389 = vst [vmem:[%s2374 + $0xa9] sm:$0xff] %v2356
      %2390 = vst [vmem:[%s2374 + $0xb1] sm:$0xff] %v2357
      %2391 = vst [vmem:[%s2374 + $0xc1] sm:$0xff] %v2358
      %2392 = vst [vmem:[%s2374 + $0xc9] sm:$0xff] %v2359
      %2393 = vst [vmem:[%s2374 + $0xd9] sm:$0xff] %v2360
      %2394 = vst [vmem:[%s2374 + $0xe1] sm:$0xff] %v2361
      %2395 = vst [vmem:[%s2374 + $0xf1] sm:$0xff] %v2362
      %2396 = vst [vmem:[%s2374 + $0xf9] sm:$0xff] %v2363
      %2397 = vst [vmem:[%s2374 + $0x109] sm:$0xff] %v2364
      %2398 = vst [vmem:[%s2374 + $0x111] sm:$0xff] %v2365
      %2399 = vst [vmem:[%s2374 + $0x121] sm:$0xff] %v2366
      %2400 = vst [vmem:[%s2374 + $0x129] sm:$0xff] %v2367
      %2401 = vst [vmem:[%s2374 + $0x139] sm:$0xff] %v2368
      %2402 = vst [vmem:[%s2374 + $0x141] sm:$0xff] %v2369
      %2403 = vst [vmem:[%s2374 + $0x151] sm:$0xff] %v2370
      %2404 = vst [vmem:[%s2374 + $0x159] sm:$0xff] %v2371
      %2405 = vst [vmem:[%s2374 + $0x169] sm:$0xff] %v2372
      %2406 = vst [vmem:[%s2374 + $0x171] sm:$0xff] %v2373
      %v2407 = vld [vmem:[#allocation3] sm:$0xff]
      %v2408 = vld [vmem:[#allocation3 + $0x8] sm:$0xff]
      %v2409 = vld [vmem:[#allocation3 + $0x10] sm:$0x3]
      %v2410 = vld [vmem:[#allocation3 + $0x18] sm:$0xff]
      %v2411 = vld [vmem:[#allocation3 + $0x20] sm:$0xff]
      %v2412 = vld [vmem:[#allocation3 + $0x28] sm:$0x3]
      %v2413 = vld [vmem:[#allocation3 + $0x30] sm:$0xff]
      %v2414 = vld [vmem:[#allocation3 + $0x38] sm:$0xff]
      %v2415 = vld [vmem:[#allocation3 + $0x40] sm:$0x3]
      %v2416 = vld [vmem:[#allocation3 + $0x48] sm:$0xff]
      %v2417 = vld [vmem:[#allocation3 + $0x50] sm:$0xff]
      %v2418 = vld [vmem:[#allocation3 + $0x58] sm:$0x3]
      %v2419 = vld [vmem:[#allocation3 + $0x60] sm:$0xff]
      %v2420 = vld [vmem:[#allocation3 + $0x68] sm:$0xff]
      %v2421 = vld [vmem:[#allocation3 + $0x70] sm:$0x3]
      %v2422 = vld [vmem:[#allocation3 + $0x78] sm:$0xff]
      %v2423 = vld [vmem:[#allocation3 + $0x80] sm:$0xff]
      %v2424 = vld [vmem:[#allocation3 + $0x88] sm:$0x3]
      %v2425 = vld [vmem:[#allocation3 + $0x90] sm:$0xff]
      %v2426 = vld [vmem:[#allocation3 + $0x98] sm:$0xff]
      %v2427 = vld [vmem:[#allocation3 + $0xa0] sm:$0x3]
      %v2428 = vld [vmem:[#allocation3 + $0xa8] sm:$0xff]
      %v2429 = vld [vmem:[#allocation3 + $0xb0] sm:$0xff]
      %v2430 = vld [vmem:[#allocation3 + $0xb8] sm:$0x3]
      %v2431 = vld [vmem:[#allocation3 + $0xc0] sm:$0xff]
      %v2432 = vld [vmem:[#allocation3 + $0xc8] sm:$0xff]
      %v2433 = vld [vmem:[#allocation3 + $0xd0] sm:$0x3]
      %v2434 = vld [vmem:[#allocation3 + $0xd8] sm:$0xff]
      %v2435 = vld [vmem:[#allocation3 + $0xe0] sm:$0xff]
      %v2436 = vld [vmem:[#allocation3 + $0xe8] sm:$0x3]
      %v2437 = vld [vmem:[#allocation3 + $0xf0] sm:$0xff]
      %v2438 = vld [vmem:[#allocation3 + $0xf8] sm:$0xff]
      %v2439 = vld [vmem:[#allocation3 + $0x100] sm:$0x3]
      %v2440 = vld [vmem:[#allocation3 + $0x108] sm:$0xff]
      %v2441 = vld [vmem:[#allocation3 + $0x110] sm:$0xff]
      %v2442 = vld [vmem:[#allocation3 + $0x118] sm:$0x3]
      %v2443 = vld [vmem:[#allocation3 + $0x120] sm:$0xff]
      %v2444 = vld [vmem:[#allocation3 + $0x128] sm:$0xff]
      %v2445 = vld [vmem:[#allocation3 + $0x130] sm:$0x3]
      %v2446 = vld [vmem:[#allocation3 + $0x138] sm:$0xff]
      %v2447 = vld [vmem:[#allocation3 + $0x140] sm:$0xff]
      %v2448 = vld [vmem:[#allocation3 + $0x148] sm:$0x3]
      %v2449 = vld [vmem:[#allocation3 + $0x150] sm:$0xff]
      %v2450 = vld [vmem:[#allocation3 + $0x158] sm:$0xff]
      %v2451 = vld [vmem:[#allocation3 + $0x160] sm:$0x3]
      %v2452 = vld [vmem:[#allocation3 + $0x168] sm:$0xff]
      %v2453 = vld [vmem:[#allocation3 + $0x170] sm:$0xff]
      %v2454 = vld [vmem:[#allocation3 + $0x178] sm:$0x3]
      %v2455 = vld [vmem:[#allocation3 + $0x180] sm:$0xff]
      %v2456 = vld [vmem:[#allocation3 + $0x188] sm:$0xff]
      %v2457 = vld [vmem:[#allocation3 + $0x190] sm:$0x3]
      %v2458 = vld [vmem:[#allocation3 + $0x198] sm:$0xff]
      %v2459 = vld [vmem:[#allocation3 + $0x1a0] sm:$0xff]
      %v2460 = vld [vmem:[#allocation3 + $0x1a8] sm:$0x3]
      %v2461 = vpack.c.bf16 %v2408, %v2407
      %v2462 = vpack.c.bf16 %v2409, %v2409
      %v2463 = vpack.c.bf16 %v2411, %v2410
      %v2464 = vpack.c.bf16 %v2412, %v2412
      %v2465 = vpack.c.bf16 %v2414, %v2413
      %v2466 = vpack.c.bf16 %v2415, %v2415
      %v2467 = vpack.c.bf16 %v2417, %v2416
      %v2468 = vpack.c.bf16 %v2418, %v2418
      %v2469 = vpack.c.bf16 %v2420, %v2419
      %v2470 = vpack.c.bf16 %v2421, %v2421
      %v2471 = vpack.c.bf16 %v2423, %v2422
      %v2472 = vpack.c.bf16 %v2424, %v2424
      %v2473 = vpack.c.bf16 %v2426, %v2425
      %v2474 = vpack.c.bf16 %v2427, %v2427
      %v2475 = vpack.c.bf16 %v2429, %v2428
      %v2476 = vpack.c.bf16 %v2430, %v2430
      %v2477 = vpack.c.bf16 %v2432, %v2431
      %v2478 = vpack.c.bf16 %v2433, %v2433
      %v2479 = vpack.c.bf16 %v2435, %v2434
      %v2480 = vpack.c.bf16 %v2436, %v2436
      %v2481 = vpack.c.bf16 %v2438, %v2437
      %v2482 = vpack.c.bf16 %v2439, %v2439
      %v2483 = vpack.c.bf16 %v2441, %v2440
      %v2484 = vpack.c.bf16 %v2442, %v2442
      %v2485 = vpack.c.bf16 %v2444, %v2443
      %v2486 = vpack.c.bf16 %v2445, %v2445
      %v2487 = vpack.c.bf16 %v2447, %v2446
      %v2488 = vpack.c.bf16 %v2448, %v2448
      %v2489 = vpack.c.bf16 %v2450, %v2449
      %v2490 = vpack.c.bf16 %v2451, %v2451
      %v2491 = vpack.c.bf16 %v2453, %v2452
      %v2492 = vpack.c.bf16 %v2454, %v2454
      %v2493 = vpack.c.bf16 %v2456, %v2455
      %v2494 = vpack.c.bf16 %v2457, %v2457
      %v2495 = vpack.c.bf16 %v2459, %v2458
      %v2496 = vpack.c.bf16 %v2460, %v2460
      %v2498 = vshrl.u32 %v2461, 16
      %v2500 = vshll.u32 %v2461, 16
      %v2502 = vrot.slane %v2500, 1
      %v2503 = vor.u32 %v2498, %v2502
      %v2505 = vshll.u32 %v2462, 16
      %v2507 = vrot.slane %v2505, 1
      %v2508 = vsel %vm543, %v2503, %v2507
      %v2510 = vshrl.u32 %v2463, 16
      %v2512 = vshll.u32 %v2463, 16
      %v2514 = vrot.slane %v2512, 1
      %v2515 = vor.u32 %v2510, %v2514
      %v2517 = vshll.u32 %v2464, 16
      %v2519 = vrot.slane %v2517, 1
      %v2520 = vsel %vm543, %v2515, %v2519
      %v2522 = vshrl.u32 %v2465, 16
      %v2524 = vshll.u32 %v2465, 16
      %v2526 = vrot.slane %v2524, 1
      %v2527 = vor.u32 %v2522, %v2526
      %v2529 = vshll.u32 %v2466, 16
      %v2531 = vrot.slane %v2529, 1
      %v2532 = vsel %vm543, %v2527, %v2531
      %v2534 = vshrl.u32 %v2467, 16
      %v2536 = vshll.u32 %v2467, 16
      %v2538 = vrot.slane %v2536, 1
      %v2539 = vor.u32 %v2534, %v2538
      %v2541 = vshll.u32 %v2468, 16
      %v2543 = vrot.slane %v2541, 1
      %v2544 = vsel %vm543, %v2539, %v2543
      %v2546 = vshrl.u32 %v2469, 16
      %v2548 = vshll.u32 %v2469, 16
      %v2550 = vrot.slane %v2548, 1
      %v2551 = vor.u32 %v2546, %v2550
      %v2553 = vshll.u32 %v2470, 16
      %v2555 = vrot.slane %v2553, 1
      %v2556 = vsel %vm543, %v2551, %v2555
      %v2558 = vshrl.u32 %v2471, 16
      %v2560 = vshll.u32 %v2471, 16
      %v2562 = vrot.slane %v2560, 1
      %v2563 = vor.u32 %v2558, %v2562
      %v2565 = vshll.u32 %v2472, 16
      %v2567 = vrot.slane %v2565, 1
      %v2568 = vsel %vm543, %v2563, %v2567
      %v2570 = vshrl.u32 %v2473, 16
      %v2572 = vshll.u32 %v2473, 16
      %v2574 = vrot.slane %v2572, 1
      %v2575 = vor.u32 %v2570, %v2574
      %v2577 = vshll.u32 %v2474, 16
      %v2579 = vrot.slane %v2577, 1
      %v2580 = vsel %vm543, %v2575, %v2579
      %v2582 = vshrl.u32 %v2475, 16
      %v2584 = vshll.u32 %v2475, 16
      %v2586 = vrot.slane %v2584, 1
      %v2587 = vor.u32 %v2582, %v2586
      %v2589 = vshll.u32 %v2476, 16
      %v2591 = vrot.slane %v2589, 1
      %v2592 = vsel %vm543, %v2587, %v2591
      %v2594 = vshrl.u32 %v2477, 16
      %v2596 = vshll.u32 %v2477, 16
      %v2598 = vrot.slane %v2596, 1
      %v2599 = vor.u32 %v2594, %v2598
      %v2601 = vshll.u32 %v2478, 16
      %v2603 = vrot.slane %v2601, 1
      %v2604 = vsel %vm543, %v2599, %v2603
      %v2606 = vshrl.u32 %v2479, 16
      %v2608 = vshll.u32 %v2479, 16
      %v2610 = vrot.slane %v2608, 1
      %v2611 = vor.u32 %v2606, %v2610
      %v2613 = vshll.u32 %v2480, 16
      %v2615 = vrot.slane %v2613, 1
      %v2616 = vsel %vm543, %v2611, %v2615
      %v2618 = vshrl.u32 %v2481, 16
      %v2620 = vshll.u32 %v2481, 16
      %v2622 = vrot.slane %v2620, 1
      %v2623 = vor.u32 %v2618, %v2622
      %v2625 = vshll.u32 %v2482, 16
      %v2627 = vrot.slane %v2625, 1
      %v2628 = vsel %vm543, %v2623, %v2627
      %v2630 = vshrl.u32 %v2483, 16
      %v2632 = vshll.u32 %v2483, 16
      %v2634 = vrot.slane %v2632, 1
      %v2635 = vor.u32 %v2630, %v2634
      %v2637 = vshll.u32 %v2484, 16
      %v2639 = vrot.slane %v2637, 1
      %v2640 = vsel %vm543, %v2635, %v2639
      %v2642 = vshrl.u32 %v2485, 16
      %v2644 = vshll.u32 %v2485, 16
      %v2646 = vrot.slane %v2644, 1
      %v2647 = vor.u32 %v2642, %v2646
      %v2649 = vshll.u32 %v2486, 16
      %v2651 = vrot.slane %v2649, 1
      %v2652 = vsel %vm543, %v2647, %v2651
      %v2654 = vshrl.u32 %v2487, 16
      %v2656 = vshll.u32 %v2487, 16
      %v2658 = vrot.slane %v2656, 1
      %v2659 = vor.u32 %v2654, %v2658
      %v2661 = vshll.u32 %v2488, 16
      %v2663 = vrot.slane %v2661, 1
      %v2664 = vsel %vm543, %v2659, %v2663
      %v2666 = vshrl.u32 %v2489, 16
      %v2668 = vshll.u32 %v2489, 16
      %v2670 = vrot.slane %v2668, 1
      %v2671 = vor.u32 %v2666, %v2670
      %v2673 = vshll.u32 %v2490, 16
      %v2675 = vrot.slane %v2673, 1
      %v2676 = vsel %vm543, %v2671, %v2675
      %v2678 = vshrl.u32 %v2491, 16
      %v2680 = vshll.u32 %v2491, 16
      %v2682 = vrot.slane %v2680, 1
      %v2683 = vor.u32 %v2678, %v2682
      %v2685 = vshll.u32 %v2492, 16
      %v2687 = vrot.slane %v2685, 1
      %v2688 = vsel %vm543, %v2683, %v2687
      %v2737 = vrot.slane %v2461, 1
      %v2738 = vrot.slane %v2462, 1
      %v2739 = vsel %vm784, %v2737, %v2738
      %v2740 = vrot.slane %v2463, 1
      %v2741 = vrot.slane %v2464, 1
      %v2742 = vsel %vm784, %v2740, %v2741
      %v2743 = vrot.slane %v2465, 1
      %v2744 = vrot.slane %v2466, 1
      %v2745 = vsel %vm784, %v2743, %v2744
      %v2746 = vrot.slane %v2467, 1
      %v2747 = vrot.slane %v2468, 1
      %v2748 = vsel %vm784, %v2746, %v2747
      %v2749 = vrot.slane %v2469, 1
      %v2750 = vrot.slane %v2470, 1
      %v2751 = vsel %vm784, %v2749, %v2750
      %v2752 = vrot.slane %v2471, 1
      %v2753 = vrot.slane %v2472, 1
      %v2754 = vsel %vm784, %v2752, %v2753
      %v2755 = vrot.slane %v2473, 1
      %v2756 = vrot.slane %v2474, 1
      %v2757 = vsel %vm784, %v2755, %v2756
      %v2758 = vrot.slane %v2475, 1
      %v2759 = vrot.slane %v2476, 1
      %v2760 = vsel %vm784, %v2758, %v2759
      %v2761 = vrot.slane %v2477, 1
      %v2762 = vrot.slane %v2478, 1
      %v2763 = vsel %vm784, %v2761, %v2762
      %v2764 = vrot.slane %v2479, 1
      %v2765 = vrot.slane %v2480, 1
      %v2766 = vsel %vm784, %v2764, %v2765
      %v2767 = vrot.slane %v2481, 1
      %v2768 = vrot.slane %v2482, 1
      %v2769 = vsel %vm784, %v2767, %v2768
      %v2770 = vrot.slane %v2483, 1
      %v2771 = vrot.slane %v2484, 1
      %v2772 = vsel %vm784, %v2770, %v2771
      %v2773 = vrot.slane %v2485, 1
      %v2774 = vrot.slane %v2486, 1
      %v2775 = vsel %vm784, %v2773, %v2774
      %v2776 = vrot.slane %v2487, 1
      %v2777 = vrot.slane %v2488, 1
      %v2778 = vsel %vm784, %v2776, %v2777
      %v2779 = vrot.slane %v2489, 1
      %v2780 = vrot.slane %v2490, 1
      %v2781 = vsel %vm784, %v2779, %v2780
      %v2782 = vrot.slane %v2491, 1
      %v2783 = vrot.slane %v2492, 1
      %v2784 = vsel %vm784, %v2782, %v2783
      %v2802 = vshrl.u32 %v2493, 16
      %v2804 = vshll.u32 %v2493, 16
      %v2806 = vrot.slane %v2804, 1
      %v2807 = vor.u32 %v2802, %v2806
      %v2809 = vshll.u32 %v2494, 16
      %v2811 = vrot.slane %v2809, 1
      %v2812 = vsel %vm543, %v2807, %v2811
      %v2816 = vrot.slane %v2493, 1
      %v2817 = vrot.slane %v2494, 1
      %v2818 = vsel %vm784, %v2816, %v2817
      %v2821 = vshrl.u32 %v2495, 16
      %v2823 = vshll.u32 %v2495, 16
      %v2825 = vrot.slane %v2823, 1
      %v2826 = vor.u32 %v2821, %v2825
      %v2828 = vshll.u32 %v2496, 16
      %v2830 = vrot.slane %v2828, 1
      %v2831 = vsel %vm543, %v2826, %v2830
      %v2835 = vrot.slane %v2495, 1
      %v2836 = vrot.slane %v2496, 1
      %v2837 = vsel %vm784, %v2835, %v2836
      %v2839 = vld [vmem:[%s2] sm:$0xf]
      %v2840 = vld [vmem:[%s2 + $0x4] sm:$0xf]
      %v2841 = vld [vmem:[%s2 + $0x8] sm:$0xf]
      %v2842 = vld [vmem:[%s2 + $0xc] sm:$0xf]
      %v2843 = vld [vmem:[%s2 + $0x10] sm:$0xf]
      %v2844 = vld [vmem:[%s2 + $0x14] sm:$0xf]
      %v2845 = vld [vmem:[%s2 + $0x18] sm:$0xf]
      %v2846 = vld [vmem:[%s2 + $0x1c] sm:$0xf]
      %v2847 = vld [vmem:[%s2 + $0x20] sm:$0xf]
      %v2848 = vld [vmem:[%s2 + $0x24] sm:$0xf]
      %v2849 = vld [vmem:[%s2 + $0x28] sm:$0xf]
      %v2850 = vld [vmem:[%s2 + $0x2c] sm:$0xf]
      %v2851 = vld [vmem:[%s2 + $0x30] sm:$0xf]
      %v2852 = vld [vmem:[%s2 + $0x34] sm:$0xf]
      %v2853 = vld [vmem:[%s2 + $0x38] sm:$0xf]
      %v2854 = vld [vmem:[%s2 + $0x3c] sm:$0xf]
      %v2855 = vld [vmem:[%s2 + $0x40] sm:$0xf]
      %v2856 = vld [vmem:[%s2 + $0x44] sm:$0xf]
      %v2857 = vld [vmem:[%s2 + $0x48] sm:$0xf]
      %v2858 = vld [vmem:[%s2 + $0x4c] sm:$0xf]
      %v2859 = vld [vmem:[%s2 + $0x50] sm:$0xf]
      %v2860 = vld [vmem:[%s2 + $0x54] sm:$0xf]
      %v2861 = vld [vmem:[%s2 + $0x58] sm:$0xf]
      %v2862 = vld [vmem:[%s2 + $0x5c] sm:$0xf]
      %v2863 = vld [vmem:[%s2 + $0x60] sm:$0xf]
      %v2864 = vld [vmem:[%s2 + $0x64] sm:$0xf]
      %v2865 = vld [vmem:[%s2 + $0x68] sm:$0xf]
      %v2866 = vld [vmem:[%s2 + $0x6c] sm:$0xf]
      %v2867 = vld [vmem:[%s2 + $0x70] sm:$0xf]
      %v2868 = vld [vmem:[%s2 + $0x74] sm:$0xf]
      %v2869 = vld [vmem:[%s2 + $0x78] sm:$0xf]
      %v2870 = vld [vmem:[%s2 + $0x7c] sm:$0xf]
      %v2871 = vld [vmem:[%s2 + $0x80] sm:$0xf]
      %v2872 = vld [vmem:[%s2 + $0x84] sm:$0xf]
      %v2873 = vld [vmem:[%s2 + $0x88] sm:$0xf]
      %v2874 = vld [vmem:[%s2 + $0x8c] sm:$0xf]
      %v2875 = vld [vmem:[%s2 + $0x90] sm:$0xf]
      %v2876 = vld [vmem:[%s2 + $0x94] sm:$0xf]
      %v2877 = vld [vmem:[%s2 + $0x98] sm:$0xf]
      %v2878 = vld [vmem:[%s2 + $0x9c] sm:$0xf]
      %v2879 = vld [vmem:[%s2 + $0xa0] sm:$0xf]
      %v2880 = vld [vmem:[%s2 + $0xa4] sm:$0xf]
      %v2881 = vld [vmem:[%s2 + $0xa8] sm:$0xf]
      %v2882 = vld [vmem:[%s2 + $0xac] sm:$0xf]
      %v2883 = vld [vmem:[%s2 + $0xb0] sm:$0xf]
      %v2884 = vld [vmem:[%s2 + $0xb4] sm:$0xf]
      %v2885 = vld [vmem:[%s2 + $0xb8] sm:$0xf]
      %v2886 = vld [vmem:[%s2 + $0xbc] sm:$0xf]
      %v2887 = vld [vmem:[%s2 + $0xc0] sm:$0xf]
      %v2888 = vld [vmem:[%s2 + $0xc4] sm:$0xf]
      %v2889 = vld [vmem:[%s2 + $0xc8] sm:$0xf]
      %v2890 = vld [vmem:[%s2 + $0xcc] sm:$0xf]
      %v2891 = vld [vmem:[%s2 + $0xd0] sm:$0xf]
      %v2892 = vld [vmem:[%s2 + $0xd4] sm:$0xf]
      %v2893 = vld [vmem:[%s2 + $0xd8] sm:$0xf]
      %v2894 = vld [vmem:[%s2 + $0xdc] sm:$0xf]
      %v2895 = vld [vmem:[%s2 + $0xe0] sm:$0xf]
      %v2896 = vld [vmem:[%s2 + $0xe4] sm:$0xf]
      %v2897 = vld [vmem:[%s2 + $0xe8] sm:$0xf]
      %v2898 = vld [vmem:[%s2 + $0xec] sm:$0xf]
      %v2899 = vld [vmem:[%s2 + $0xf0] sm:$0xf]
      %v2900 = vld [vmem:[%s2 + $0xf4] sm:$0xf]
      %v2901 = vld [vmem:[%s2 + $0xf8] sm:$0xf]
      %v2902 = vld [vmem:[%s2 + $0xfc] sm:$0xf]
      %v2903 = vld [vmem:[%s2 + $0x100] sm:$0xf]
      %v2904 = vld [vmem:[%s2 + $0x104] sm:$0xf]
      %v2905 = vld [vmem:[%s2 + $0x108] sm:$0xf]
      %v2906 = vld [vmem:[%s2 + $0x10c] sm:$0xf]
      %v2907 = vld [vmem:[%s2 + $0x110] sm:$0xf]
      %v2908 = vld [vmem:[%s2 + $0x114] sm:$0xf]
      %v2909 = vld [vmem:[%s2 + $0x118] sm:$0xf]
      %v2910 = vld [vmem:[%s2 + $0x11c] sm:$0xf]
      %v2911 = vld [vmem:[%s2 + $0x120] sm:$0xf]
      %v2912 = vld [vmem:[%s2 + $0x124] sm:$0xf]
      %v2913 = vld [vmem:[%s2 + $0x128] sm:$0xf]
      %v2914 = vld [vmem:[%s2 + $0x12c] sm:$0xf]
      %v2915 = vld [vmem:[%s2 + $0x130] sm:$0xf]
      %v2916 = vld [vmem:[%s2 + $0x134] sm:$0xf]
      %v2917 = vld [vmem:[%s2 + $0x138] sm:$0xf]
      %v2918 = vld [vmem:[%s2 + $0x13c] sm:$0xf]
      %v2919 = vld [vmem:[%s2 + $0x140] sm:$0xf]
      %v2920 = vld [vmem:[%s2 + $0x144] sm:$0xf]
      %v2921 = vld [vmem:[%s2 + $0x148] sm:$0xf]
      %v2922 = vld [vmem:[%s2 + $0x14c] sm:$0xf]
      %v2923 = vld [vmem:[%s2 + $0x150] sm:$0xf]
      %v2924 = vld [vmem:[%s2 + $0x154] sm:$0xf]
      %v2925 = vld [vmem:[%s2 + $0x158] sm:$0xf]
      %v2926 = vld [vmem:[%s2 + $0x15c] sm:$0xf]
      %v2927 = vld [vmem:[%s2 + $0x160] sm:$0xf]
      %v2928 = vld [vmem:[%s2 + $0x164] sm:$0xf]
      %v2929 = vld [vmem:[%s2 + $0x168] sm:$0xf]
      %v2930 = vld [vmem:[%s2 + $0x16c] sm:$0xf]
      %v2931 = vld [vmem:[%s2 + $0x170] sm:$0xf]
      %v2932 = vld [vmem:[%s2 + $0x174] sm:$0xf]
      %v2933 = vld [vmem:[%s2 + $0x178] sm:$0xf]
      %v2934 = vld [vmem:[%s2 + $0x17c] sm:$0xf]
      %v2935 = vld [vmem:[%s2 + $0x180] sm:$0xf]
      %v2936 = vld [vmem:[%s2 + $0x184] sm:$0xf]
      %v2937 = vld [vmem:[%s2 + $0x188] sm:$0xf]
      %v2938 = vld [vmem:[%s2 + $0x18c] sm:$0xf]
      %v2939 = vld [vmem:[%s2 + $0x190] sm:$0xf]
      %v2940 = vld [vmem:[%s2 + $0x194] sm:$0xf]
      %v2941 = vld [vmem:[%s2 + $0x198] sm:$0xf]
      %v2942 = vld [vmem:[%s2 + $0x19c] sm:$0xf]
      %v2943 = vld [vmem:[%s2 + $0x1a0] sm:$0xf]
      %v2944 = vld [vmem:[%s2 + $0x1a4] sm:$0xf]
      %v2945 = vld [vmem:[%s2 + $0x1a8] sm:$0xf]
      %v2946 = vld [vmem:[%s2 + $0x1ac] sm:$0xf]
      %v2947 = vld [vmem:[%s2 + $0x1b0] sm:$0xf]
      %v2948 = vld [vmem:[%s2 + $0x1b4] sm:$0xf]
      %v2949 = vld [vmem:[%s2 + $0x1b8] sm:$0xf]
      %v2950 = vld [vmem:[%s2 + $0x1bc] sm:$0xf]
      %v2951 = vld [vmem:[%s2 + $0x1c0] sm:$0xf]
      %v2952 = vld [vmem:[%s2 + $0x1c4] sm:$0xf]
      %v2953 = vld [vmem:[%s2 + $0x1c8] sm:$0xf]
      %v2954 = vld [vmem:[%s2 + $0x1cc] sm:$0xf]
      %v2955 = vld [vmem:[%s2 + $0x1d0] sm:$0xf]
      %v2956 = vld [vmem:[%s2 + $0x1d4] sm:$0xf]
      %v2957 = vld [vmem:[%s2 + $0x1d8] sm:$0xf]
      %v2958 = vld [vmem:[%s2 + $0x1dc] sm:$0xf]
      %v2959 = vld [vmem:[%s2 + $0x1e0] sm:$0xf]
      %v2960 = vld [vmem:[%s2 + $0x1e4] sm:$0xf]
      %v2961 = vld [vmem:[%s2 + $0x1e8] sm:$0xf]
      %v2962 = vld [vmem:[%s2 + $0x1ec] sm:$0xf]
      %v2963 = vld [vmem:[%s2 + $0x1f0] sm:$0xf]
      %v2964 = vld [vmem:[%s2 + $0x1f4] sm:$0xf]
      %v2965 = vld [vmem:[%s2 + $0x1f8] sm:$0xf]
      %v2966 = vld [vmem:[%s2 + $0x1fc] sm:$0xf]
      %v2967 = vld [vmem:[%s2 + $0x200] sm:$0xf]
      %v2968 = vld [vmem:[%s2 + $0x204] sm:$0xf]
      %v2969 = vld [vmem:[%s2 + $0x208] sm:$0xf]
      %v2970 = vld [vmem:[%s2 + $0x20c] sm:$0xf]
      %v2971 = vld [vmem:[%s2 + $0x210] sm:$0xf]
      %v2972 = vld [vmem:[%s2 + $0x214] sm:$0xf]
      %v2973 = vld [vmem:[%s2 + $0x218] sm:$0xf]
      %v2974 = vld [vmem:[%s2 + $0x21c] sm:$0xf]
      %v2975 = vld [vmem:[%s2 + $0x220] sm:$0xf]
      %v2976 = vld [vmem:[%s2 + $0x224] sm:$0xf]
      %v2977 = vld [vmem:[%s2 + $0x228] sm:$0xf]
      %v2978 = vld [vmem:[%s2 + $0x22c] sm:$0xf]
      %v2979 = vld [vmem:[%s2 + $0x230] sm:$0xf]
      %v2980 = vld [vmem:[%s2 + $0x234] sm:$0xf]
      %v2981 = vld [vmem:[%s2 + $0x238] sm:$0xf]
      %v2982 = vld [vmem:[%s2 + $0x23c] sm:$0xf]
      %v3127 = vunpack.c.l.b16 %v2839
      %v3128 = vunpack.c.l.b16 %v2840
      %v3129 = vunpack.c.l.b16 %v2841
      %v3130 = vunpack.c.l.b16 %v2842
      %v3131 = vunpack.c.l.b16 %v2843
      %v3132 = vunpack.c.l.b16 %v2844
      %v3133 = vunpack.c.l.b16 %v2845
      %v3134 = vunpack.c.l.b16 %v2846
      %v3135 = vunpack.c.l.b16 %v2847
      %v3136 = vunpack.c.l.b16 %v2848
      %v3137 = vunpack.c.l.b16 %v2849
      %v3138 = vunpack.c.l.b16 %v2850
      %v3139 = vunpack.c.l.b16 %v2851
      %v3140 = vunpack.c.l.b16 %v2852
      %v3141 = vunpack.c.l.b16 %v2853
      %v3142 = vunpack.c.l.b16 %v2854
      %v3143 = vunpack.c.l.b16 %v2855
      %v3144 = vunpack.c.l.b16 %v2856
      %v3145 = vunpack.c.l.b16 %v2857
      %v3146 = vunpack.c.l.b16 %v2858
      %v3147 = vunpack.c.l.b16 %v2859
      %v3148 = vunpack.c.l.b16 %v2860
      %v3149 = vunpack.c.l.b16 %v2861
      %v3150 = vunpack.c.l.b16 %v2862
      %v3151 = vunpack.c.l.b16 %v2863
      %v3152 = vunpack.c.l.b16 %v2864
      %v3153 = vunpack.c.l.b16 %v2865
      %v3154 = vunpack.c.l.b16 %v2866
      %v3155 = vunpack.c.l.b16 %v2867
      %v3156 = vunpack.c.l.b16 %v2868
      %v3157 = vunpack.c.l.b16 %v2869
      %v3158 = vunpack.c.l.b16 %v2870
      %v3159 = vunpack.c.l.b16 %v2871
      %v3160 = vunpack.c.l.b16 %v2872
      %v3161 = vunpack.c.l.b16 %v2873
      %v3162 = vunpack.c.l.b16 %v2874
      %v3163 = vunpack.c.l.b16 %v2875
      %v3164 = vunpack.c.l.b16 %v2876
      %v3165 = vunpack.c.l.b16 %v2877
      %v3166 = vunpack.c.l.b16 %v2878
      %v3167 = vunpack.c.l.b16 %v2879
      %v3168 = vunpack.c.l.b16 %v2880
      %v3169 = vunpack.c.l.b16 %v2881
      %v3170 = vunpack.c.l.b16 %v2882
      %v3171 = vunpack.c.l.b16 %v2883
      %v3172 = vunpack.c.l.b16 %v2884
      %v3173 = vunpack.c.l.b16 %v2885
      %v3174 = vunpack.c.l.b16 %v2886
      %v3175 = vunpack.c.l.b16 %v2887
      %v3176 = vunpack.c.l.b16 %v2888
      %v3177 = vunpack.c.l.b16 %v2889
      %v3178 = vunpack.c.l.b16 %v2890
      %v3179 = vunpack.c.l.b16 %v2891
      %v3180 = vunpack.c.l.b16 %v2892
      %v3181 = vunpack.c.l.b16 %v2893
      %v3182 = vunpack.c.l.b16 %v2894
      %v3183 = vunpack.c.l.b16 %v2895
      %v3184 = vunpack.c.l.b16 %v2896
      %v3185 = vunpack.c.l.b16 %v2897
      %v3186 = vunpack.c.l.b16 %v2898
      %v3187 = vunpack.c.l.b16 %v2899
      %v3188 = vunpack.c.l.b16 %v2900
      %v3189 = vunpack.c.l.b16 %v2901
      %v3190 = vunpack.c.l.b16 %v2902
      %v3191 = vunpack.c.l.b16 %v2903
      %v3192 = vunpack.c.l.b16 %v2904
      %v3193 = vunpack.c.l.b16 %v2905
      %v3194 = vunpack.c.l.b16 %v2906
      %v3195 = vunpack.c.l.b16 %v2907
      %v3196 = vunpack.c.l.b16 %v2908
      %v3197 = vunpack.c.l.b16 %v2909
      %v3198 = vunpack.c.l.b16 %v2910
      %v3199 = vunpack.c.l.b16 %v2911
      %v3200 = vunpack.c.l.b16 %v2912
      %v3201 = vunpack.c.l.b16 %v2913
      %v3202 = vunpack.c.l.b16 %v2914
      %v3203 = vunpack.c.l.b16 %v2915
      %v3204 = vunpack.c.l.b16 %v2916
      %v3205 = vunpack.c.l.b16 %v2917
      %v3206 = vunpack.c.l.b16 %v2918
      %v3207 = vunpack.c.l.b16 %v2919
      %v3208 = vunpack.c.l.b16 %v2920
      %v3209 = vunpack.c.l.b16 %v2921
      %v3210 = vunpack.c.l.b16 %v2922
      %v3211 = vunpack.c.l.b16 %v2923
      %v3212 = vunpack.c.l.b16 %v2924
      %v3213 = vunpack.c.l.b16 %v2925
      %v3214 = vunpack.c.l.b16 %v2926
      %v3215 = vunpack.c.l.b16 %v2927
      %v3216 = vunpack.c.l.b16 %v2928
      %v3217 = vunpack.c.l.b16 %v2929
      %v3218 = vunpack.c.l.b16 %v2930
      %v3219 = vunpack.c.l.b16 %v2931
      %v3220 = vunpack.c.l.b16 %v2932
      %v3221 = vunpack.c.l.b16 %v2933
      %v3222 = vunpack.c.l.b16 %v2934
      %v3223 = vunpack.c.l.b16 %v2935
      %v3224 = vunpack.c.l.b16 %v2936
      %v3225 = vunpack.c.l.b16 %v2937
      %v3226 = vunpack.c.l.b16 %v2938
      %v3227 = vunpack.c.l.b16 %v2939
      %v3228 = vunpack.c.l.b16 %v2940
      %v3229 = vunpack.c.l.b16 %v2941
      %v3230 = vunpack.c.l.b16 %v2942
      %v3231 = vunpack.c.l.b16 %v2943
      %v3232 = vunpack.c.l.b16 %v2944
      %v3233 = vunpack.c.l.b16 %v2945
      %v3234 = vunpack.c.l.b16 %v2946
      %v3235 = vunpack.c.l.b16 %v2947
      %v3236 = vunpack.c.l.b16 %v2948
      %v3237 = vunpack.c.l.b16 %v2949
      %v3238 = vunpack.c.l.b16 %v2950
      %v3239 = vunpack.c.l.b16 %v2951
      %v3240 = vunpack.c.l.b16 %v2952
      %v3241 = vunpack.c.l.b16 %v2953
      %v3242 = vunpack.c.l.b16 %v2954
      %v3243 = vunpack.c.l.b16 %v2955
      %v3244 = vunpack.c.l.b16 %v2956
      %v3245 = vunpack.c.l.b16 %v2957
      %v3246 = vunpack.c.l.b16 %v2958
      %v3247 = vunpack.c.l.b16 %v2959
      %v3248 = vunpack.c.l.b16 %v2960
      %v3249 = vunpack.c.l.b16 %v2961
      %v3250 = vunpack.c.l.b16 %v2962
      %v3251 = vunpack.c.l.b16 %v2963
      %v3252 = vunpack.c.l.b16 %v2964
      %v3253 = vunpack.c.l.b16 %v2965
      %v3254 = vunpack.c.l.b16 %v2966
      %v3255 = vunpack.c.l.b16 %v2967
      %v3256 = vunpack.c.l.b16 %v2968
      %v3257 = vunpack.c.l.b16 %v2969
      %v3258 = vunpack.c.l.b16 %v2970
      %v3259 = vunpack.c.l.b16 %v2971
      %v3260 = vunpack.c.l.b16 %v2972
      %v3261 = vunpack.c.l.b16 %v2973
      %v3262 = vunpack.c.l.b16 %v2974
      %v3263 = vunpack.c.l.b16 %v2975
      %v3264 = vunpack.c.l.b16 %v2976
      %v3265 = vunpack.c.l.b16 %v2977
      %v3266 = vunpack.c.l.b16 %v2978
      %v3267 = vunpack.c.l.b16 %v2979
      %v3268 = vunpack.c.l.b16 %v2980
      %v3269 = vunpack.c.l.b16 %v2981
      %v3270 = vunpack.c.l.b16 %v2982
      %v3271 = vpack.c.b16 %v3128, %v3127
      %v3272 = vpack.c.b16 %v3130, %v3129
      %v3273 = vpack.c.b16 %v3132, %v3131
      %v3274 = vpack.c.b16 %v3134, %v3133
      %v3275 = vpack.c.b16 %v3136, %v3135
      %v3276 = vpack.c.b16 %v3138, %v3137
      %v3277 = vpack.c.b16 %v3140, %v3139
      %v3278 = vpack.c.b16 %v3142, %v3141
      %v3279 = vpack.c.b16 %v3144, %v3143
      %v3280 = vpack.c.b16 %v3146, %v3145
      %v3281 = vpack.c.b16 %v3148, %v3147
      %v3282 = vpack.c.b16 %v3150, %v3149
      %v3283 = vpack.c.b16 %v3152, %v3151
      %v3284 = vpack.c.b16 %v3154, %v3153
      %v3285 = vpack.c.b16 %v3156, %v3155
      %v3286 = vpack.c.b16 %v3158, %v3157
      %v3287 = vpack.c.b16 %v3160, %v3159
      %v3288 = vpack.c.b16 %v3162, %v3161
      %v3289 = vpack.c.b16 %v3164, %v3163
      %v3290 = vpack.c.b16 %v3166, %v3165
      %v3291 = vpack.c.b16 %v3168, %v3167
      %v3292 = vpack.c.b16 %v3170, %v3169
      %v3293 = vpack.c.b16 %v3172, %v3171
      %v3294 = vpack.c.b16 %v3174, %v3173
      %v3295 = vpack.c.b16 %v3176, %v3175
      %v3296 = vpack.c.b16 %v3178, %v3177
      %v3297 = vpack.c.b16 %v3180, %v3179
      %v3298 = vpack.c.b16 %v3182, %v3181
      %v3299 = vpack.c.b16 %v3184, %v3183
      %v3300 = vpack.c.b16 %v3186, %v3185
      %v3301 = vpack.c.b16 %v3188, %v3187
      %v3302 = vpack.c.b16 %v3190, %v3189
      %v3303 = vpack.c.b16 %v3192, %v3191
      %v3304 = vpack.c.b16 %v3194, %v3193
      %v3305 = vpack.c.b16 %v3196, %v3195
      %v3306 = vpack.c.b16 %v3198, %v3197
      %v3307 = vpack.c.b16 %v3200, %v3199
      %v3308 = vpack.c.b16 %v3202, %v3201
      %v3309 = vpack.c.b16 %v3204, %v3203
      %v3310 = vpack.c.b16 %v3206, %v3205
      %v3311 = vpack.c.b16 %v3208, %v3207
      %v3312 = vpack.c.b16 %v3210, %v3209
      %v3313 = vpack.c.b16 %v3212, %v3211
      %v3314 = vpack.c.b16 %v3214, %v3213
      %v3315 = vpack.c.b16 %v3216, %v3215
      %v3316 = vpack.c.b16 %v3218, %v3217
      %v3317 = vpack.c.b16 %v3220, %v3219
      %v3318 = vpack.c.b16 %v3222, %v3221
      %v3319 = vpack.c.b16 %v3224, %v3223
      %v3320 = vpack.c.b16 %v3226, %v3225
      %v3321 = vpack.c.b16 %v3228, %v3227
      %v3322 = vpack.c.b16 %v3230, %v3229
      %v3323 = vpack.c.b16 %v3232, %v3231
      %v3324 = vpack.c.b16 %v3234, %v3233
      %v3325 = vpack.c.b16 %v3236, %v3235
      %v3326 = vpack.c.b16 %v3238, %v3237
      %v3327 = vpack.c.b16 %v3240, %v3239
      %v3328 = vpack.c.b16 %v3242, %v3241
      %v3329 = vpack.c.b16 %v3244, %v3243
      %v3330 = vpack.c.b16 %v3246, %v3245
      %v3331 = vpack.c.b16 %v3248, %v3247
      %v3332 = vpack.c.b16 %v3250, %v3249
      %v3333 = vpack.c.b16 %v3252, %v3251
      %v3334 = vpack.c.b16 %v3254, %v3253
      %v3335 = vpack.c.b16 %v3256, %v3255
      %v3336 = vpack.c.b16 %v3258, %v3257
      %v3337 = vpack.c.b16 %v3260, %v3259
      %v3338 = vpack.c.b16 %v3262, %v3261
      %v3339 = vpack.c.b16 %v3264, %v3263
      %v3340 = vpack.c.b16 %v3266, %v3265
      %v3341 = vpack.c.b16 %v3268, %v3267
      %v3342 = vpack.c.b16 %v3270, %v3269
      %3415 = vmatprep.subr.bf16.mxu0 0
      %3416 = vmatpush1.bf16.msra.mxu0 %v3278
      %3417 = vmatprep.subr.bf16.mxu0 0
      %3418 = vmatpush1.bf16.msra.mxu0 %v3277
      %3419 = vmatprep.subr.bf16.mxu0 0
      %3420 = vmatpush1.bf16.msra.mxu0 %v3276
      %3421 = vmatprep.subr.bf16.mxu0 0
      %3422 = vmatpush1.bf16.msra.mxu0 %v3275
      %3423 = vmatprep.subr.bf16.mxu0 0
      %3424 = vmatpush1.bf16.msra.mxu0 %v3274
      %3425 = vmatprep.subr.bf16.mxu0 0
      %3426 = vmatpush1.bf16.msra.mxu0 %v3273
      %3427 = vmatprep.subr.bf16.mxu0 0
      %3428 = vmatpush1.bf16.msra.mxu0 %v3272
      %3429 = vmatprep.subr.bf16.mxu0 0
      %3430 = vmatpush1.bf16.msra.mxu0 %v3271
      %3431 = vmatprep.subr.bf16.mxu0 0
      %3432 = vmatpush2.bf16.msra.mxu0 %v3286
      %3433 = vmatprep.subr.bf16.mxu0 0
      %3434 = vmatpush2.bf16.msra.mxu0 %v3285
      %3435 = vmatprep.subr.bf16.mxu0 0
      %3436 = vmatpush2.bf16.msra.mxu0 %v3284
      %3437 = vmatprep.subr.bf16.mxu0 0
      %3438 = vmatpush2.bf16.msra.mxu0 %v3283
      %3439 = vmatprep.subr.bf16.mxu0 0
      %3440 = vmatpush2.bf16.msra.mxu0 %v3282
      %3441 = vmatprep.subr.bf16.mxu0 0
      %3442 = vmatpush2.bf16.msra.mxu0 %v3281
      %3443 = vmatprep.subr.bf16.mxu0 0
      %3444 = vmatpush2.bf16.msra.mxu0 %v3280
      %3445 = vmatprep.subr.bf16.mxu0 0
      %3446 = vmatpush2.bf16.msra.mxu0 %v3279
      %3447 = vmatprep.mubr.bf16.mxu0 %v2508
      %3448 = vmatmul.mubr.bf16.gmra.mxu0 %v2461
      %v3449 = vpop.f32.mrf.mxu0
      %v3450 = vadd.f32 0.0, %v3449
      %v3451 = vpop.f32.mrf.mxu0
      %v3452 = vpop.f32.mrf.mxu0
      %v3453 = vadd.f32 0.0, %v3452
      %v3454 = vpop.f32.mrf.mxu0
      %3455 = vmatprep.mubr.bf16.mxu0 %v2520
      %3456 = vmatmul.mubr.bf16.gmra.mxu0 %v2463
      %v3457 = vpop.f32.mrf.mxu0
      %v3458 = vadd.f32 0.0, %v3457
      %v3459 = vpop.f32.mrf.mxu0
      %v3460 = vpop.f32.mrf.mxu0
      %v3461 = vadd.f32 0.0, %v3460
      %v3462 = vpop.f32.mrf.mxu0
      %3463 = vmatprep.mubr.bf16.mxu0 %v2532
      %3464 = vmatmul.mubr.bf16.gmra.mxu0 %v2465
      %v3465 = vpop.f32.mrf.mxu0
      %v3466 = vadd.f32 0.0, %v3465
      %v3467 = vpop.f32.mrf.mxu0
      %v3468 = vpop.f32.mrf.mxu0
      %v3469 = vadd.f32 0.0, %v3468
      %v3470 = vpop.f32.mrf.mxu0
      %3471 = vmatprep.mubr.bf16.mxu0 %v2544
      %3472 = vmatmul.mubr.bf16.gmra.mxu0 %v2467
      %v3473 = vpop.f32.mrf.mxu0
      %v3474 = vadd.f32 0.0, %v3473
      %v3475 = vpop.f32.mrf.mxu0
      %v3476 = vpop.f32.mrf.mxu0
      %v3477 = vadd.f32 0.0, %v3476
      %v3478 = vpop.f32.mrf.mxu0
      %3479 = vmatprep.mubr.bf16.mxu0 %v2556
      %3480 = vmatmul.mubr.bf16.gmra.mxu0 %v2469
      %v3481 = vpop.f32.mrf.mxu0
      %v3482 = vadd.f32 0.0, %v3481
      %v3483 = vpop.f32.mrf.mxu0
      %v3484 = vpop.f32.mrf.mxu0
      %v3485 = vadd.f32 0.0, %v3484
      %v3486 = vpop.f32.mrf.mxu0
      %3487 = vmatprep.mubr.bf16.mxu0 %v2568
      %3488 = vmatmul.mubr.bf16.gmra.mxu0 %v2471
      %v3489 = vpop.f32.mrf.mxu0
      %v3490 = vadd.f32 0.0, %v3489
      %v3491 = vpop.f32.mrf.mxu0
      %v3492 = vpop.f32.mrf.mxu0
      %v3493 = vadd.f32 0.0, %v3492
      %v3494 = vpop.f32.mrf.mxu0
      %3495 = vmatprep.mubr.bf16.mxu0 %v2580
      %3496 = vmatmul.mubr.bf16.gmra.mxu0 %v2473
      %v3497 = vpop.f32.mrf.mxu0
      %v3498 = vadd.f32 0.0, %v3497
      %v3499 = vpop.f32.mrf.mxu0
      %v3500 = vpop.f32.mrf.mxu0
      %v3501 = vadd.f32 0.0, %v3500
      %v3502 = vpop.f32.mrf.mxu0
      %3503 = vmatprep.mubr.bf16.mxu0 %v2592
      %3504 = vmatmul.mubr.bf16.gmra.mxu0 %v2475
      %v3505 = vpop.f32.mrf.mxu0
      %v3506 = vadd.f32 0.0, %v3505
      %v3507 = vpop.f32.mrf.mxu0
      %v3508 = vpop.f32.mrf.mxu0
      %v3509 = vadd.f32 0.0, %v3508
      %v3510 = vpop.f32.mrf.mxu0
      %3511 = vmatprep.mubr.bf16.mxu0 %v2604
      %3512 = vmatmul.mubr.bf16.gmra.mxu0 %v2477
      %v3513 = vpop.f32.mrf.mxu0
      %v3514 = vadd.f32 0.0, %v3513
      %v3515 = vpop.f32.mrf.mxu0
      %v3516 = vpop.f32.mrf.mxu0
      %v3517 = vadd.f32 0.0, %v3516
      %v3518 = vpop.f32.mrf.mxu0
      %3519 = vmatprep.mubr.bf16.mxu0 %v2616
      %3520 = vmatmul.mubr.bf16.gmra.mxu0 %v2479
      %v3521 = vpop.f32.mrf.mxu0
      %v3522 = vadd.f32 0.0, %v3521
      %v3523 = vpop.f32.mrf.mxu0
      %v3524 = vpop.f32.mrf.mxu0
      %v3525 = vadd.f32 0.0, %v3524
      %v3526 = vpop.f32.mrf.mxu0
      %3527 = vmatprep.mubr.bf16.mxu0 %v2628
      %3528 = vmatmul.mubr.bf16.gmra.mxu0 %v2481
      %v3529 = vpop.f32.mrf.mxu0
      %v3530 = vadd.f32 0.0, %v3529
      %v3531 = vpop.f32.mrf.mxu0
      %v3532 = vpop.f32.mrf.mxu0
      %v3533 = vadd.f32 0.0, %v3532
      %v3534 = vpop.f32.mrf.mxu0
      %3535 = vmatprep.mubr.bf16.mxu0 %v2640
      %3536 = vmatmul.mubr.bf16.gmra.mxu0 %v2483
      %v3537 = vpop.f32.mrf.mxu0
      %v3538 = vadd.f32 0.0, %v3537
      %v3539 = vpop.f32.mrf.mxu0
      %v3540 = vpop.f32.mrf.mxu0
      %v3541 = vadd.f32 0.0, %v3540
      %v3542 = vpop.f32.mrf.mxu0
      %3543 = vmatprep.mubr.bf16.mxu0 %v2652
      %3544 = vmatmul.mubr.bf16.gmra.mxu0 %v2485
      %v3545 = vpop.f32.mrf.mxu0
      %v3546 = vadd.f32 0.0, %v3545
      %v3547 = vpop.f32.mrf.mxu0
      %v3548 = vpop.f32.mrf.mxu0
      %v3549 = vadd.f32 0.0, %v3548
      %v3550 = vpop.f32.mrf.mxu0
      %3551 = vmatprep.mubr.bf16.mxu0 %v2664
      %3552 = vmatmul.mubr.bf16.gmra.mxu0 %v2487
      %v3553 = vpop.f32.mrf.mxu0
      %v3554 = vadd.f32 0.0, %v3553
      %v3555 = vpop.f32.mrf.mxu0
      %v3556 = vpop.f32.mrf.mxu0
      %v3557 = vadd.f32 0.0, %v3556
      %v3558 = vpop.f32.mrf.mxu0
      %3559 = vmatprep.mubr.bf16.mxu0 %v2676
      %3560 = vmatmul.mubr.bf16.gmra.mxu0 %v2489
      %v3561 = vpop.f32.mrf.mxu0
      %v3562 = vadd.f32 0.0, %v3561
      %v3563 = vpop.f32.mrf.mxu0
      %v3564 = vpop.f32.mrf.mxu0
      %v3565 = vadd.f32 0.0, %v3564
      %v3566 = vpop.f32.mrf.mxu0
      %3567 = vmatprep.mubr.bf16.mxu0 %v2688
      %3568 = vmatmul.mubr.bf16.gmra.mxu0 %v2491
      %v3569 = vpop.f32.mrf.mxu0
      %v3570 = vadd.f32 0.0, %v3569
      %v3571 = vpop.f32.mrf.mxu0
      %v3572 = vpop.f32.mrf.mxu0
      %v3573 = vadd.f32 0.0, %v3572
      %v3574 = vpop.f32.mrf.mxu0
      %3575 = vdwg.mxu0
      %3576 = vmatprep.subr.bf16.mxu0 0
      %3577 = vmatpush1.bf16.msra.mxu0 %v3294
      %3578 = vmatprep.subr.bf16.mxu0 0
      %3579 = vmatpush1.bf16.msra.mxu0 %v3293
      %3580 = vmatprep.subr.bf16.mxu0 0
      %3581 = vmatpush1.bf16.msra.mxu0 %v3292
      %3582 = vmatprep.subr.bf16.mxu0 0
      %3583 = vmatpush1.bf16.msra.mxu0 %v3291
      %3584 = vmatprep.subr.bf16.mxu0 0
      %3585 = vmatpush1.bf16.msra.mxu0 %v3290
      %3586 = vmatprep.subr.bf16.mxu0 0
      %3587 = vmatpush1.bf16.msra.mxu0 %v3289
      %3588 = vmatprep.subr.bf16.mxu0 0
      %3589 = vmatpush1.bf16.msra.mxu0 %v3288
      %3590 = vmatprep.subr.bf16.mxu0 0
      %3591 = vmatpush1.bf16.msra.mxu0 %v3287
      %3592 = vmatprep.subr.bf16.mxu0 0
      %3593 = vmatpush2.bf16.msra.mxu0 %v3302
      %3594 = vmatprep.subr.bf16.mxu0 0
      %3595 = vmatpush2.bf16.msra.mxu0 %v3301
      %3596 = vmatprep.subr.bf16.mxu0 0
      %3597 = vmatpush2.bf16.msra.mxu0 %v3300
      %3598 = vmatprep.subr.bf16.mxu0 0
      %3599 = vmatpush2.bf16.msra.mxu0 %v3299
      %3600 = vmatprep.subr.bf16.mxu0 0
      %3601 = vmatpush2.bf16.msra.mxu0 %v3298
      %3602 = vmatprep.subr.bf16.mxu0 0
      %3603 = vmatpush2.bf16.msra.mxu0 %v3297
      %3604 = vmatprep.subr.bf16.mxu0 0
      %3605 = vmatpush2.bf16.msra.mxu0 %v3296
      %3606 = vmatprep.subr.bf16.mxu0 0
      %3607 = vmatpush2.bf16.msra.mxu0 %v3295
      %3608 = vmatprep.mubr.bf16.mxu0 %v2463
      %3609 = vmatmul.mubr.bf16.gmra.mxu0 %v2739
      %v3610 = vpop.f32.mrf.mxu0
      %v3611 = vadd.f32 %v3450, %v3610
      %v3612 = vpop.f32.mrf.mxu0
      %v3613 = vpop.f32.mrf.mxu0
      %v3614 = vadd.f32 %v3453, %v3613
      %v3615 = vpop.f32.mrf.mxu0
      %3616 = vmatprep.mubr.bf16.mxu0 %v2465
      %3617 = vmatmul.mubr.bf16.gmra.mxu0 %v2742
      %v3618 = vpop.f32.mrf.mxu0
      %v3619 = vadd.f32 %v3458, %v3618
      %v3620 = vpop.f32.mrf.mxu0
      %v3621 = vpop.f32.mrf.mxu0
      %v3622 = vadd.f32 %v3461, %v3621
      %v3623 = vpop.f32.mrf.mxu0
      %3624 = vmatprep.mubr.bf16.mxu0 %v2467
      %3625 = vmatmul.mubr.bf16.gmra.mxu0 %v2745
      %v3626 = vpop.f32.mrf.mxu0
      %v3627 = vadd.f32 %v3466, %v3626
      %v3628 = vpop.f32.mrf.mxu0
      %v3629 = vpop.f32.mrf.mxu0
      %v3630 = vadd.f32 %v3469, %v3629
      %v3631 = vpop.f32.mrf.mxu0
      %3632 = vmatprep.mubr.bf16.mxu0 %v2469
      %3633 = vmatmul.mubr.bf16.gmra.mxu0 %v2748
      %v3634 = vpop.f32.mrf.mxu0
      %v3635 = vadd.f32 %v3474, %v3634
      %v3636 = vpop.f32.mrf.mxu0
      %v3637 = vpop.f32.mrf.mxu0
      %v3638 = vadd.f32 %v3477, %v3637
      %v3639 = vpop.f32.mrf.mxu0
      %3640 = vmatprep.mubr.bf16.mxu0 %v2471
      %3641 = vmatmul.mubr.bf16.gmra.mxu0 %v2751
      %v3642 = vpop.f32.mrf.mxu0
      %v3643 = vadd.f32 %v3482, %v3642
      %v3644 = vpop.f32.mrf.mxu0
      %v3645 = vpop.f32.mrf.mxu0
      %v3646 = vadd.f32 %v3485, %v3645
      %v3647 = vpop.f32.mrf.mxu0
      %3648 = vmatprep.mubr.bf16.mxu0 %v2473
      %3649 = vmatmul.mubr.bf16.gmra.mxu0 %v2754
      %v3650 = vpop.f32.mrf.mxu0
      %v3651 = vadd.f32 %v3490, %v3650
      %v3652 = vpop.f32.mrf.mxu0
      %v3653 = vpop.f32.mrf.mxu0
      %v3654 = vadd.f32 %v3493, %v3653
      %v3655 = vpop.f32.mrf.mxu0
      %3656 = vmatprep.mubr.bf16.mxu0 %v2475
      %3657 = vmatmul.mubr.bf16.gmra.mxu0 %v2757
      %v3658 = vpop.f32.mrf.mxu0
      %v3659 = vadd.f32 %v3498, %v3658
      %v3660 = vpop.f32.mrf.mxu0
      %v3661 = vpop.f32.mrf.mxu0
      %v3662 = vadd.f32 %v3501, %v3661
      %v3663 = vpop.f32.mrf.mxu0
      %3664 = vmatprep.mubr.bf16.mxu0 %v2477
      %3665 = vmatmul.mubr.bf16.gmra.mxu0 %v2760
      %v3666 = vpop.f32.mrf.mxu0
      %v3667 = vadd.f32 %v3506, %v3666
      %v3668 = vpop.f32.mrf.mxu0
      %v3669 = vpop.f32.mrf.mxu0
      %v3670 = vadd.f32 %v3509, %v3669
      %v3671 = vpop.f32.mrf.mxu0
      %3672 = vmatprep.mubr.bf16.mxu0 %v2479
      %3673 = vmatmul.mubr.bf16.gmra.mxu0 %v2763
      %v3674 = vpop.f32.mrf.mxu0
      %v3675 = vadd.f32 %v3514, %v3674
      %v3676 = vpop.f32.mrf.mxu0
      %v3677 = vpop.f32.mrf.mxu0
      %v3678 = vadd.f32 %v3517, %v3677
      %v3679 = vpop.f32.mrf.mxu0
      %3680 = vmatprep.mubr.bf16.mxu0 %v2481
      %3681 = vmatmul.mubr.bf16.gmra.mxu0 %v2766
      %v3682 = vpop.f32.mrf.mxu0
      %v3683 = vadd.f32 %v3522, %v3682
      %v3684 = vpop.f32.mrf.mxu0
      %v3685 = vpop.f32.mrf.mxu0
      %v3686 = vadd.f32 %v3525, %v3685
      %v3687 = vpop.f32.mrf.mxu0
      %3688 = vmatprep.mubr.bf16.mxu0 %v2483
      %3689 = vmatmul.mubr.bf16.gmra.mxu0 %v2769
      %v3690 = vpop.f32.mrf.mxu0
      %v3691 = vadd.f32 %v3530, %v3690
      %v3692 = vpop.f32.mrf.mxu0
      %v3693 = vpop.f32.mrf.mxu0
      %v3694 = vadd.f32 %v3533, %v3693
      %v3695 = vpop.f32.mrf.mxu0
      %3696 = vmatprep.mubr.bf16.mxu0 %v2485
      %3697 = vmatmul.mubr.bf16.gmra.mxu0 %v2772
      %v3698 = vpop.f32.mrf.mxu0
      %v3699 = vadd.f32 %v3538, %v3698
      %v3700 = vpop.f32.mrf.mxu0
      %v3701 = vpop.f32.mrf.mxu0
      %v3702 = vadd.f32 %v3541, %v3701
      %v3703 = vpop.f32.mrf.mxu0
      %3704 = vmatprep.mubr.bf16.mxu0 %v2487
      %3705 = vmatmul.mubr.bf16.gmra.mxu0 %v2775
      %v3706 = vpop.f32.mrf.mxu0
      %v3707 = vadd.f32 %v3546, %v3706
      %v3708 = vpop.f32.mrf.mxu0
      %v3709 = vpop.f32.mrf.mxu0
      %v3710 = vadd.f32 %v3549, %v3709
      %v3711 = vpop.f32.mrf.mxu0
      %3712 = vmatprep.mubr.bf16.mxu0 %v2489
      %3713 = vmatmul.mubr.bf16.gmra.mxu0 %v2778
      %v3714 = vpop.f32.mrf.mxu0
      %v3715 = vadd.f32 %v3554, %v3714
      %v3716 = vpop.f32.mrf.mxu0
      %v3717 = vpop.f32.mrf.mxu0
      %v3718 = vadd.f32 %v3557, %v3717
      %v3719 = vpop.f32.mrf.mxu0
      %3720 = vmatprep.mubr.bf16.mxu0 %v2491
      %3721 = vmatmul.mubr.bf16.gmra.mxu0 %v2781
      %v3722 = vpop.f32.mrf.mxu0
      %v3723 = vadd.f32 %v3562, %v3722
      %v3724 = vpop.f32.mrf.mxu0
      %v3725 = vpop.f32.mrf.mxu0
      %v3726 = vadd.f32 %v3565, %v3725
      %v3727 = vpop.f32.mrf.mxu0
      %3728 = vmatprep.mubr.bf16.mxu0 %v2493
      %3729 = vmatmul.mubr.bf16.gmra.mxu0 %v2784
      %v3730 = vpop.f32.mrf.mxu0
      %v3731 = vadd.f32 %v3570, %v3730
      %v3732 = vpop.f32.mrf.mxu0
      %v3733 = vpop.f32.mrf.mxu0
      %v3734 = vadd.f32 %v3573, %v3733
      %v3735 = vpop.f32.mrf.mxu0
      %3736 = vdwg.mxu0
      %3737 = vmatprep.subr.bf16.mxu0 0
      %3738 = vmatpush1.bf16.msra.mxu0 %v3310
      %3739 = vmatprep.subr.bf16.mxu0 0
      %3740 = vmatpush1.bf16.msra.mxu0 %v3309
      %3741 = vmatprep.subr.bf16.mxu0 0
      %3742 = vmatpush1.bf16.msra.mxu0 %v3308
      %3743 = vmatprep.subr.bf16.mxu0 0
      %3744 = vmatpush1.bf16.msra.mxu0 %v3307
      %3745 = vmatprep.subr.bf16.mxu0 0
      %3746 = vmatpush1.bf16.msra.mxu0 %v3306
      %3747 = vmatprep.subr.bf16.mxu0 0
      %3748 = vmatpush1.bf16.msra.mxu0 %v3305
      %3749 = vmatprep.subr.bf16.mxu0 0
      %3750 = vmatpush1.bf16.msra.mxu0 %v3304
      %3751 = vmatprep.subr.bf16.mxu0 0
      %3752 = vmatpush1.bf16.msra.mxu0 %v3303
      %3753 = vmatprep.subr.bf16.mxu0 0
      %3754 = vmatpush2.bf16.msra.mxu0 %v3318
      %3755 = vmatprep.subr.bf16.mxu0 0
      %3756 = vmatpush2.bf16.msra.mxu0 %v3317
      %3757 = vmatprep.subr.bf16.mxu0 0
      %3758 = vmatpush2.bf16.msra.mxu0 %v3316
      %3759 = vmatprep.subr.bf16.mxu0 0
      %3760 = vmatpush2.bf16.msra.mxu0 %v3315
      %3761 = vmatprep.subr.bf16.mxu0 0
      %3762 = vmatpush2.bf16.msra.mxu0 %v3314
      %3763 = vmatprep.subr.bf16.mxu0 0
      %3764 = vmatpush2.bf16.msra.mxu0 %v3313
      %3765 = vmatprep.subr.bf16.mxu0 0
      %3766 = vmatpush2.bf16.msra.mxu0 %v3312
      %3767 = vmatprep.subr.bf16.mxu0 0
      %3768 = vmatpush2.bf16.msra.mxu0 %v3311
      %3769 = vmatprep.mubr.bf16.mxu0 %v2742
      %3770 = vmatmul.mubr.bf16.gmra.mxu0 %v2520
      %v3771 = vpop.f32.mrf.mxu0
      %v3772 = vadd.f32 %v3611, %v3771
      %v3773 = vpop.f32.mrf.mxu0
      %v3774 = vpop.f32.mrf.mxu0
      %v3775 = vadd.f32 %v3614, %v3774
      %v3776 = vpop.f32.mrf.mxu0
      %3777 = vmatprep.mubr.bf16.mxu0 %v2745
      %3778 = vmatmul.mubr.bf16.gmra.mxu0 %v2532
      %v3779 = vpop.f32.mrf.mxu0
      %v3780 = vadd.f32 %v3619, %v3779
      %v3781 = vpop.f32.mrf.mxu0
      %v3782 = vpop.f32.mrf.mxu0
      %v3783 = vadd.f32 %v3622, %v3782
      %v3784 = vpop.f32.mrf.mxu0
      %3785 = vmatprep.mubr.bf16.mxu0 %v2748
      %3786 = vmatmul.mubr.bf16.gmra.mxu0 %v2544
      %v3787 = vpop.f32.mrf.mxu0
      %v3788 = vadd.f32 %v3627, %v3787
      %v3789 = vpop.f32.mrf.mxu0
      %v3790 = vpop.f32.mrf.mxu0
      %v3791 = vadd.f32 %v3630, %v3790
      %v3792 = vpop.f32.mrf.mxu0
      %3793 = vmatprep.mubr.bf16.mxu0 %v2751
      %3794 = vmatmul.mubr.bf16.gmra.mxu0 %v2556
      %v3795 = vpop.f32.mrf.mxu0
      %v3796 = vadd.f32 %v3635, %v3795
      %v3797 = vpop.f32.mrf.mxu0
      %v3798 = vpop.f32.mrf.mxu0
      %v3799 = vadd.f32 %v3638, %v3798
      %v3800 = vpop.f32.mrf.mxu0
      %3801 = vmatprep.mubr.bf16.mxu0 %v2754
      %3802 = vmatmul.mubr.bf16.gmra.mxu0 %v2568
      %v3803 = vpop.f32.mrf.mxu0
      %v3804 = vadd.f32 %v3643, %v3803
      %v3805 = vpop.f32.mrf.mxu0
      %v3806 = vpop.f32.mrf.mxu0
      %v3807 = vadd.f32 %v3646, %v3806
      %v3808 = vpop.f32.mrf.mxu0
      %3809 = vmatprep.mubr.bf16.mxu0 %v2757
      %3810 = vmatmul.mubr.bf16.gmra.mxu0 %v2580
      %v3811 = vpop.f32.mrf.mxu0
      %v3812 = vadd.f32 %v3651, %v3811
      %v3813 = vpop.f32.mrf.mxu0
      %v3814 = vpop.f32.mrf.mxu0
      %v3815 = vadd.f32 %v3654, %v3814
      %v3816 = vpop.f32.mrf.mxu0
      %3817 = vmatprep.mubr.bf16.mxu0 %v2760
      %3818 = vmatmul.mubr.bf16.gmra.mxu0 %v2592
      %v3819 = vpop.f32.mrf.mxu0
      %v3820 = vadd.f32 %v3659, %v3819
      %v3821 = vpop.f32.mrf.mxu0
      %v3822 = vpop.f32.mrf.mxu0
      %v3823 = vadd.f32 %v3662, %v3822
      %v3824 = vpop.f32.mrf.mxu0
      %3825 = vmatprep.mubr.bf16.mxu0 %v2763
      %3826 = vmatmul.mubr.bf16.gmra.mxu0 %v2604
      %v3827 = vpop.f32.mrf.mxu0
      %v3828 = vadd.f32 %v3667, %v3827
      %v3829 = vpop.f32.mrf.mxu0
      %v3830 = vpop.f32.mrf.mxu0
      %v3831 = vadd.f32 %v3670, %v3830
      %v3832 = vpop.f32.mrf.mxu0
      %3833 = vmatprep.mubr.bf16.mxu0 %v2766
      %3834 = vmatmul.mubr.bf16.gmra.mxu0 %v2616
      %v3835 = vpop.f32.mrf.mxu0
      %v3836 = vadd.f32 %v3675, %v3835
      %v3837 = vpop.f32.mrf.mxu0
      %v3838 = vpop.f32.mrf.mxu0
      %v3839 = vadd.f32 %v3678, %v3838
      %v3840 = vpop.f32.mrf.mxu0
      %3841 = vmatprep.mubr.bf16.mxu0 %v2769
      %3842 = vmatmul.mubr.bf16.gmra.mxu0 %v2628
      %v3843 = vpop.f32.mrf.mxu0
      %v3844 = vadd.f32 %v3683, %v3843
      %v3845 = vpop.f32.mrf.mxu0
      %v3846 = vpop.f32.mrf.mxu0
      %v3847 = vadd.f32 %v3686, %v3846
      %v3848 = vpop.f32.mrf.mxu0
      %3849 = vmatprep.mubr.bf16.mxu0 %v2772
      %3850 = vmatmul.mubr.bf16.gmra.mxu0 %v2640
      %v3851 = vpop.f32.mrf.mxu0
      %v3852 = vadd.f32 %v3691, %v3851
      %v3853 = vpop.f32.mrf.mxu0
      %v3854 = vpop.f32.mrf.mxu0
      %v3855 = vadd.f32 %v3694, %v3854
      %v3856 = vpop.f32.mrf.mxu0
      %3857 = vmatprep.mubr.bf16.mxu0 %v2775
      %3858 = vmatmul.mubr.bf16.gmra.mxu0 %v2652
      %v3859 = vpop.f32.mrf.mxu0
      %v3860 = vadd.f32 %v3699, %v3859
      %v3861 = vpop.f32.mrf.mxu0
      %v3862 = vpop.f32.mrf.mxu0
      %v3863 = vadd.f32 %v3702, %v3862
      %v3864 = vpop.f32.mrf.mxu0
      %3865 = vmatprep.mubr.bf16.mxu0 %v2778
      %3866 = vmatmul.mubr.bf16.gmra.mxu0 %v2664
      %v3867 = vpop.f32.mrf.mxu0
      %v3868 = vadd.f32 %v3707, %v3867
      %v3869 = vpop.f32.mrf.mxu0
      %v3870 = vpop.f32.mrf.mxu0
      %v3871 = vadd.f32 %v3710, %v3870
      %v3872 = vpop.f32.mrf.mxu0
      %3873 = vmatprep.mubr.bf16.mxu0 %v2781
      %3874 = vmatmul.mubr.bf16.gmra.mxu0 %v2676
      %v3875 = vpop.f32.mrf.mxu0
      %v3876 = vadd.f32 %v3715, %v3875
      %v3877 = vpop.f32.mrf.mxu0
      %v3878 = vpop.f32.mrf.mxu0
      %v3879 = vadd.f32 %v3718, %v3878
      %v3880 = vpop.f32.mrf.mxu0
      %3881 = vmatprep.mubr.bf16.mxu0 %v2784
      %3882 = vmatmul.mubr.bf16.gmra.mxu0 %v2688
      %v3883 = vpop.f32.mrf.mxu0
      %v3884 = vadd.f32 %v3723, %v3883
      %v3885 = vpop.f32.mrf.mxu0
      %v3886 = vpop.f32.mrf.mxu0
      %v3887 = vadd.f32 %v3726, %v3886
      %v3888 = vpop.f32.mrf.mxu0
      %3889 = vmatprep.mubr.bf16.mxu0 %v2818
      %3890 = vmatmul.mubr.bf16.gmra.mxu0 %v2812
      %v3891 = vpop.f32.mrf.mxu0
      %v3892 = vadd.f32 %v3731, %v3891
      %v3893 = vpop.f32.mrf.mxu0
      %v3894 = vpop.f32.mrf.mxu0
      %v3895 = vadd.f32 %v3734, %v3894
      %v3896 = vpop.f32.mrf.mxu0
      %3897 = vdwg.mxu0
      %3898 = vmatprep.subr.bf16.mxu0 0
      %3899 = vmatpush1.bf16.msra.mxu0 %v3326
      %3900 = vmatprep.subr.bf16.mxu0 0
      %3901 = vmatpush1.bf16.msra.mxu0 %v3325
      %3902 = vmatprep.subr.bf16.mxu0 0
      %3903 = vmatpush1.bf16.msra.mxu0 %v3324
      %3904 = vmatprep.subr.bf16.mxu0 0
      %3905 = vmatpush1.bf16.msra.mxu0 %v3323
      %3906 = vmatprep.subr.bf16.mxu0 0
      %3907 = vmatpush1.bf16.msra.mxu0 %v3322
      %3908 = vmatprep.subr.bf16.mxu0 0
      %3909 = vmatpush1.bf16.msra.mxu0 %v3321
      %3910 = vmatprep.subr.bf16.mxu0 0
      %3911 = vmatpush1.bf16.msra.mxu0 %v3320
      %3912 = vmatprep.subr.bf16.mxu0 0
      %3913 = vmatpush1.bf16.msra.mxu0 %v3319
      %3914 = vmatprep.subr.bf16.mxu0 0
      %3915 = vmatpush2.bf16.msra.mxu0 %v3334
      %3916 = vmatprep.subr.bf16.mxu0 0
      %3917 = vmatpush2.bf16.msra.mxu0 %v3333
      %3918 = vmatprep.subr.bf16.mxu0 0
      %3919 = vmatpush2.bf16.msra.mxu0 %v3332
      %3920 = vmatprep.subr.bf16.mxu0 0
      %3921 = vmatpush2.bf16.msra.mxu0 %v3331
      %3922 = vmatprep.subr.bf16.mxu0 0
      %3923 = vmatpush2.bf16.msra.mxu0 %v3330
      %3924 = vmatprep.subr.bf16.mxu0 0
      %3925 = vmatpush2.bf16.msra.mxu0 %v3329
      %3926 = vmatprep.subr.bf16.mxu0 0
      %3927 = vmatpush2.bf16.msra.mxu0 %v3328
      %3928 = vmatprep.subr.bf16.mxu0 0
      %3929 = vmatpush2.bf16.msra.mxu0 %v3327
      %3930 = vmatprep.mubr.bf16.mxu0 %v2532
      %3931 = vmatmul.mubr.bf16.gmra.mxu0 %v2465
      %v3932 = vpop.f32.mrf.mxu0
      %v3933 = vadd.f32 %v3772, %v3932
      %v3934 = vpop.f32.mrf.mxu0
      %v3935 = vpop.f32.mrf.mxu0
      %v3936 = vadd.f32 %v3775, %v3935
      %v3937 = vpop.f32.mrf.mxu0
      %3938 = vmatprep.mubr.bf16.mxu0 %v2544
      %3939 = vmatmul.mubr.bf16.gmra.mxu0 %v2467
      %v3940 = vpop.f32.mrf.mxu0
      %v3941 = vadd.f32 %v3780, %v3940
      %v3942 = vpop.f32.mrf.mxu0
      %v3943 = vpop.f32.mrf.mxu0
      %v3944 = vadd.f32 %v3783, %v3943
      %v3945 = vpop.f32.mrf.mxu0
      %3946 = vmatprep.mubr.bf16.mxu0 %v2556
      %3947 = vmatmul.mubr.bf16.gmra.mxu0 %v2469
      %v3948 = vpop.f32.mrf.mxu0
      %v3949 = vadd.f32 %v3788, %v3948
      %v3950 = vpop.f32.mrf.mxu0
      %v3951 = vpop.f32.mrf.mxu0
      %v3952 = vadd.f32 %v3791, %v3951
      %v3953 = vpop.f32.mrf.mxu0
      %3954 = vmatprep.mubr.bf16.mxu0 %v2568
      %3955 = vmatmul.mubr.bf16.gmra.mxu0 %v2471
      %v3956 = vpop.f32.mrf.mxu0
      %v3957 = vadd.f32 %v3796, %v3956
      %v3958 = vpop.f32.mrf.mxu0
      %v3959 = vpop.f32.mrf.mxu0
      %v3960 = vadd.f32 %v3799, %v3959
      %v3961 = vpop.f32.mrf.mxu0
      %3962 = vmatprep.mubr.bf16.mxu0 %v2580
      %3963 = vmatmul.mubr.bf16.gmra.mxu0 %v2473
      %v3964 = vpop.f32.mrf.mxu0
      %v3965 = vadd.f32 %v3804, %v3964
      %v3966 = vpop.f32.mrf.mxu0
      %v3967 = vpop.f32.mrf.mxu0
      %v3968 = vadd.f32 %v3807, %v3967
      %v3969 = vpop.f32.mrf.mxu0
      %3970 = vmatprep.mubr.bf16.mxu0 %v2592
      %3971 = vmatmul.mubr.bf16.gmra.mxu0 %v2475
      %v3972 = vpop.f32.mrf.mxu0
      %v3973 = vadd.f32 %v3812, %v3972
      %v3974 = vpop.f32.mrf.mxu0
      %v3975 = vpop.f32.mrf.mxu0
      %v3976 = vadd.f32 %v3815, %v3975
      %v3977 = vpop.f32.mrf.mxu0
      %3978 = vmatprep.mubr.bf16.mxu0 %v2604
      %3979 = vmatmul.mubr.bf16.gmra.mxu0 %v2477
      %v3980 = vpop.f32.mrf.mxu0
      %v3981 = vadd.f32 %v3820, %v3980
      %v3982 = vpop.f32.mrf.mxu0
      %v3983 = vpop.f32.mrf.mxu0
      %v3984 = vadd.f32 %v3823, %v3983
      %v3985 = vpop.f32.mrf.mxu0
      %3986 = vmatprep.mubr.bf16.mxu0 %v2616
      %3987 = vmatmul.mubr.bf16.gmra.mxu0 %v2479
      %v3988 = vpop.f32.mrf.mxu0
      %v3989 = vadd.f32 %v3828, %v3988
      %v3990 = vpop.f32.mrf.mxu0
      %v3991 = vpop.f32.mrf.mxu0
      %v3992 = vadd.f32 %v3831, %v3991
      %v3993 = vpop.f32.mrf.mxu0
      %3994 = vmatprep.mubr.bf16.mxu0 %v2628
      %3995 = vmatmul.mubr.bf16.gmra.mxu0 %v2481
      %v3996 = vpop.f32.mrf.mxu0
      %v3997 = vadd.f32 %v3836, %v3996
      %v3998 = vpop.f32.mrf.mxu0
      %v3999 = vpop.f32.mrf.mxu0
      %v4000 = vadd.f32 %v3839, %v3999
      %v4001 = vpop.f32.mrf.mxu0
      %4002 = vmatprep.mubr.bf16.mxu0 %v2640
      %4003 = vmatmul.mubr.bf16.gmra.mxu0 %v2483
      %v4004 = vpop.f32.mrf.mxu0
      %v4005 = vadd.f32 %v3844, %v4004
      %v4006 = vpop.f32.mrf.mxu0
      %v4007 = vpop.f32.mrf.mxu0
      %v4008 = vadd.f32 %v3847, %v4007
      %v4009 = vpop.f32.mrf.mxu0
      %4010 = vmatprep.mubr.bf16.mxu0 %v2652
      %4011 = vmatmul.mubr.bf16.gmra.mxu0 %v2485
      %v4012 = vpop.f32.mrf.mxu0
      %v4013 = vadd.f32 %v3852, %v4012
      %v4014 = vpop.f32.mrf.mxu0
      %v4015 = vpop.f32.mrf.mxu0
      %v4016 = vadd.f32 %v3855, %v4015
      %v4017 = vpop.f32.mrf.mxu0
      %4018 = vmatprep.mubr.bf16.mxu0 %v2664
      %4019 = vmatmul.mubr.bf16.gmra.mxu0 %v2487
      %v4020 = vpop.f32.mrf.mxu0
      %v4021 = vadd.f32 %v3860, %v4020
      %v4022 = vpop.f32.mrf.mxu0
      %v4023 = vpop.f32.mrf.mxu0
      %v4024 = vadd.f32 %v3863, %v4023
      %v4025 = vpop.f32.mrf.mxu0
      %4026 = vmatprep.mubr.bf16.mxu0 %v2676
      %4027 = vmatmul.mubr.bf16.gmra.mxu0 %v2489
      %v4028 = vpop.f32.mrf.mxu0
      %v4029 = vadd.f32 %v3868, %v4028
      %v4030 = vpop.f32.mrf.mxu0
      %v4031 = vpop.f32.mrf.mxu0
      %v4032 = vadd.f32 %v3871, %v4031
      %v4033 = vpop.f32.mrf.mxu0
      %4034 = vmatprep.mubr.bf16.mxu0 %v2688
      %4035 = vmatmul.mubr.bf16.gmra.mxu0 %v2491
      %v4036 = vpop.f32.mrf.mxu0
      %v4037 = vadd.f32 %v3876, %v4036
      %v4038 = vpop.f32.mrf.mxu0
      %v4039 = vpop.f32.mrf.mxu0
      %v4040 = vadd.f32 %v3879, %v4039
      %v4041 = vpop.f32.mrf.mxu0
      %4042 = vmatprep.mubr.bf16.mxu0 %v2812
      %4043 = vmatmul.mubr.bf16.gmra.mxu0 %v2493
      %v4044 = vpop.f32.mrf.mxu0
      %v4045 = vadd.f32 %v3884, %v4044
      %v4046 = vpop.f32.mrf.mxu0
      %v4047 = vpop.f32.mrf.mxu0
      %v4048 = vadd.f32 %v3887, %v4047
      %v4049 = vpop.f32.mrf.mxu0
      %4050 = vmatprep.mubr.bf16.mxu0 %v2831
      %4051 = vmatmul.mubr.bf16.gmra.mxu0 %v2495
      %v4052 = vpop.f32.mrf.mxu0
      %v4053 = vadd.f32 %v3892, %v4052
      %v4054 = vpop.f32.mrf.mxu0
      %v4055 = vpop.f32.mrf.mxu0
      %v4056 = vadd.f32 %v3895, %v4055
      %v4057 = vpop.f32.mrf.mxu0
      %4058 = vdwg.mxu0
      %4059 = vmatprep.subr.bf16.mxu0 0
      %4060 = vmatpush1.bf16.msra.mxu0 %v3342
      %4061 = vmatprep.subr.bf16.mxu0 0
      %4062 = vmatpush1.bf16.msra.mxu0 %v3341
      %4063 = vmatprep.subr.bf16.mxu0 0
      %4064 = vmatpush1.bf16.msra.mxu0 %v3340
      %4065 = vmatprep.subr.bf16.mxu0 0
      %4066 = vmatpush1.bf16.msra.mxu0 %v3339
      %4067 = vmatprep.subr.bf16.mxu0 0
      %4068 = vmatpush1.bf16.msra.mxu0 %v3338
      %4069 = vmatprep.subr.bf16.mxu0 0
      %4070 = vmatpush1.bf16.msra.mxu0 %v3337
      %4071 = vmatprep.subr.bf16.mxu0 0
      %4072 = vmatpush1.bf16.msra.mxu0 %v3336
      %4073 = vmatprep.subr.bf16.mxu0 0
      %4074 = vmatpush1.bf16.msra.mxu0 %v3335
      %4075 = vmatprep.subr.bf16.mxu0 0
      %4076 = vmatpush2.bf16.msra.mxu0 0
      %4077 = vmatprep.subr.bf16.mxu0 0
      %4078 = vmatpush2.bf16.msra.mxu0 0
      %4079 = vmatprep.subr.bf16.mxu0 0
      %4080 = vmatpush2.bf16.msra.mxu0 0
      %4081 = vmatprep.subr.bf16.mxu0 0
      %4082 = vmatpush2.bf16.msra.mxu0 0
      %4083 = vmatprep.subr.bf16.mxu0 0
      %4084 = vmatpush2.bf16.msra.mxu0 0
      %4085 = vmatprep.subr.bf16.mxu0 0
      %4086 = vmatpush2.bf16.msra.mxu0 0
      %4087 = vmatprep.subr.bf16.mxu0 0
      %4088 = vmatpush2.bf16.msra.mxu0 0
      %4089 = vmatprep.subr.bf16.mxu0 0
      %4090 = vmatpush2.bf16.msra.mxu0 0
      %4091 = vmatprep.mubr.bf16.mxu0 0
      %4092 = vmatmul.mubr.bf16.gmra.mxu0 %v2745
      %v4093 = vpop.f32.mrf.mxu0
      %v4094 = vadd.f32 %v3933, %v4093
      %v4095 = vpop.f32.mrf.mxu0
      %v4096 = vpop.f32.mrf.mxu0
      %v4097 = vadd.f32 %v3936, %v4096
      %v4098 = vpop.f32.mrf.mxu0
      %4099 = vmatprep.mubr.bf16.mxu0 0
      %4100 = vmatmul.mubr.bf16.gmra.mxu0 %v2748
      %v4101 = vpop.f32.mrf.mxu0
      %v4102 = vadd.f32 %v3941, %v4101
      %v4103 = vpop.f32.mrf.mxu0
      %v4104 = vpop.f32.mrf.mxu0
      %v4105 = vadd.f32 %v3944, %v4104
      %v4106 = vpop.f32.mrf.mxu0
      %4107 = vmatprep.mubr.bf16.mxu0 0
      %4108 = vmatmul.mubr.bf16.gmra.mxu0 %v2751
      %v4109 = vpop.f32.mrf.mxu0
      %v4110 = vadd.f32 %v3949, %v4109
      %v4111 = vpop.f32.mrf.mxu0
      %v4112 = vpop.f32.mrf.mxu0
      %v4113 = vadd.f32 %v3952, %v4112
      %v4114 = vpop.f32.mrf.mxu0
      %4115 = vmatprep.mubr.bf16.mxu0 0
      %4116 = vmatmul.mubr.bf16.gmra.mxu0 %v2754
      %v4117 = vpop.f32.mrf.mxu0
      %v4118 = vadd.f32 %v3957, %v4117
      %v4119 = vpop.f32.mrf.mxu0
      %v4120 = vpop.f32.mrf.mxu0
      %v4121 = vadd.f32 %v3960, %v4120
      %v4122 = vpop.f32.mrf.mxu0
      %4123 = vmatprep.mubr.bf16.mxu0 0
      %4124 = vmatmul.mubr.bf16.gmra.mxu0 %v2757
      %v4125 = vpop.f32.mrf.mxu0
      %v4126 = vadd.f32 %v3965, %v4125
      %v4127 = vpop.f32.mrf.mxu0
      %v4128 = vpop.f32.mrf.mxu0
      %v4129 = vadd.f32 %v3968, %v4128
      %v4130 = vpop.f32.mrf.mxu0
      %4131 = vmatprep.mubr.bf16.mxu0 0
      %4132 = vmatmul.mubr.bf16.gmra.mxu0 %v2760
      %v4133 = vpop.f32.mrf.mxu0
      %v4134 = vadd.f32 %v3973, %v4133
      %v4135 = vpop.f32.mrf.mxu0
      %v4136 = vpop.f32.mrf.mxu0
      %v4137 = vadd.f32 %v3976, %v4136
      %v4138 = vpop.f32.mrf.mxu0
      %4139 = vmatprep.mubr.bf16.mxu0 0
      %4140 = vmatmul.mubr.bf16.gmra.mxu0 %v2763
      %v4141 = vpop.f32.mrf.mxu0
      %v4142 = vadd.f32 %v3981, %v4141
      %v4143 = vpop.f32.mrf.mxu0
      %v4144 = vpop.f32.mrf.mxu0
      %v4145 = vadd.f32 %v3984, %v4144
      %v4146 = vpop.f32.mrf.mxu0
      %4147 = vmatprep.mubr.bf16.mxu0 0
      %4148 = vmatmul.mubr.bf16.gmra.mxu0 %v2766
      %v4149 = vpop.f32.mrf.mxu0
      %v4150 = vadd.f32 %v3989, %v4149
      %v4151 = vpop.f32.mrf.mxu0
      %v4152 = vpop.f32.mrf.mxu0
      %v4153 = vadd.f32 %v3992, %v4152
      %v4154 = vpop.f32.mrf.mxu0
      %4155 = vmatprep.mubr.bf16.mxu0 0
      %4156 = vmatmul.mubr.bf16.gmra.mxu0 %v2769
      %v4157 = vpop.f32.mrf.mxu0
      %v4158 = vadd.f32 %v3997, %v4157
      %v4159 = vpop.f32.mrf.mxu0
      %v4160 = vpop.f32.mrf.mxu0
      %v4161 = vadd.f32 %v4000, %v4160
      %v4162 = vpop.f32.mrf.mxu0
      %4163 = vmatprep.mubr.bf16.mxu0 0
      %4164 = vmatmul.mubr.bf16.gmra.mxu0 %v2772
      %v4165 = vpop.f32.mrf.mxu0
      %v4166 = vadd.f32 %v4005, %v4165
      %v4167 = vpop.f32.mrf.mxu0
      %v4168 = vpop.f32.mrf.mxu0
      %v4169 = vadd.f32 %v4008, %v4168
      %v4170 = vpop.f32.mrf.mxu0
      %4171 = vmatprep.mubr.bf16.mxu0 0
      %4172 = vmatmul.mubr.bf16.gmra.mxu0 %v2775
      %v4173 = vpop.f32.mrf.mxu0
      %v4174 = vadd.f32 %v4013, %v4173
      %v4175 = vpop.f32.mrf.mxu0
      %v4176 = vpop.f32.mrf.mxu0
      %v4177 = vadd.f32 %v4016, %v4176
      %v4178 = vpop.f32.mrf.mxu0
      %4179 = vmatprep.mubr.bf16.mxu0 0
      %4180 = vmatmul.mubr.bf16.gmra.mxu0 %v2778
      %v4181 = vpop.f32.mrf.mxu0
      %v4182 = vadd.f32 %v4021, %v4181
      %v4183 = vpop.f32.mrf.mxu0
      %v4184 = vpop.f32.mrf.mxu0
      %v4185 = vadd.f32 %v4024, %v4184
      %v4186 = vpop.f32.mrf.mxu0
      %4187 = vmatprep.mubr.bf16.mxu0 0
      %4188 = vmatmul.mubr.bf16.gmra.mxu0 %v2781
      %v4189 = vpop.f32.mrf.mxu0
      %v4190 = vadd.f32 %v4029, %v4189
      %v4191 = vpop.f32.mrf.mxu0
      %v4192 = vpop.f32.mrf.mxu0
      %v4193 = vadd.f32 %v4032, %v4192
      %v4194 = vpop.f32.mrf.mxu0
      %4195 = vmatprep.mubr.bf16.mxu0 0
      %4196 = vmatmul.mubr.bf16.gmra.mxu0 %v2784
      %v4197 = vpop.f32.mrf.mxu0
      %v4198 = vadd.f32 %v4037, %v4197
      %v4199 = vpop.f32.mrf.mxu0
      %v4200 = vpop.f32.mrf.mxu0
      %v4201 = vadd.f32 %v4040, %v4200
      %v4202 = vpop.f32.mrf.mxu0
      %4203 = vmatprep.mubr.bf16.mxu0 0
      %4204 = vmatmul.mubr.bf16.gmra.mxu0 %v2818
      %v4205 = vpop.f32.mrf.mxu0
      %v4206 = vadd.f32 %v4045, %v4205
      %v4207 = vpop.f32.mrf.mxu0
      %v4208 = vpop.f32.mrf.mxu0
      %v4209 = vadd.f32 %v4048, %v4208
      %v4210 = vpop.f32.mrf.mxu0
      %4211 = vmatprep.mubr.bf16.mxu0 0
      %4212 = vmatmul.mubr.bf16.gmra.mxu0 %v2837
      %v4213 = vpop.f32.mrf.mxu0
      %v4214 = vadd.f32 %v4053, %v4213
      %v4215 = vpop.f32.mrf.mxu0
      %v4216 = vpop.f32.mrf.mxu0
      %v4217 = vadd.f32 %v4056, %v4216
      %v4218 = vpop.f32.mrf.mxu0
      %4219 = vdwg.mxu0
      %v4220 = vld [vmem:[%s5] sm:$0x1]
      %v4221 = vlaneseq
      %v4222 = vshrl.u32 %v4221, 7
      %v4223 = vsub.s32 0, %v4222
      %v4224 = vrot.slane %v4220, %v4223
      %v4225 = vmul.f32 %v4094, %v4224
      %v4226 = vmul.f32 %v4097, %v4224
      %v4227 = vmul.f32 %v4102, %v4224
      %v4228 = vmul.f32 %v4105, %v4224
      %v4229 = vmul.f32 %v4110, %v4224
      %v4230 = vmul.f32 %v4113, %v4224
      %v4231 = vmul.f32 %v4118, %v4224
      %v4232 = vmul.f32 %v4121, %v4224
      %v4233 = vmul.f32 %v4126, %v4224
      %v4234 = vmul.f32 %v4129, %v4224
      %v4235 = vmul.f32 %v4134, %v4224
      %v4236 = vmul.f32 %v4137, %v4224
      %v4237 = vmul.f32 %v4142, %v4224
      %v4238 = vmul.f32 %v4145, %v4224
      %v4239 = vmul.f32 %v4150, %v4224
      %v4240 = vmul.f32 %v4153, %v4224
      %v4241 = vmul.f32 %v4158, %v4224
      %v4242 = vmul.f32 %v4161, %v4224
      %v4243 = vmul.f32 %v4166, %v4224
      %v4244 = vmul.f32 %v4169, %v4224
      %v4245 = vmul.f32 %v4174, %v4224
      %v4246 = vmul.f32 %v4177, %v4224
      %v4247 = vmul.f32 %v4182, %v4224
      %v4248 = vmul.f32 %v4185, %v4224
      %v4249 = vmul.f32 %v4190, %v4224
      %v4250 = vmul.f32 %v4193, %v4224
      %v4251 = vmul.f32 %v4198, %v4224
      %v4252 = vmul.f32 %v4201, %v4224
      %v4253 = vmul.f32 %v4206, %v4224
      %v4254 = vmul.f32 %v4209, %v4224
      %v4255 = vmul.f32 %v4214, %v4224
      %v4256 = vmul.f32 %v4217, %v4224
      %v4257 = vld [vmem:[%s5 + $0x1] sm:$0x1]
      %v4258 = vlaneseq
      %v4259 = vshrl.u32 %v4258, 7
      %v4260 = vsub.s32 0, %v4259
      %v4261 = vrot.slane %v4257, %v4260
      %v4262 = vadd.f32 %v4225, %v4261
      %v4263 = vadd.f32 %v4226, %v4261
      %v4264 = vadd.f32 %v4227, %v4261
      %v4265 = vadd.f32 %v4228, %v4261
      %v4266 = vadd.f32 %v4229, %v4261
      %v4267 = vadd.f32 %v4230, %v4261
      %v4268 = vadd.f32 %v4231, %v4261
      %v4269 = vadd.f32 %v4232, %v4261
      %v4270 = vadd.f32 %v4233, %v4261
      %v4271 = vadd.f32 %v4234, %v4261
      %v4272 = vadd.f32 %v4235, %v4261
      %v4273 = vadd.f32 %v4236, %v4261
      %v4274 = vadd.f32 %v4237, %v4261
      %v4275 = vadd.f32 %v4238, %v4261
      %v4276 = vadd.f32 %v4239, %v4261
      %v4277 = vadd.f32 %v4240, %v4261
      %v4278 = vadd.f32 %v4241, %v4261
      %v4279 = vadd.f32 %v4242, %v4261
      %v4280 = vadd.f32 %v4243, %v4261
      %v4281 = vadd.f32 %v4244, %v4261
      %v4282 = vadd.f32 %v4245, %v4261
      %v4283 = vadd.f32 %v4246, %v4261
      %v4284 = vadd.f32 %v4247, %v4261
      %v4285 = vadd.f32 %v4248, %v4261
      %v4286 = vadd.f32 %v4249, %v4261
      %v4287 = vadd.f32 %v4250, %v4261
      %v4288 = vadd.f32 %v4251, %v4261
      %v4289 = vadd.f32 %v4252, %v4261
      %v4290 = vadd.f32 %v4253, %v4261
      %v4291 = vadd.f32 %v4254, %v4261
      %v4292 = vadd.f32 %v4255, %v4261
      %v4293 = vadd.f32 %v4256, %v4261
      %v4294 = vmax.f32 %v4262, 0.0
      %v4295 = vmax.f32 %v4263, 0.0
      %v4296 = vmax.f32 %v4264, 0.0
      %v4297 = vmax.f32 %v4265, 0.0
      %v4298 = vmax.f32 %v4266, 0.0
      %v4299 = vmax.f32 %v4267, 0.0
      %v4300 = vmax.f32 %v4268, 0.0
      %v4301 = vmax.f32 %v4269, 0.0
      %v4302 = vmax.f32 %v4270, 0.0
      %v4303 = vmax.f32 %v4271, 0.0
      %v4304 = vmax.f32 %v4272, 0.0
      %v4305 = vmax.f32 %v4273, 0.0
      %v4306 = vmax.f32 %v4274, 0.0
      %v4307 = vmax.f32 %v4275, 0.0
      %v4308 = vmax.f32 %v4276, 0.0
      %v4309 = vmax.f32 %v4277, 0.0
      %v4310 = vmax.f32 %v4278, 0.0
      %v4311 = vmax.f32 %v4279, 0.0
      %v4312 = vmax.f32 %v4280, 0.0
      %v4313 = vmax.f32 %v4281, 0.0
      %v4314 = vmax.f32 %v4282, 0.0
      %v4315 = vmax.f32 %v4283, 0.0
      %v4316 = vmax.f32 %v4284, 0.0
      %v4317 = vmax.f32 %v4285, 0.0
      %v4318 = vmax.f32 %v4286, 0.0
      %v4319 = vmax.f32 %v4287, 0.0
      %v4320 = vmax.f32 %v4288, 0.0
      %v4321 = vmax.f32 %v4289, 0.0
      %v4322 = vmax.f32 %v4290, 0.0
      %v4323 = vmax.f32 %v4291, 0.0
      %v4324 = vmax.f32 %v4292, 0.0
      %v4325 = vmax.f32 %v4293, 0.0
      %4326 = vst [vmem:[%s420 + $0x1] sm:$0xff] %v4294
      %4327 = vst [vmem:[%s420 + $0x9] sm:$0xff] %v4295
      %4328 = vst [vmem:[%s420 + $0x19] sm:$0xff] %v4296
      %4329 = vst [vmem:[%s420 + $0x21] sm:$0xff] %v4297
      %4330 = vst [vmem:[%s420 + $0x31] sm:$0xff] %v4298
      %4331 = vst [vmem:[%s420 + $0x39] sm:$0xff] %v4299
      %4332 = vst [vmem:[%s420 + $0x49] sm:$0xff] %v4300
      %4333 = vst [vmem:[%s420 + $0x51] sm:$0xff] %v4301
      %4334 = vst [vmem:[%s420 + $0x61] sm:$0xff] %v4302
      %4335 = vst [vmem:[%s420 + $0x69] sm:$0xff] %v4303
      %4336 = vst [vmem:[%s420 + $0x79] sm:$0xff] %v4304
      %4337 = vst [vmem:[%s420 + $0x81] sm:$0xff] %v4305
      %4338 = vst [vmem:[%s420 + $0x91] sm:$0xff] %v4306
      %4339 = vst [vmem:[%s420 + $0x99] sm:$0xff] %v4307
      %4340 = vst [vmem:[%s420 + $0xa9] sm:$0xff] %v4308
      %4341 = vst [vmem:[%s420 + $0xb1] sm:$0xff] %v4309
      %4342 = vst [vmem:[%s420 + $0xc1] sm:$0xff] %v4310
      %4343 = vst [vmem:[%s420 + $0xc9] sm:$0xff] %v4311
      %4344 = vst [vmem:[%s420 + $0xd9] sm:$0xff] %v4312
      %4345 = vst [vmem:[%s420 + $0xe1] sm:$0xff] %v4313
      %4346 = vst [vmem:[%s420 + $0xf1] sm:$0xff] %v4314
      %4347 = vst [vmem:[%s420 + $0xf9] sm:$0xff] %v4315
      %4348 = vst [vmem:[%s420 + $0x109] sm:$0xff] %v4316
      %4349 = vst [vmem:[%s420 + $0x111] sm:$0xff] %v4317
      %4350 = vst [vmem:[%s420 + $0x121] sm:$0xff] %v4318
      %4351 = vst [vmem:[%s420 + $0x129] sm:$0xff] %v4319
      %4352 = vst [vmem:[%s420 + $0x139] sm:$0xff] %v4320
      %4353 = vst [vmem:[%s420 + $0x141] sm:$0xff] %v4321
      %4354 = vst [vmem:[%s420 + $0x151] sm:$0xff] %v4322
      %4355 = vst [vmem:[%s420 + $0x159] sm:$0xff] %v4323
      %4356 = vst [vmem:[%s420 + $0x169] sm:$0xff] %v4324
      %4357 = vst [vmem:[%s420 + $0x171] sm:$0xff] %v4325
      %v4358 = vld [vmem:[#allocation2] sm:$0xff]
      %v4359 = vld [vmem:[#allocation2 + $0x8] sm:$0xff]
      %v4360 = vld [vmem:[#allocation2 + $0x10] sm:$0x3]
      %v4361 = vld [vmem:[#allocation2 + $0x18] sm:$0xff]
      %v4362 = vld [vmem:[#allocation2 + $0x20] sm:$0xff]
      %v4363 = vld [vmem:[#allocation2 + $0x28] sm:$0x3]
      %v4364 = vld [vmem:[#allocation2 + $0x30] sm:$0xff]
      %v4365 = vld [vmem:[#allocation2 + $0x38] sm:$0xff]
      %v4366 = vld [vmem:[#allocation2 + $0x40] sm:$0x3]
      %v4367 = vld [vmem:[#allocation2 + $0x48] sm:$0xff]
      %v4368 = vld [vmem:[#allocation2 + $0x50] sm:$0xff]
      %v4369 = vld [vmem:[#allocation2 + $0x58] sm:$0x3]
      %v4370 = vld [vmem:[#allocation2 + $0x60] sm:$0xff]
      %v4371 = vld [vmem:[#allocation2 + $0x68] sm:$0xff]
      %v4372 = vld [vmem:[#allocation2 + $0x70] sm:$0x3]
      %v4373 = vld [vmem:[#allocation2 + $0x78] sm:$0xff]
      %v4374 = vld [vmem:[#allocation2 + $0x80] sm:$0xff]
      %v4375 = vld [vmem:[#allocation2 + $0x88] sm:$0x3]
      %v4376 = vld [vmem:[#allocation2 + $0x90] sm:$0xff]
      %v4377 = vld [vmem:[#allocation2 + $0x98] sm:$0xff]
      %v4378 = vld [vmem:[#allocation2 + $0xa0] sm:$0x3]
      %v4379 = vld [vmem:[#allocation2 + $0xa8] sm:$0xff]
      %v4380 = vld [vmem:[#allocation2 + $0xb0] sm:$0xff]
      %v4381 = vld [vmem:[#allocation2 + $0xb8] sm:$0x3]
      %v4382 = vld [vmem:[#allocation2 + $0xc0] sm:$0xff]
      %v4383 = vld [vmem:[#allocation2 + $0xc8] sm:$0xff]
      %v4384 = vld [vmem:[#allocation2 + $0xd0] sm:$0x3]
      %v4385 = vld [vmem:[#allocation2 + $0xd8] sm:$0xff]
      %v4386 = vld [vmem:[#allocation2 + $0xe0] sm:$0xff]
      %v4387 = vld [vmem:[#allocation2 + $0xe8] sm:$0x3]
      %v4388 = vld [vmem:[#allocation2 + $0xf0] sm:$0xff]
      %v4389 = vld [vmem:[#allocation2 + $0xf8] sm:$0xff]
      %v4390 = vld [vmem:[#allocation2 + $0x100] sm:$0x3]
      %v4391 = vld [vmem:[#allocation2 + $0x108] sm:$0xff]
      %v4392 = vld [vmem:[#allocation2 + $0x110] sm:$0xff]
      %v4393 = vld [vmem:[#allocation2 + $0x118] sm:$0x3]
      %v4394 = vld [vmem:[#allocation2 + $0x120] sm:$0xff]
      %v4395 = vld [vmem:[#allocation2 + $0x128] sm:$0xff]
      %v4396 = vld [vmem:[#allocation2 + $0x130] sm:$0x3]
      %v4397 = vld [vmem:[#allocation2 + $0x138] sm:$0xff]
      %v4398 = vld [vmem:[#allocation2 + $0x140] sm:$0xff]
      %v4399 = vld [vmem:[#allocation2 + $0x148] sm:$0x3]
      %v4400 = vld [vmem:[#allocation2 + $0x150] sm:$0xff]
      %v4401 = vld [vmem:[#allocation2 + $0x158] sm:$0xff]
      %v4402 = vld [vmem:[#allocation2 + $0x160] sm:$0x3]
      %v4403 = vld [vmem:[#allocation2 + $0x168] sm:$0xff]
      %v4404 = vld [vmem:[#allocation2 + $0x170] sm:$0xff]
      %v4405 = vld [vmem:[#allocation2 + $0x178] sm:$0x3]
      %v4406 = vld [vmem:[#allocation2 + $0x180] sm:$0xff]
      %v4407 = vld [vmem:[#allocation2 + $0x188] sm:$0xff]
      %v4408 = vld [vmem:[#allocation2 + $0x190] sm:$0x3]
      %v4409 = vld [vmem:[#allocation2 + $0x198] sm:$0xff]
      %v4410 = vld [vmem:[#allocation2 + $0x1a0] sm:$0xff]
      %v4411 = vld [vmem:[#allocation2 + $0x1a8] sm:$0x3]
      %v4412 = vpack.c.bf16 %v4359, %v4358
      %v4413 = vpack.c.bf16 %v4360, %v4360
      %v4414 = vpack.c.bf16 %v4362, %v4361
      %v4415 = vpack.c.bf16 %v4363, %v4363
      %v4416 = vpack.c.bf16 %v4365, %v4364
      %v4417 = vpack.c.bf16 %v4366, %v4366
      %v4418 = vpack.c.bf16 %v4368, %v4367
      %v4419 = vpack.c.bf16 %v4369, %v4369
      %v4420 = vpack.c.bf16 %v4371, %v4370
      %v4421 = vpack.c.bf16 %v4372, %v4372
      %v4422 = vpack.c.bf16 %v4374, %v4373
      %v4423 = vpack.c.bf16 %v4375, %v4375
      %v4424 = vpack.c.bf16 %v4377, %v4376
      %v4425 = vpack.c.bf16 %v4378, %v4378
      %v4426 = vpack.c.bf16 %v4380, %v4379
      %v4427 = vpack.c.bf16 %v4381, %v4381
      %v4428 = vpack.c.bf16 %v4383, %v4382
      %v4429 = vpack.c.bf16 %v4384, %v4384
      %v4430 = vpack.c.bf16 %v4386, %v4385
      %v4431 = vpack.c.bf16 %v4387, %v4387
      %v4432 = vpack.c.bf16 %v4389, %v4388
      %v4433 = vpack.c.bf16 %v4390, %v4390
      %v4434 = vpack.c.bf16 %v4392, %v4391
      %v4435 = vpack.c.bf16 %v4393, %v4393
      %v4436 = vpack.c.bf16 %v4395, %v4394
      %v4437 = vpack.c.bf16 %v4396, %v4396
      %v4438 = vpack.c.bf16 %v4398, %v4397
      %v4439 = vpack.c.bf16 %v4399, %v4399
      %v4440 = vpack.c.bf16 %v4401, %v4400
      %v4441 = vpack.c.bf16 %v4402, %v4402
      %v4442 = vpack.c.bf16 %v4404, %v4403
      %v4443 = vpack.c.bf16 %v4405, %v4405
      %v4444 = vpack.c.bf16 %v4407, %v4406
      %v4445 = vpack.c.bf16 %v4408, %v4408
      %v4446 = vpack.c.bf16 %v4410, %v4409
      %v4447 = vpack.c.bf16 %v4411, %v4411
      %v4449 = vshrl.u32 %v4412, 16
      %v4451 = vshll.u32 %v4412, 16
      %v4453 = vrot.slane %v4451, 1
      %v4454 = vor.u32 %v4449, %v4453
      %v4456 = vshll.u32 %v4413, 16
      %v4458 = vrot.slane %v4456, 1
      %v4459 = vsel %vm543, %v4454, %v4458
      %v4461 = vshrl.u32 %v4414, 16
      %v4463 = vshll.u32 %v4414, 16
      %v4465 = vrot.slane %v4463, 1
      %v4466 = vor.u32 %v4461, %v4465
      %v4468 = vshll.u32 %v4415, 16
      %v4470 = vrot.slane %v4468, 1
      %v4471 = vsel %vm543, %v4466, %v4470
      %v4473 = vshrl.u32 %v4416, 16
      %v4475 = vshll.u32 %v4416, 16
      %v4477 = vrot.slane %v4475, 1
      %v4478 = vor.u32 %v4473, %v4477
      %v4480 = vshll.u32 %v4417, 16
      %v4482 = vrot.slane %v4480, 1
      %v4483 = vsel %vm543, %v4478, %v4482
      %v4485 = vshrl.u32 %v4418, 16
      %v4487 = vshll.u32 %v4418, 16
      %v4489 = vrot.slane %v4487, 1
      %v4490 = vor.u32 %v4485, %v4489
      %v4492 = vshll.u32 %v4419, 16
      %v4494 = vrot.slane %v4492, 1
      %v4495 = vsel %vm543, %v4490, %v4494
      %v4497 = vshrl.u32 %v4420, 16
      %v4499 = vshll.u32 %v4420, 16
      %v4501 = vrot.slane %v4499, 1
      %v4502 = vor.u32 %v4497, %v4501
      %v4504 = vshll.u32 %v4421, 16
      %v4506 = vrot.slane %v4504, 1
      %v4507 = vsel %vm543, %v4502, %v4506
      %v4509 = vshrl.u32 %v4422, 16
      %v4511 = vshll.u32 %v4422, 16
      %v4513 = vrot.slane %v4511, 1
      %v4514 = vor.u32 %v4509, %v4513
      %v4516 = vshll.u32 %v4423, 16
      %v4518 = vrot.slane %v4516, 1
      %v4519 = vsel %vm543, %v4514, %v4518
      %v4521 = vshrl.u32 %v4424, 16
      %v4523 = vshll.u32 %v4424, 16
      %v4525 = vrot.slane %v4523, 1
      %v4526 = vor.u32 %v4521, %v4525
      %v4528 = vshll.u32 %v4425, 16
      %v4530 = vrot.slane %v4528, 1
      %v4531 = vsel %vm543, %v4526, %v4530
      %v4533 = vshrl.u32 %v4426, 16
      %v4535 = vshll.u32 %v4426, 16
      %v4537 = vrot.slane %v4535, 1
      %v4538 = vor.u32 %v4533, %v4537
      %v4540 = vshll.u32 %v4427, 16
      %v4542 = vrot.slane %v4540, 1
      %v4543 = vsel %vm543, %v4538, %v4542
      %v4545 = vshrl.u32 %v4428, 16
      %v4547 = vshll.u32 %v4428, 16
      %v4549 = vrot.slane %v4547, 1
      %v4550 = vor.u32 %v4545, %v4549
      %v4552 = vshll.u32 %v4429, 16
      %v4554 = vrot.slane %v4552, 1
      %v4555 = vsel %vm543, %v4550, %v4554
      %v4557 = vshrl.u32 %v4430, 16
      %v4559 = vshll.u32 %v4430, 16
      %v4561 = vrot.slane %v4559, 1
      %v4562 = vor.u32 %v4557, %v4561
      %v4564 = vshll.u32 %v4431, 16
      %v4566 = vrot.slane %v4564, 1
      %v4567 = vsel %vm543, %v4562, %v4566
      %v4569 = vshrl.u32 %v4432, 16
      %v4571 = vshll.u32 %v4432, 16
      %v4573 = vrot.slane %v4571, 1
      %v4574 = vor.u32 %v4569, %v4573
      %v4576 = vshll.u32 %v4433, 16
      %v4578 = vrot.slane %v4576, 1
      %v4579 = vsel %vm543, %v4574, %v4578
      %v4581 = vshrl.u32 %v4434, 16
      %v4583 = vshll.u32 %v4434, 16
      %v4585 = vrot.slane %v4583, 1
      %v4586 = vor.u32 %v4581, %v4585
      %v4588 = vshll.u32 %v4435, 16
      %v4590 = vrot.slane %v4588, 1
      %v4591 = vsel %vm543, %v4586, %v4590
      %v4593 = vshrl.u32 %v4436, 16
      %v4595 = vshll.u32 %v4436, 16
      %v4597 = vrot.slane %v4595, 1
      %v4598 = vor.u32 %v4593, %v4597
      %v4600 = vshll.u32 %v4437, 16
      %v4602 = vrot.slane %v4600, 1
      %v4603 = vsel %vm543, %v4598, %v4602
      %v4605 = vshrl.u32 %v4438, 16
      %v4607 = vshll.u32 %v4438, 16
      %v4609 = vrot.slane %v4607, 1
      %v4610 = vor.u32 %v4605, %v4609
      %v4612 = vshll.u32 %v4439, 16
      %v4614 = vrot.slane %v4612, 1
      %v4615 = vsel %vm543, %v4610, %v4614
      %v4617 = vshrl.u32 %v4440, 16
      %v4619 = vshll.u32 %v4440, 16
      %v4621 = vrot.slane %v4619, 1
      %v4622 = vor.u32 %v4617, %v4621
      %v4624 = vshll.u32 %v4441, 16
      %v4626 = vrot.slane %v4624, 1
      %v4627 = vsel %vm543, %v4622, %v4626
      %v4629 = vshrl.u32 %v4442, 16
      %v4631 = vshll.u32 %v4442, 16
      %v4633 = vrot.slane %v4631, 1
      %v4634 = vor.u32 %v4629, %v4633
      %v4636 = vshll.u32 %v4443, 16
      %v4638 = vrot.slane %v4636, 1
      %v4639 = vsel %vm543, %v4634, %v4638
      %v4688 = vrot.slane %v4412, 1
      %v4689 = vrot.slane %v4413, 1
      %v4690 = vsel %vm784, %v4688, %v4689
      %v4691 = vrot.slane %v4414, 1
      %v4692 = vrot.slane %v4415, 1
      %v4693 = vsel %vm784, %v4691, %v4692
      %v4694 = vrot.slane %v4416, 1
      %v4695 = vrot.slane %v4417, 1
      %v4696 = vsel %vm784, %v4694, %v4695
      %v4697 = vrot.slane %v4418, 1
      %v4698 = vrot.slane %v4419, 1
      %v4699 = vsel %vm784, %v4697, %v4698
      %v4700 = vrot.slane %v4420, 1
      %v4701 = vrot.slane %v4421, 1
      %v4702 = vsel %vm784, %v4700, %v4701
      %v4703 = vrot.slane %v4422, 1
      %v4704 = vrot.slane %v4423, 1
      %v4705 = vsel %vm784, %v4703, %v4704
      %v4706 = vrot.slane %v4424, 1
      %v4707 = vrot.slane %v4425, 1
      %v4708 = vsel %vm784, %v4706, %v4707
      %v4709 = vrot.slane %v4426, 1
      %v4710 = vrot.slane %v4427, 1
      %v4711 = vsel %vm784, %v4709, %v4710
      %v4712 = vrot.slane %v4428, 1
      %v4713 = vrot.slane %v4429, 1
      %v4714 = vsel %vm784, %v4712, %v4713
      %v4715 = vrot.slane %v4430, 1
      %v4716 = vrot.slane %v4431, 1
      %v4717 = vsel %vm784, %v4715, %v4716
      %v4718 = vrot.slane %v4432, 1
      %v4719 = vrot.slane %v4433, 1
      %v4720 = vsel %vm784, %v4718, %v4719
      %v4721 = vrot.slane %v4434, 1
      %v4722 = vrot.slane %v4435, 1
      %v4723 = vsel %vm784, %v4721, %v4722
      %v4724 = vrot.slane %v4436, 1
      %v4725 = vrot.slane %v4437, 1
      %v4726 = vsel %vm784, %v4724, %v4725
      %v4727 = vrot.slane %v4438, 1
      %v4728 = vrot.slane %v4439, 1
      %v4729 = vsel %vm784, %v4727, %v4728
      %v4730 = vrot.slane %v4440, 1
      %v4731 = vrot.slane %v4441, 1
      %v4732 = vsel %vm784, %v4730, %v4731
      %v4733 = vrot.slane %v4442, 1
      %v4734 = vrot.slane %v4443, 1
      %v4735 = vsel %vm784, %v4733, %v4734
      %v4753 = vshrl.u32 %v4444, 16
      %v4755 = vshll.u32 %v4444, 16
      %v4757 = vrot.slane %v4755, 1
      %v4758 = vor.u32 %v4753, %v4757
      %v4760 = vshll.u32 %v4445, 16
      %v4762 = vrot.slane %v4760, 1
      %v4763 = vsel %vm543, %v4758, %v4762
      %v4767 = vrot.slane %v4444, 1
      %v4768 = vrot.slane %v4445, 1
      %v4769 = vsel %vm784, %v4767, %v4768
      %v4772 = vshrl.u32 %v4446, 16
      %v4774 = vshll.u32 %v4446, 16
      %v4776 = vrot.slane %v4774, 1
      %v4777 = vor.u32 %v4772, %v4776
      %v4779 = vshll.u32 %v4447, 16
      %v4781 = vrot.slane %v4779, 1
      %v4782 = vsel %vm543, %v4777, %v4781
      %v4786 = vrot.slane %v4446, 1
      %v4787 = vrot.slane %v4447, 1
      %v4788 = vsel %vm784, %v4786, %v4787
      %v4790 = vld [vmem:[%s3] sm:$0xf]
      %v4791 = vld [vmem:[%s3 + $0x4] sm:$0xf]
      %v4792 = vld [vmem:[%s3 + $0x8] sm:$0xf]
      %v4793 = vld [vmem:[%s3 + $0xc] sm:$0xf]
      %v4794 = vld [vmem:[%s3 + $0x10] sm:$0xf]
      %v4795 = vld [vmem:[%s3 + $0x14] sm:$0xf]
      %v4796 = vld [vmem:[%s3 + $0x18] sm:$0xf]
      %v4797 = vld [vmem:[%s3 + $0x1c] sm:$0xf]
      %v4798 = vld [vmem:[%s3 + $0x20] sm:$0xf]
      %v4799 = vld [vmem:[%s3 + $0x24] sm:$0xf]
      %v4800 = vld [vmem:[%s3 + $0x28] sm:$0xf]
      %v4801 = vld [vmem:[%s3 + $0x2c] sm:$0xf]
      %v4802 = vld [vmem:[%s3 + $0x30] sm:$0xf]
      %v4803 = vld [vmem:[%s3 + $0x34] sm:$0xf]
      %v4804 = vld [vmem:[%s3 + $0x38] sm:$0xf]
      %v4805 = vld [vmem:[%s3 + $0x3c] sm:$0xf]
      %v4806 = vld [vmem:[%s3 + $0x40] sm:$0xf]
      %v4807 = vld [vmem:[%s3 + $0x44] sm:$0xf]
      %v4808 = vld [vmem:[%s3 + $0x48] sm:$0xf]
      %v4809 = vld [vmem:[%s3 + $0x4c] sm:$0xf]
      %v4810 = vld [vmem:[%s3 + $0x50] sm:$0xf]
      %v4811 = vld [vmem:[%s3 + $0x54] sm:$0xf]
      %v4812 = vld [vmem:[%s3 + $0x58] sm:$0xf]
      %v4813 = vld [vmem:[%s3 + $0x5c] sm:$0xf]
      %v4814 = vld [vmem:[%s3 + $0x60] sm:$0xf]
      %v4815 = vld [vmem:[%s3 + $0x64] sm:$0xf]
      %v4816 = vld [vmem:[%s3 + $0x68] sm:$0xf]
      %v4817 = vld [vmem:[%s3 + $0x6c] sm:$0xf]
      %v4818 = vld [vmem:[%s3 + $0x70] sm:$0xf]
      %v4819 = vld [vmem:[%s3 + $0x74] sm:$0xf]
      %v4820 = vld [vmem:[%s3 + $0x78] sm:$0xf]
      %v4821 = vld [vmem:[%s3 + $0x7c] sm:$0xf]
      %v4822 = vld [vmem:[%s3 + $0x80] sm:$0xf]
      %v4823 = vld [vmem:[%s3 + $0x84] sm:$0xf]
      %v4824 = vld [vmem:[%s3 + $0x88] sm:$0xf]
      %v4825 = vld [vmem:[%s3 + $0x8c] sm:$0xf]
      %v4826 = vld [vmem:[%s3 + $0x90] sm:$0xf]
      %v4827 = vld [vmem:[%s3 + $0x94] sm:$0xf]
      %v4828 = vld [vmem:[%s3 + $0x98] sm:$0xf]
      %v4829 = vld [vmem:[%s3 + $0x9c] sm:$0xf]
      %v4830 = vld [vmem:[%s3 + $0xa0] sm:$0xf]
      %v4831 = vld [vmem:[%s3 + $0xa4] sm:$0xf]
      %v4832 = vld [vmem:[%s3 + $0xa8] sm:$0xf]
      %v4833 = vld [vmem:[%s3 + $0xac] sm:$0xf]
      %v4834 = vld [vmem:[%s3 + $0xb0] sm:$0xf]
      %v4835 = vld [vmem:[%s3 + $0xb4] sm:$0xf]
      %v4836 = vld [vmem:[%s3 + $0xb8] sm:$0xf]
      %v4837 = vld [vmem:[%s3 + $0xbc] sm:$0xf]
      %v4838 = vld [vmem:[%s3 + $0xc0] sm:$0xf]
      %v4839 = vld [vmem:[%s3 + $0xc4] sm:$0xf]
      %v4840 = vld [vmem:[%s3 + $0xc8] sm:$0xf]
      %v4841 = vld [vmem:[%s3 + $0xcc] sm:$0xf]
      %v4842 = vld [vmem:[%s3 + $0xd0] sm:$0xf]
      %v4843 = vld [vmem:[%s3 + $0xd4] sm:$0xf]
      %v4844 = vld [vmem:[%s3 + $0xd8] sm:$0xf]
      %v4845 = vld [vmem:[%s3 + $0xdc] sm:$0xf]
      %v4846 = vld [vmem:[%s3 + $0xe0] sm:$0xf]
      %v4847 = vld [vmem:[%s3 + $0xe4] sm:$0xf]
      %v4848 = vld [vmem:[%s3 + $0xe8] sm:$0xf]
      %v4849 = vld [vmem:[%s3 + $0xec] sm:$0xf]
      %v4850 = vld [vmem:[%s3 + $0xf0] sm:$0xf]
      %v4851 = vld [vmem:[%s3 + $0xf4] sm:$0xf]
      %v4852 = vld [vmem:[%s3 + $0xf8] sm:$0xf]
      %v4853 = vld [vmem:[%s3 + $0xfc] sm:$0xf]
      %v4854 = vld [vmem:[%s3 + $0x100] sm:$0xf]
      %v4855 = vld [vmem:[%s3 + $0x104] sm:$0xf]
      %v4856 = vld [vmem:[%s3 + $0x108] sm:$0xf]
      %v4857 = vld [vmem:[%s3 + $0x10c] sm:$0xf]
      %v4858 = vld [vmem:[%s3 + $0x110] sm:$0xf]
      %v4859 = vld [vmem:[%s3 + $0x114] sm:$0xf]
      %v4860 = vld [vmem:[%s3 + $0x118] sm:$0xf]
      %v4861 = vld [vmem:[%s3 + $0x11c] sm:$0xf]
      %v4862 = vld [vmem:[%s3 + $0x120] sm:$0xf]
      %v4863 = vld [vmem:[%s3 + $0x124] sm:$0xf]
      %v4864 = vld [vmem:[%s3 + $0x128] sm:$0xf]
      %v4865 = vld [vmem:[%s3 + $0x12c] sm:$0xf]
      %v4866 = vld [vmem:[%s3 + $0x130] sm:$0xf]
      %v4867 = vld [vmem:[%s3 + $0x134] sm:$0xf]
      %v4868 = vld [vmem:[%s3 + $0x138] sm:$0xf]
      %v4869 = vld [vmem:[%s3 + $0x13c] sm:$0xf]
      %v4870 = vld [vmem:[%s3 + $0x140] sm:$0xf]
      %v4871 = vld [vmem:[%s3 + $0x144] sm:$0xf]
      %v4872 = vld [vmem:[%s3 + $0x148] sm:$0xf]
      %v4873 = vld [vmem:[%s3 + $0x14c] sm:$0xf]
      %v4874 = vld [vmem:[%s3 + $0x150] sm:$0xf]
      %v4875 = vld [vmem:[%s3 + $0x154] sm:$0xf]
      %v4876 = vld [vmem:[%s3 + $0x158] sm:$0xf]
      %v4877 = vld [vmem:[%s3 + $0x15c] sm:$0xf]
      %v4878 = vld [vmem:[%s3 + $0x160] sm:$0xf]
      %v4879 = vld [vmem:[%s3 + $0x164] sm:$0xf]
      %v4880 = vld [vmem:[%s3 + $0x168] sm:$0xf]
      %v4881 = vld [vmem:[%s3 + $0x16c] sm:$0xf]
      %v4882 = vld [vmem:[%s3 + $0x170] sm:$0xf]
      %v4883 = vld [vmem:[%s3 + $0x174] sm:$0xf]
      %v4884 = vld [vmem:[%s3 + $0x178] sm:$0xf]
      %v4885 = vld [vmem:[%s3 + $0x17c] sm:$0xf]
      %v4886 = vld [vmem:[%s3 + $0x180] sm:$0xf]
      %v4887 = vld [vmem:[%s3 + $0x184] sm:$0xf]
      %v4888 = vld [vmem:[%s3 + $0x188] sm:$0xf]
      %v4889 = vld [vmem:[%s3 + $0x18c] sm:$0xf]
      %v4890 = vld [vmem:[%s3 + $0x190] sm:$0xf]
      %v4891 = vld [vmem:[%s3 + $0x194] sm:$0xf]
      %v4892 = vld [vmem:[%s3 + $0x198] sm:$0xf]
      %v4893 = vld [vmem:[%s3 + $0x19c] sm:$0xf]
      %v4894 = vld [vmem:[%s3 + $0x1a0] sm:$0xf]
      %v4895 = vld [vmem:[%s3 + $0x1a4] sm:$0xf]
      %v4896 = vld [vmem:[%s3 + $0x1a8] sm:$0xf]
      %v4897 = vld [vmem:[%s3 + $0x1ac] sm:$0xf]
      %v4898 = vld [vmem:[%s3 + $0x1b0] sm:$0xf]
      %v4899 = vld [vmem:[%s3 + $0x1b4] sm:$0xf]
      %v4900 = vld [vmem:[%s3 + $0x1b8] sm:$0xf]
      %v4901 = vld [vmem:[%s3 + $0x1bc] sm:$0xf]
      %v4902 = vld [vmem:[%s3 + $0x1c0] sm:$0xf]
      %v4903 = vld [vmem:[%s3 + $0x1c4] sm:$0xf]
      %v4904 = vld [vmem:[%s3 + $0x1c8] sm:$0xf]
      %v4905 = vld [vmem:[%s3 + $0x1cc] sm:$0xf]
      %v4906 = vld [vmem:[%s3 + $0x1d0] sm:$0xf]
      %v4907 = vld [vmem:[%s3 + $0x1d4] sm:$0xf]
      %v4908 = vld [vmem:[%s3 + $0x1d8] sm:$0xf]
      %v4909 = vld [vmem:[%s3 + $0x1dc] sm:$0xf]
      %v4910 = vld [vmem:[%s3 + $0x1e0] sm:$0xf]
      %v4911 = vld [vmem:[%s3 + $0x1e4] sm:$0xf]
      %v4912 = vld [vmem:[%s3 + $0x1e8] sm:$0xf]
      %v4913 = vld [vmem:[%s3 + $0x1ec] sm:$0xf]
      %v4914 = vld [vmem:[%s3 + $0x1f0] sm:$0xf]
      %v4915 = vld [vmem:[%s3 + $0x1f4] sm:$0xf]
      %v4916 = vld [vmem:[%s3 + $0x1f8] sm:$0xf]
      %v4917 = vld [vmem:[%s3 + $0x1fc] sm:$0xf]
      %v4918 = vld [vmem:[%s3 + $0x200] sm:$0xf]
      %v4919 = vld [vmem:[%s3 + $0x204] sm:$0xf]
      %v4920 = vld [vmem:[%s3 + $0x208] sm:$0xf]
      %v4921 = vld [vmem:[%s3 + $0x20c] sm:$0xf]
      %v4922 = vld [vmem:[%s3 + $0x210] sm:$0xf]
      %v4923 = vld [vmem:[%s3 + $0x214] sm:$0xf]
      %v4924 = vld [vmem:[%s3 + $0x218] sm:$0xf]
      %v4925 = vld [vmem:[%s3 + $0x21c] sm:$0xf]
      %v4926 = vld [vmem:[%s3 + $0x220] sm:$0xf]
      %v4927 = vld [vmem:[%s3 + $0x224] sm:$0xf]
      %v4928 = vld [vmem:[%s3 + $0x228] sm:$0xf]
      %v4929 = vld [vmem:[%s3 + $0x22c] sm:$0xf]
      %v4930 = vld [vmem:[%s3 + $0x230] sm:$0xf]
      %v4931 = vld [vmem:[%s3 + $0x234] sm:$0xf]
      %v4932 = vld [vmem:[%s3 + $0x238] sm:$0xf]
      %v4933 = vld [vmem:[%s3 + $0x23c] sm:$0xf]
      %v5078 = vunpack.c.l.b16 %v4790
      %v5079 = vunpack.c.l.b16 %v4791
      %v5080 = vunpack.c.l.b16 %v4792
      %v5081 = vunpack.c.l.b16 %v4793
      %v5082 = vunpack.c.l.b16 %v4794
      %v5083 = vunpack.c.l.b16 %v4795
      %v5084 = vunpack.c.l.b16 %v4796
      %v5085 = vunpack.c.l.b16 %v4797
      %v5086 = vunpack.c.l.b16 %v4798
      %v5087 = vunpack.c.l.b16 %v4799
      %v5088 = vunpack.c.l.b16 %v4800
      %v5089 = vunpack.c.l.b16 %v4801
      %v5090 = vunpack.c.l.b16 %v4802
      %v5091 = vunpack.c.l.b16 %v4803
      %v5092 = vunpack.c.l.b16 %v4804
      %v5093 = vunpack.c.l.b16 %v4805
      %v5094 = vunpack.c.l.b16 %v4806
      %v5095 = vunpack.c.l.b16 %v4807
      %v5096 = vunpack.c.l.b16 %v4808
      %v5097 = vunpack.c.l.b16 %v4809
      %v5098 = vunpack.c.l.b16 %v4810
      %v5099 = vunpack.c.l.b16 %v4811
      %v5100 = vunpack.c.l.b16 %v4812
      %v5101 = vunpack.c.l.b16 %v4813
      %v5102 = vunpack.c.l.b16 %v4814
      %v5103 = vunpack.c.l.b16 %v4815
      %v5104 = vunpack.c.l.b16 %v4816
      %v5105 = vunpack.c.l.b16 %v4817
      %v5106 = vunpack.c.l.b16 %v4818
      %v5107 = vunpack.c.l.b16 %v4819
      %v5108 = vunpack.c.l.b16 %v4820
      %v5109 = vunpack.c.l.b16 %v4821
      %v5110 = vunpack.c.l.b16 %v4822
      %v5111 = vunpack.c.l.b16 %v4823
      %v5112 = vunpack.c.l.b16 %v4824
      %v5113 = vunpack.c.l.b16 %v4825
      %v5114 = vunpack.c.l.b16 %v4826
      %v5115 = vunpack.c.l.b16 %v4827
      %v5116 = vunpack.c.l.b16 %v4828
      %v5117 = vunpack.c.l.b16 %v4829
      %v5118 = vunpack.c.l.b16 %v4830
      %v5119 = vunpack.c.l.b16 %v4831
      %v5120 = vunpack.c.l.b16 %v4832
      %v5121 = vunpack.c.l.b16 %v4833
      %v5122 = vunpack.c.l.b16 %v4834
      %v5123 = vunpack.c.l.b16 %v4835
      %v5124 = vunpack.c.l.b16 %v4836
      %v5125 = vunpack.c.l.b16 %v4837
      %v5126 = vunpack.c.l.b16 %v4838
      %v5127 = vunpack.c.l.b16 %v4839
      %v5128 = vunpack.c.l.b16 %v4840
      %v5129 = vunpack.c.l.b16 %v4841
      %v5130 = vunpack.c.l.b16 %v4842
      %v5131 = vunpack.c.l.b16 %v4843
      %v5132 = vunpack.c.l.b16 %v4844
      %v5133 = vunpack.c.l.b16 %v4845
      %v5134 = vunpack.c.l.b16 %v4846
      %v5135 = vunpack.c.l.b16 %v4847
      %v5136 = vunpack.c.l.b16 %v4848
      %v5137 = vunpack.c.l.b16 %v4849
      %v5138 = vunpack.c.l.b16 %v4850
      %v5139 = vunpack.c.l.b16 %v4851
      %v5140 = vunpack.c.l.b16 %v4852
      %v5141 = vunpack.c.l.b16 %v4853
      %v5142 = vunpack.c.l.b16 %v4854
      %v5143 = vunpack.c.l.b16 %v4855
      %v5144 = vunpack.c.l.b16 %v4856
      %v5145 = vunpack.c.l.b16 %v4857
      %v5146 = vunpack.c.l.b16 %v4858
      %v5147 = vunpack.c.l.b16 %v4859
      %v5148 = vunpack.c.l.b16 %v4860
      %v5149 = vunpack.c.l.b16 %v4861
      %v5150 = vunpack.c.l.b16 %v4862
      %v5151 = vunpack.c.l.b16 %v4863
      %v5152 = vunpack.c.l.b16 %v4864
      %v5153 = vunpack.c.l.b16 %v4865
      %v5154 = vunpack.c.l.b16 %v4866
      %v5155 = vunpack.c.l.b16 %v4867
      %v5156 = vunpack.c.l.b16 %v4868
      %v5157 = vunpack.c.l.b16 %v4869
      %v5158 = vunpack.c.l.b16 %v4870
      %v5159 = vunpack.c.l.b16 %v4871
      %v5160 = vunpack.c.l.b16 %v4872
      %v5161 = vunpack.c.l.b16 %v4873
      %v5162 = vunpack.c.l.b16 %v4874
      %v5163 = vunpack.c.l.b16 %v4875
      %v5164 = vunpack.c.l.b16 %v4876
      %v5165 = vunpack.c.l.b16 %v4877
      %v5166 = vunpack.c.l.b16 %v4878
      %v5167 = vunpack.c.l.b16 %v4879
      %v5168 = vunpack.c.l.b16 %v4880
      %v5169 = vunpack.c.l.b16 %v4881
      %v5170 = vunpack.c.l.b16 %v4882
      %v5171 = vunpack.c.l.b16 %v4883
      %v5172 = vunpack.c.l.b16 %v4884
      %v5173 = vunpack.c.l.b16 %v4885
      %v5174 = vunpack.c.l.b16 %v4886
      %v5175 = vunpack.c.l.b16 %v4887
      %v5176 = vunpack.c.l.b16 %v4888
      %v5177 = vunpack.c.l.b16 %v4889
      %v5178 = vunpack.c.l.b16 %v4890
      %v5179 = vunpack.c.l.b16 %v4891
      %v5180 = vunpack.c.l.b16 %v4892
      %v5181 = vunpack.c.l.b16 %v4893
      %v5182 = vunpack.c.l.b16 %v4894
      %v5183 = vunpack.c.l.b16 %v4895
      %v5184 = vunpack.c.l.b16 %v4896
      %v5185 = vunpack.c.l.b16 %v4897
      %v5186 = vunpack.c.l.b16 %v4898
      %v5187 = vunpack.c.l.b16 %v4899
      %v5188 = vunpack.c.l.b16 %v4900
      %v5189 = vunpack.c.l.b16 %v4901
      %v5190 = vunpack.c.l.b16 %v4902
      %v5191 = vunpack.c.l.b16 %v4903
      %v5192 = vunpack.c.l.b16 %v4904
      %v5193 = vunpack.c.l.b16 %v4905
      %v5194 = vunpack.c.l.b16 %v4906
      %v5195 = vunpack.c.l.b16 %v4907
      %v5196 = vunpack.c.l.b16 %v4908
      %v5197 = vunpack.c.l.b16 %v4909
      %v5198 = vunpack.c.l.b16 %v4910
      %v5199 = vunpack.c.l.b16 %v4911
      %v5200 = vunpack.c.l.b16 %v4912
      %v5201 = vunpack.c.l.b16 %v4913
      %v5202 = vunpack.c.l.b16 %v4914
      %v5203 = vunpack.c.l.b16 %v4915
      %v5204 = vunpack.c.l.b16 %v4916
      %v5205 = vunpack.c.l.b16 %v4917
      %v5206 = vunpack.c.l.b16 %v4918
      %v5207 = vunpack.c.l.b16 %v4919
      %v5208 = vunpack.c.l.b16 %v4920
      %v5209 = vunpack.c.l.b16 %v4921
      %v5210 = vunpack.c.l.b16 %v4922
      %v5211 = vunpack.c.l.b16 %v4923
      %v5212 = vunpack.c.l.b16 %v4924
      %v5213 = vunpack.c.l.b16 %v4925
      %v5214 = vunpack.c.l.b16 %v4926
      %v5215 = vunpack.c.l.b16 %v4927
      %v5216 = vunpack.c.l.b16 %v4928
      %v5217 = vunpack.c.l.b16 %v4929
      %v5218 = vunpack.c.l.b16 %v4930
      %v5219 = vunpack.c.l.b16 %v4931
      %v5220 = vunpack.c.l.b16 %v4932
      %v5221 = vunpack.c.l.b16 %v4933
      %v5222 = vpack.c.b16 %v5079, %v5078
      %v5223 = vpack.c.b16 %v5081, %v5080
      %v5224 = vpack.c.b16 %v5083, %v5082
      %v5225 = vpack.c.b16 %v5085, %v5084
      %v5226 = vpack.c.b16 %v5087, %v5086
      %v5227 = vpack.c.b16 %v5089, %v5088
      %v5228 = vpack.c.b16 %v5091, %v5090
      %v5229 = vpack.c.b16 %v5093, %v5092
      %v5230 = vpack.c.b16 %v5095, %v5094
      %v5231 = vpack.c.b16 %v5097, %v5096
      %v5232 = vpack.c.b16 %v5099, %v5098
      %v5233 = vpack.c.b16 %v5101, %v5100
      %v5234 = vpack.c.b16 %v5103, %v5102
      %v5235 = vpack.c.b16 %v5105, %v5104
      %v5236 = vpack.c.b16 %v5107, %v5106
      %v5237 = vpack.c.b16 %v5109, %v5108
      %v5238 = vpack.c.b16 %v5111, %v5110
      %v5239 = vpack.c.b16 %v5113, %v5112
      %v5240 = vpack.c.b16 %v5115, %v5114
      %v5241 = vpack.c.b16 %v5117, %v5116
      %v5242 = vpack.c.b16 %v5119, %v5118
      %v5243 = vpack.c.b16 %v5121, %v5120
      %v5244 = vpack.c.b16 %v5123, %v5122
      %v5245 = vpack.c.b16 %v5125, %v5124
      %v5246 = vpack.c.b16 %v5127, %v5126
      %v5247 = vpack.c.b16 %v5129, %v5128
      %v5248 = vpack.c.b16 %v5131, %v5130
      %v5249 = vpack.c.b16 %v5133, %v5132
      %v5250 = vpack.c.b16 %v5135, %v5134
      %v5251 = vpack.c.b16 %v5137, %v5136
      %v5252 = vpack.c.b16 %v5139, %v5138
      %v5253 = vpack.c.b16 %v5141, %v5140
      %v5254 = vpack.c.b16 %v5143, %v5142
      %v5255 = vpack.c.b16 %v5145, %v5144
      %v5256 = vpack.c.b16 %v5147, %v5146
      %v5257 = vpack.c.b16 %v5149, %v5148
      %v5258 = vpack.c.b16 %v5151, %v5150
      %v5259 = vpack.c.b16 %v5153, %v5152
      %v5260 = vpack.c.b16 %v5155, %v5154
      %v5261 = vpack.c.b16 %v5157, %v5156
      %v5262 = vpack.c.b16 %v5159, %v5158
      %v5263 = vpack.c.b16 %v5161, %v5160
      %v5264 = vpack.c.b16 %v5163, %v5162
      %v5265 = vpack.c.b16 %v5165, %v5164
      %v5266 = vpack.c.b16 %v5167, %v5166
      %v5267 = vpack.c.b16 %v5169, %v5168
      %v5268 = vpack.c.b16 %v5171, %v5170
      %v5269 = vpack.c.b16 %v5173, %v5172
      %v5270 = vpack.c.b16 %v5175, %v5174
      %v5271 = vpack.c.b16 %v5177, %v5176
      %v5272 = vpack.c.b16 %v5179, %v5178
      %v5273 = vpack.c.b16 %v5181, %v5180
      %v5274 = vpack.c.b16 %v5183, %v5182
      %v5275 = vpack.c.b16 %v5185, %v5184
      %v5276 = vpack.c.b16 %v5187, %v5186
      %v5277 = vpack.c.b16 %v5189, %v5188
      %v5278 = vpack.c.b16 %v5191, %v5190
      %v5279 = vpack.c.b16 %v5193, %v5192
      %v5280 = vpack.c.b16 %v5195, %v5194
      %v5281 = vpack.c.b16 %v5197, %v5196
      %v5282 = vpack.c.b16 %v5199, %v5198
      %v5283 = vpack.c.b16 %v5201, %v5200
      %v5284 = vpack.c.b16 %v5203, %v5202
      %v5285 = vpack.c.b16 %v5205, %v5204
      %v5286 = vpack.c.b16 %v5207, %v5206
      %v5287 = vpack.c.b16 %v5209, %v5208
      %v5288 = vpack.c.b16 %v5211, %v5210
      %v5289 = vpack.c.b16 %v5213, %v5212
      %v5290 = vpack.c.b16 %v5215, %v5214
      %v5291 = vpack.c.b16 %v5217, %v5216
      %v5292 = vpack.c.b16 %v5219, %v5218
      %v5293 = vpack.c.b16 %v5221, %v5220
      %5366 = vmatprep.subr.bf16.mxu0 0
      %5367 = vmatpush1.bf16.msra.mxu0 %v5229
      %5368 = vmatprep.subr.bf16.mxu0 0
      %5369 = vmatpush1.bf16.msra.mxu0 %v5228
      %5370 = vmatprep.subr.bf16.mxu0 0
      %5371 = vmatpush1.bf16.msra.mxu0 %v5227
      %5372 = vmatprep.subr.bf16.mxu0 0
      %5373 = vmatpush1.bf16.msra.mxu0 %v5226
      %5374 = vmatprep.subr.bf16.mxu0 0
      %5375 = vmatpush1.bf16.msra.mxu0 %v5225
      %5376 = vmatprep.subr.bf16.mxu0 0
      %5377 = vmatpush1.bf16.msra.mxu0 %v5224
      %5378 = vmatprep.subr.bf16.mxu0 0
      %5379 = vmatpush1.bf16.msra.mxu0 %v5223
      %5380 = vmatprep.subr.bf16.mxu0 0
      %5381 = vmatpush1.bf16.msra.mxu0 %v5222
      %5382 = vmatprep.subr.bf16.mxu0 0
      %5383 = vmatpush2.bf16.msra.mxu0 %v5237
      %5384 = vmatprep.subr.bf16.mxu0 0
      %5385 = vmatpush2.bf16.msra.mxu0 %v5236
      %5386 = vmatprep.subr.bf16.mxu0 0
      %5387 = vmatpush2.bf16.msra.mxu0 %v5235
      %5388 = vmatprep.subr.bf16.mxu0 0
      %5389 = vmatpush2.bf16.msra.mxu0 %v5234
      %5390 = vmatprep.subr.bf16.mxu0 0
      %5391 = vmatpush2.bf16.msra.mxu0 %v5233
      %5392 = vmatprep.subr.bf16.mxu0 0
      %5393 = vmatpush2.bf16.msra.mxu0 %v5232
      %5394 = vmatprep.subr.bf16.mxu0 0
      %5395 = vmatpush2.bf16.msra.mxu0 %v5231
      %5396 = vmatprep.subr.bf16.mxu0 0
      %5397 = vmatpush2.bf16.msra.mxu0 %v5230
      %5398 = vmatprep.mubr.bf16.mxu0 %v4459
      %5399 = vmatmul.mubr.bf16.gmra.mxu0 %v4412
      %v5400 = vpop.f32.mrf.mxu0
      %v5401 = vadd.f32 0.0, %v5400
      %v5402 = vpop.f32.mrf.mxu0
      %v5403 = vpop.f32.mrf.mxu0
      %v5404 = vadd.f32 0.0, %v5403
      %v5405 = vpop.f32.mrf.mxu0
      %5406 = vmatprep.mubr.bf16.mxu0 %v4471
      %5407 = vmatmul.mubr.bf16.gmra.mxu0 %v4414
      %v5408 = vpop.f32.mrf.mxu0
      %v5409 = vadd.f32 0.0, %v5408
      %v5410 = vpop.f32.mrf.mxu0
      %v5411 = vpop.f32.mrf.mxu0
      %v5412 = vadd.f32 0.0, %v5411
      %v5413 = vpop.f32.mrf.mxu0
      %5414 = vmatprep.mubr.bf16.mxu0 %v4483
      %5415 = vmatmul.mubr.bf16.gmra.mxu0 %v4416
      %v5416 = vpop.f32.mrf.mxu0
      %v5417 = vadd.f32 0.0, %v5416
      %v5418 = vpop.f32.mrf.mxu0
      %v5419 = vpop.f32.mrf.mxu0
      %v5420 = vadd.f32 0.0, %v5419
      %v5421 = vpop.f32.mrf.mxu0
      %5422 = vmatprep.mubr.bf16.mxu0 %v4495
      %5423 = vmatmul.mubr.bf16.gmra.mxu0 %v4418
      %v5424 = vpop.f32.mrf.mxu0
      %v5425 = vadd.f32 0.0, %v5424
      %v5426 = vpop.f32.mrf.mxu0
      %v5427 = vpop.f32.mrf.mxu0
      %v5428 = vadd.f32 0.0, %v5427
      %v5429 = vpop.f32.mrf.mxu0
      %5430 = vmatprep.mubr.bf16.mxu0 %v4507
      %5431 = vmatmul.mubr.bf16.gmra.mxu0 %v4420
      %v5432 = vpop.f32.mrf.mxu0
      %v5433 = vadd.f32 0.0, %v5432
      %v5434 = vpop.f32.mrf.mxu0
      %v5435 = vpop.f32.mrf.mxu0
      %v5436 = vadd.f32 0.0, %v5435
      %v5437 = vpop.f32.mrf.mxu0
      %5438 = vmatprep.mubr.bf16.mxu0 %v4519
      %5439 = vmatmul.mubr.bf16.gmra.mxu0 %v4422
      %v5440 = vpop.f32.mrf.mxu0
      %v5441 = vadd.f32 0.0, %v5440
      %v5442 = vpop.f32.mrf.mxu0
      %v5443 = vpop.f32.mrf.mxu0
      %v5444 = vadd.f32 0.0, %v5443
      %v5445 = vpop.f32.mrf.mxu0
      %5446 = vmatprep.mubr.bf16.mxu0 %v4531
      %5447 = vmatmul.mubr.bf16.gmra.mxu0 %v4424
      %v5448 = vpop.f32.mrf.mxu0
      %v5449 = vadd.f32 0.0, %v5448
      %v5450 = vpop.f32.mrf.mxu0
      %v5451 = vpop.f32.mrf.mxu0
      %v5452 = vadd.f32 0.0, %v5451
      %v5453 = vpop.f32.mrf.mxu0
      %5454 = vmatprep.mubr.bf16.mxu0 %v4543
      %5455 = vmatmul.mubr.bf16.gmra.mxu0 %v4426
      %v5456 = vpop.f32.mrf.mxu0
      %v5457 = vadd.f32 0.0, %v5456
      %v5458 = vpop.f32.mrf.mxu0
      %v5459 = vpop.f32.mrf.mxu0
      %v5460 = vadd.f32 0.0, %v5459
      %v5461 = vpop.f32.mrf.mxu0
      %5462 = vmatprep.mubr.bf16.mxu0 %v4555
      %5463 = vmatmul.mubr.bf16.gmra.mxu0 %v4428
      %v5464 = vpop.f32.mrf.mxu0
      %v5465 = vadd.f32 0.0, %v5464
      %v5466 = vpop.f32.mrf.mxu0
      %v5467 = vpop.f32.mrf.mxu0
      %v5468 = vadd.f32 0.0, %v5467
      %v5469 = vpop.f32.mrf.mxu0
      %5470 = vmatprep.mubr.bf16.mxu0 %v4567
      %5471 = vmatmul.mubr.bf16.gmra.mxu0 %v4430
      %v5472 = vpop.f32.mrf.mxu0
      %v5473 = vadd.f32 0.0, %v5472
      %v5474 = vpop.f32.mrf.mxu0
      %v5475 = vpop.f32.mrf.mxu0
      %v5476 = vadd.f32 0.0, %v5475
      %v5477 = vpop.f32.mrf.mxu0
      %5478 = vmatprep.mubr.bf16.mxu0 %v4579
      %5479 = vmatmul.mubr.bf16.gmra.mxu0 %v4432
      %v5480 = vpop.f32.mrf.mxu0
      %v5481 = vadd.f32 0.0, %v5480
      %v5482 = vpop.f32.mrf.mxu0
      %v5483 = vpop.f32.mrf.mxu0
      %v5484 = vadd.f32 0.0, %v5483
      %v5485 = vpop.f32.mrf.mxu0
      %5486 = vmatprep.mubr.bf16.mxu0 %v4591
      %5487 = vmatmul.mubr.bf16.gmra.mxu0 %v4434
      %v5488 = vpop.f32.mrf.mxu0
      %v5489 = vadd.f32 0.0, %v5488
      %v5490 = vpop.f32.mrf.mxu0
      %v5491 = vpop.f32.mrf.mxu0
      %v5492 = vadd.f32 0.0, %v5491
      %v5493 = vpop.f32.mrf.mxu0
      %5494 = vmatprep.mubr.bf16.mxu0 %v4603
      %5495 = vmatmul.mubr.bf16.gmra.mxu0 %v4436
      %v5496 = vpop.f32.mrf.mxu0
      %v5497 = vadd.f32 0.0, %v5496
      %v5498 = vpop.f32.mrf.mxu0
      %v5499 = vpop.f32.mrf.mxu0
      %v5500 = vadd.f32 0.0, %v5499
      %v5501 = vpop.f32.mrf.mxu0
      %5502 = vmatprep.mubr.bf16.mxu0 %v4615
      %5503 = vmatmul.mubr.bf16.gmra.mxu0 %v4438
      %v5504 = vpop.f32.mrf.mxu0
      %v5505 = vadd.f32 0.0, %v5504
      %v5506 = vpop.f32.mrf.mxu0
      %v5507 = vpop.f32.mrf.mxu0
      %v5508 = vadd.f32 0.0, %v5507
      %v5509 = vpop.f32.mrf.mxu0
      %5510 = vmatprep.mubr.bf16.mxu0 %v4627
      %5511 = vmatmul.mubr.bf16.gmra.mxu0 %v4440
      %v5512 = vpop.f32.mrf.mxu0
      %v5513 = vadd.f32 0.0, %v5512
      %v5514 = vpop.f32.mrf.mxu0
      %v5515 = vpop.f32.mrf.mxu0
      %v5516 = vadd.f32 0.0, %v5515
      %v5517 = vpop.f32.mrf.mxu0
      %5518 = vmatprep.mubr.bf16.mxu0 %v4639
      %5519 = vmatmul.mubr.bf16.gmra.mxu0 %v4442
      %v5520 = vpop.f32.mrf.mxu0
      %v5521 = vadd.f32 0.0, %v5520
      %v5522 = vpop.f32.mrf.mxu0
      %v5523 = vpop.f32.mrf.mxu0
      %v5524 = vadd.f32 0.0, %v5523
      %v5525 = vpop.f32.mrf.mxu0
      %5526 = vdwg.mxu0
      %5527 = vmatprep.subr.bf16.mxu0 0
      %5528 = vmatpush1.bf16.msra.mxu0 %v5245
      %5529 = vmatprep.subr.bf16.mxu0 0
      %5530 = vmatpush1.bf16.msra.mxu0 %v5244
      %5531 = vmatprep.subr.bf16.mxu0 0
      %5532 = vmatpush1.bf16.msra.mxu0 %v5243
      %5533 = vmatprep.subr.bf16.mxu0 0
      %5534 = vmatpush1.bf16.msra.mxu0 %v5242
      %5535 = vmatprep.subr.bf16.mxu0 0
      %5536 = vmatpush1.bf16.msra.mxu0 %v5241
      %5537 = vmatprep.subr.bf16.mxu0 0
      %5538 = vmatpush1.bf16.msra.mxu0 %v5240
      %5539 = vmatprep.subr.bf16.mxu0 0
      %5540 = vmatpush1.bf16.msra.mxu0 %v5239
      %5541 = vmatprep.subr.bf16.mxu0 0
      %5542 = vmatpush1.bf16.msra.mxu0 %v5238
      %5543 = vmatprep.subr.bf16.mxu0 0
      %5544 = vmatpush2.bf16.msra.mxu0 %v5253
      %5545 = vmatprep.subr.bf16.mxu0 0
      %5546 = vmatpush2.bf16.msra.mxu0 %v5252
      %5547 = vmatprep.subr.bf16.mxu0 0
      %5548 = vmatpush2.bf16.msra.mxu0 %v5251
      %5549 = vmatprep.subr.bf16.mxu0 0
      %5550 = vmatpush2.bf16.msra.mxu0 %v5250
      %5551 = vmatprep.subr.bf16.mxu0 0
      %5552 = vmatpush2.bf16.msra.mxu0 %v5249
      %5553 = vmatprep.subr.bf16.mxu0 0
      %5554 = vmatpush2.bf16.msra.mxu0 %v5248
      %5555 = vmatprep.subr.bf16.mxu0 0
      %5556 = vmatpush2.bf16.msra.mxu0 %v5247
      %5557 = vmatprep.subr.bf16.mxu0 0
      %5558 = vmatpush2.bf16.msra.mxu0 %v5246
      %5559 = vmatprep.mubr.bf16.mxu0 %v4414
      %5560 = vmatmul.mubr.bf16.gmra.mxu0 %v4690
      %v5561 = vpop.f32.mrf.mxu0
      %v5562 = vadd.f32 %v5401, %v5561
      %v5563 = vpop.f32.mrf.mxu0
      %v5564 = vpop.f32.mrf.mxu0
      %v5565 = vadd.f32 %v5404, %v5564
      %v5566 = vpop.f32.mrf.mxu0
      %5567 = vmatprep.mubr.bf16.mxu0 %v4416
      %5568 = vmatmul.mubr.bf16.gmra.mxu0 %v4693
      %v5569 = vpop.f32.mrf.mxu0
      %v5570 = vadd.f32 %v5409, %v5569
      %v5571 = vpop.f32.mrf.mxu0
      %v5572 = vpop.f32.mrf.mxu0
      %v5573 = vadd.f32 %v5412, %v5572
      %v5574 = vpop.f32.mrf.mxu0
      %5575 = vmatprep.mubr.bf16.mxu0 %v4418
      %5576 = vmatmul.mubr.bf16.gmra.mxu0 %v4696
      %v5577 = vpop.f32.mrf.mxu0
      %v5578 = vadd.f32 %v5417, %v5577
      %v5579 = vpop.f32.mrf.mxu0
      %v5580 = vpop.f32.mrf.mxu0
      %v5581 = vadd.f32 %v5420, %v5580
      %v5582 = vpop.f32.mrf.mxu0
      %5583 = vmatprep.mubr.bf16.mxu0 %v4420
      %5584 = vmatmul.mubr.bf16.gmra.mxu0 %v4699
      %v5585 = vpop.f32.mrf.mxu0
      %v5586 = vadd.f32 %v5425, %v5585
      %v5587 = vpop.f32.mrf.mxu0
      %v5588 = vpop.f32.mrf.mxu0
      %v5589 = vadd.f32 %v5428, %v5588
      %v5590 = vpop.f32.mrf.mxu0
      %5591 = vmatprep.mubr.bf16.mxu0 %v4422
      %5592 = vmatmul.mubr.bf16.gmra.mxu0 %v4702
      %v5593 = vpop.f32.mrf.mxu0
      %v5594 = vadd.f32 %v5433, %v5593
      %v5595 = vpop.f32.mrf.mxu0
      %v5596 = vpop.f32.mrf.mxu0
      %v5597 = vadd.f32 %v5436, %v5596
      %v5598 = vpop.f32.mrf.mxu0
      %5599 = vmatprep.mubr.bf16.mxu0 %v4424
      %5600 = vmatmul.mubr.bf16.gmra.mxu0 %v4705
      %v5601 = vpop.f32.mrf.mxu0
      %v5602 = vadd.f32 %v5441, %v5601
      %v5603 = vpop.f32.mrf.mxu0
      %v5604 = vpop.f32.mrf.mxu0
      %v5605 = vadd.f32 %v5444, %v5604
      %v5606 = vpop.f32.mrf.mxu0
      %5607 = vmatprep.mubr.bf16.mxu0 %v4426
      %5608 = vmatmul.mubr.bf16.gmra.mxu0 %v4708
      %v5609 = vpop.f32.mrf.mxu0
      %v5610 = vadd.f32 %v5449, %v5609
      %v5611 = vpop.f32.mrf.mxu0
      %v5612 = vpop.f32.mrf.mxu0
      %v5613 = vadd.f32 %v5452, %v5612
      %v5614 = vpop.f32.mrf.mxu0
      %5615 = vmatprep.mubr.bf16.mxu0 %v4428
      %5616 = vmatmul.mubr.bf16.gmra.mxu0 %v4711
      %v5617 = vpop.f32.mrf.mxu0
      %v5618 = vadd.f32 %v5457, %v5617
      %v5619 = vpop.f32.mrf.mxu0
      %v5620 = vpop.f32.mrf.mxu0
      %v5621 = vadd.f32 %v5460, %v5620
      %v5622 = vpop.f32.mrf.mxu0
      %5623 = vmatprep.mubr.bf16.mxu0 %v4430
      %5624 = vmatmul.mubr.bf16.gmra.mxu0 %v4714
      %v5625 = vpop.f32.mrf.mxu0
      %v5626 = vadd.f32 %v5465, %v5625
      %v5627 = vpop.f32.mrf.mxu0
      %v5628 = vpop.f32.mrf.mxu0
      %v5629 = vadd.f32 %v5468, %v5628
      %v5630 = vpop.f32.mrf.mxu0
      %5631 = vmatprep.mubr.bf16.mxu0 %v4432
      %5632 = vmatmul.mubr.bf16.gmra.mxu0 %v4717
      %v5633 = vpop.f32.mrf.mxu0
      %v5634 = vadd.f32 %v5473, %v5633
      %v5635 = vpop.f32.mrf.mxu0
      %v5636 = vpop.f32.mrf.mxu0
      %v5637 = vadd.f32 %v5476, %v5636
      %v5638 = vpop.f32.mrf.mxu0
      %5639 = vmatprep.mubr.bf16.mxu0 %v4434
      %5640 = vmatmul.mubr.bf16.gmra.mxu0 %v4720
      %v5641 = vpop.f32.mrf.mxu0
      %v5642 = vadd.f32 %v5481, %v5641
      %v5643 = vpop.f32.mrf.mxu0
      %v5644 = vpop.f32.mrf.mxu0
      %v5645 = vadd.f32 %v5484, %v5644
      %v5646 = vpop.f32.mrf.mxu0
      %5647 = vmatprep.mubr.bf16.mxu0 %v4436
      %5648 = vmatmul.mubr.bf16.gmra.mxu0 %v4723
      %v5649 = vpop.f32.mrf.mxu0
      %v5650 = vadd.f32 %v5489, %v5649
      %v5651 = vpop.f32.mrf.mxu0
      %v5652 = vpop.f32.mrf.mxu0
      %v5653 = vadd.f32 %v5492, %v5652
      %v5654 = vpop.f32.mrf.mxu0
      %5655 = vmatprep.mubr.bf16.mxu0 %v4438
      %5656 = vmatmul.mubr.bf16.gmra.mxu0 %v4726
      %v5657 = vpop.f32.mrf.mxu0
      %v5658 = vadd.f32 %v5497, %v5657
      %v5659 = vpop.f32.mrf.mxu0
      %v5660 = vpop.f32.mrf.mxu0
      %v5661 = vadd.f32 %v5500, %v5660
      %v5662 = vpop.f32.mrf.mxu0
      %5663 = vmatprep.mubr.bf16.mxu0 %v4440
      %5664 = vmatmul.mubr.bf16.gmra.mxu0 %v4729
      %v5665 = vpop.f32.mrf.mxu0
      %v5666 = vadd.f32 %v5505, %v5665
      %v5667 = vpop.f32.mrf.mxu0
      %v5668 = vpop.f32.mrf.mxu0
      %v5669 = vadd.f32 %v5508, %v5668
      %v5670 = vpop.f32.mrf.mxu0
      %5671 = vmatprep.mubr.bf16.mxu0 %v4442
      %5672 = vmatmul.mubr.bf16.gmra.mxu0 %v4732
      %v5673 = vpop.f32.mrf.mxu0
      %v5674 = vadd.f32 %v5513, %v5673
      %v5675 = vpop.f32.mrf.mxu0
      %v5676 = vpop.f32.mrf.mxu0
      %v5677 = vadd.f32 %v5516, %v5676
      %v5678 = vpop.f32.mrf.mxu0
      %5679 = vmatprep.mubr.bf16.mxu0 %v4444
      %5680 = vmatmul.mubr.bf16.gmra.mxu0 %v4735
      %v5681 = vpop.f32.mrf.mxu0
      %v5682 = vadd.f32 %v5521, %v5681
      %v5683 = vpop.f32.mrf.mxu0
      %v5684 = vpop.f32.mrf.mxu0
      %v5685 = vadd.f32 %v5524, %v5684
      %v5686 = vpop.f32.mrf.mxu0
      %5687 = vdwg.mxu0
      %5688 = vmatprep.subr.bf16.mxu0 0
      %5689 = vmatpush1.bf16.msra.mxu0 %v5261
      %5690 = vmatprep.subr.bf16.mxu0 0
      %5691 = vmatpush1.bf16.msra.mxu0 %v5260
      %5692 = vmatprep.subr.bf16.mxu0 0
      %5693 = vmatpush1.bf16.msra.mxu0 %v5259
      %5694 = vmatprep.subr.bf16.mxu0 0
      %5695 = vmatpush1.bf16.msra.mxu0 %v5258
      %5696 = vmatprep.subr.bf16.mxu0 0
      %5697 = vmatpush1.bf16.msra.mxu0 %v5257
      %5698 = vmatprep.subr.bf16.mxu0 0
      %5699 = vmatpush1.bf16.msra.mxu0 %v5256
      %5700 = vmatprep.subr.bf16.mxu0 0
      %5701 = vmatpush1.bf16.msra.mxu0 %v5255
      %5702 = vmatprep.subr.bf16.mxu0 0
      %5703 = vmatpush1.bf16.msra.mxu0 %v5254
      %5704 = vmatprep.subr.bf16.mxu0 0
      %5705 = vmatpush2.bf16.msra.mxu0 %v5269
      %5706 = vmatprep.subr.bf16.mxu0 0
      %5707 = vmatpush2.bf16.msra.mxu0 %v5268
      %5708 = vmatprep.subr.bf16.mxu0 0
      %5709 = vmatpush2.bf16.msra.mxu0 %v5267
      %5710 = vmatprep.subr.bf16.mxu0 0
      %5711 = vmatpush2.bf16.msra.mxu0 %v5266
      %5712 = vmatprep.subr.bf16.mxu0 0
      %5713 = vmatpush2.bf16.msra.mxu0 %v5265
      %5714 = vmatprep.subr.bf16.mxu0 0
      %5715 = vmatpush2.bf16.msra.mxu0 %v5264
      %5716 = vmatprep.subr.bf16.mxu0 0
      %5717 = vmatpush2.bf16.msra.mxu0 %v5263
      %5718 = vmatprep.subr.bf16.mxu0 0
      %5719 = vmatpush2.bf16.msra.mxu0 %v5262
      %5720 = vmatprep.mubr.bf16.mxu0 %v4693
      %5721 = vmatmul.mubr.bf16.gmra.mxu0 %v4471
      %v5722 = vpop.f32.mrf.mxu0
      %v5723 = vadd.f32 %v5562, %v5722
      %v5724 = vpop.f32.mrf.mxu0
      %v5725 = vpop.f32.mrf.mxu0
      %v5726 = vadd.f32 %v5565, %v5725
      %v5727 = vpop.f32.mrf.mxu0
      %5728 = vmatprep.mubr.bf16.mxu0 %v4696
      %5729 = vmatmul.mubr.bf16.gmra.mxu0 %v4483
      %v5730 = vpop.f32.mrf.mxu0
      %v5731 = vadd.f32 %v5570, %v5730
      %v5732 = vpop.f32.mrf.mxu0
      %v5733 = vpop.f32.mrf.mxu0
      %v5734 = vadd.f32 %v5573, %v5733
      %v5735 = vpop.f32.mrf.mxu0
      %5736 = vmatprep.mubr.bf16.mxu0 %v4699
      %5737 = vmatmul.mubr.bf16.gmra.mxu0 %v4495
      %v5738 = vpop.f32.mrf.mxu0
      %v5739 = vadd.f32 %v5578, %v5738
      %v5740 = vpop.f32.mrf.mxu0
      %v5741 = vpop.f32.mrf.mxu0
      %v5742 = vadd.f32 %v5581, %v5741
      %v5743 = vpop.f32.mrf.mxu0
      %5744 = vmatprep.mubr.bf16.mxu0 %v4702
      %5745 = vmatmul.mubr.bf16.gmra.mxu0 %v4507
      %v5746 = vpop.f32.mrf.mxu0
      %v5747 = vadd.f32 %v5586, %v5746
      %v5748 = vpop.f32.mrf.mxu0
      %v5749 = vpop.f32.mrf.mxu0
      %v5750 = vadd.f32 %v5589, %v5749
      %v5751 = vpop.f32.mrf.mxu0
      %5752 = vmatprep.mubr.bf16.mxu0 %v4705
      %5753 = vmatmul.mubr.bf16.gmra.mxu0 %v4519
      %v5754 = vpop.f32.mrf.mxu0
      %v5755 = vadd.f32 %v5594, %v5754
      %v5756 = vpop.f32.mrf.mxu0
      %v5757 = vpop.f32.mrf.mxu0
      %v5758 = vadd.f32 %v5597, %v5757
      %v5759 = vpop.f32.mrf.mxu0
      %5760 = vmatprep.mubr.bf16.mxu0 %v4708
      %5761 = vmatmul.mubr.bf16.gmra.mxu0 %v4531
      %v5762 = vpop.f32.mrf.mxu0
      %v5763 = vadd.f32 %v5602, %v5762
      %v5764 = vpop.f32.mrf.mxu0
      %v5765 = vpop.f32.mrf.mxu0
      %v5766 = vadd.f32 %v5605, %v5765
      %v5767 = vpop.f32.mrf.mxu0
      %5768 = vmatprep.mubr.bf16.mxu0 %v4711
      %5769 = vmatmul.mubr.bf16.gmra.mxu0 %v4543
      %v5770 = vpop.f32.mrf.mxu0
      %v5771 = vadd.f32 %v5610, %v5770
      %v5772 = vpop.f32.mrf.mxu0
      %v5773 = vpop.f32.mrf.mxu0
      %v5774 = vadd.f32 %v5613, %v5773
      %v5775 = vpop.f32.mrf.mxu0
      %5776 = vmatprep.mubr.bf16.mxu0 %v4714
      %5777 = vmatmul.mubr.bf16.gmra.mxu0 %v4555
      %v5778 = vpop.f32.mrf.mxu0
      %v5779 = vadd.f32 %v5618, %v5778
      %v5780 = vpop.f32.mrf.mxu0
      %v5781 = vpop.f32.mrf.mxu0
      %v5782 = vadd.f32 %v5621, %v5781
      %v5783 = vpop.f32.mrf.mxu0
      %5784 = vmatprep.mubr.bf16.mxu0 %v4717
      %5785 = vmatmul.mubr.bf16.gmra.mxu0 %v4567
      %v5786 = vpop.f32.mrf.mxu0
      %v5787 = vadd.f32 %v5626, %v5786
      %v5788 = vpop.f32.mrf.mxu0
      %v5789 = vpop.f32.mrf.mxu0
      %v5790 = vadd.f32 %v5629, %v5789
      %v5791 = vpop.f32.mrf.mxu0
      %5792 = vmatprep.mubr.bf16.mxu0 %v4720
      %5793 = vmatmul.mubr.bf16.gmra.mxu0 %v4579
      %v5794 = vpop.f32.mrf.mxu0
      %v5795 = vadd.f32 %v5634, %v5794
      %v5796 = vpop.f32.mrf.mxu0
      %v5797 = vpop.f32.mrf.mxu0
      %v5798 = vadd.f32 %v5637, %v5797
      %v5799 = vpop.f32.mrf.mxu0
      %5800 = vmatprep.mubr.bf16.mxu0 %v4723
      %5801 = vmatmul.mubr.bf16.gmra.mxu0 %v4591
      %v5802 = vpop.f32.mrf.mxu0
      %v5803 = vadd.f32 %v5642, %v5802
      %v5804 = vpop.f32.mrf.mxu0
      %v5805 = vpop.f32.mrf.mxu0
      %v5806 = vadd.f32 %v5645, %v5805
      %v5807 = vpop.f32.mrf.mxu0
      %5808 = vmatprep.mubr.bf16.mxu0 %v4726
      %5809 = vmatmul.mubr.bf16.gmra.mxu0 %v4603
      %v5810 = vpop.f32.mrf.mxu0
      %v5811 = vadd.f32 %v5650, %v5810
      %v5812 = vpop.f32.mrf.mxu0
      %v5813 = vpop.f32.mrf.mxu0
      %v5814 = vadd.f32 %v5653, %v5813
      %v5815 = vpop.f32.mrf.mxu0
      %5816 = vmatprep.mubr.bf16.mxu0 %v4729
      %5817 = vmatmul.mubr.bf16.gmra.mxu0 %v4615
      %v5818 = vpop.f32.mrf.mxu0
      %v5819 = vadd.f32 %v5658, %v5818
      %v5820 = vpop.f32.mrf.mxu0
      %v5821 = vpop.f32.mrf.mxu0
      %v5822 = vadd.f32 %v5661, %v5821
      %v5823 = vpop.f32.mrf.mxu0
      %5824 = vmatprep.mubr.bf16.mxu0 %v4732
      %5825 = vmatmul.mubr.bf16.gmra.mxu0 %v4627
      %v5826 = vpop.f32.mrf.mxu0
      %v5827 = vadd.f32 %v5666, %v5826
      %v5828 = vpop.f32.mrf.mxu0
      %v5829 = vpop.f32.mrf.mxu0
      %v5830 = vadd.f32 %v5669, %v5829
      %v5831 = vpop.f32.mrf.mxu0
      %5832 = vmatprep.mubr.bf16.mxu0 %v4735
      %5833 = vmatmul.mubr.bf16.gmra.mxu0 %v4639
      %v5834 = vpop.f32.mrf.mxu0
      %v5835 = vadd.f32 %v5674, %v5834
      %v5836 = vpop.f32.mrf.mxu0
      %v5837 = vpop.f32.mrf.mxu0
      %v5838 = vadd.f32 %v5677, %v5837
      %v5839 = vpop.f32.mrf.mxu0
      %5840 = vmatprep.mubr.bf16.mxu0 %v4769
      %5841 = vmatmul.mubr.bf16.gmra.mxu0 %v4763
      %v5842 = vpop.f32.mrf.mxu0
      %v5843 = vadd.f32 %v5682, %v5842
      %v5844 = vpop.f32.mrf.mxu0
      %v5845 = vpop.f32.mrf.mxu0
      %v5846 = vadd.f32 %v5685, %v5845
      %v5847 = vpop.f32.mrf.mxu0
      %5848 = vdwg.mxu0
      %5849 = vmatprep.subr.bf16.mxu0 0
      %5850 = vmatpush1.bf16.msra.mxu0 %v5277
      %5851 = vmatprep.subr.bf16.mxu0 0
      %5852 = vmatpush1.bf16.msra.mxu0 %v5276
      %5853 = vmatprep.subr.bf16.mxu0 0
      %5854 = vmatpush1.bf16.msra.mxu0 %v5275
      %5855 = vmatprep.subr.bf16.mxu0 0
      %5856 = vmatpush1.bf16.msra.mxu0 %v5274
      %5857 = vmatprep.subr.bf16.mxu0 0
      %5858 = vmatpush1.bf16.msra.mxu0 %v5273
      %5859 = vmatprep.subr.bf16.mxu0 0
      %5860 = vmatpush1.bf16.msra.mxu0 %v5272
      %5861 = vmatprep.subr.bf16.mxu0 0
      %5862 = vmatpush1.bf16.msra.mxu0 %v5271
      %5863 = vmatprep.subr.bf16.mxu0 0
      %5864 = vmatpush1.bf16.msra.mxu0 %v5270
      %5865 = vmatprep.subr.bf16.mxu0 0
      %5866 = vmatpush2.bf16.msra.mxu0 %v5285
      %5867 = vmatprep.subr.bf16.mxu0 0
      %5868 = vmatpush2.bf16.msra.mxu0 %v5284
      %5869 = vmatprep.subr.bf16.mxu0 0
      %5870 = vmatpush2.bf16.msra.mxu0 %v5283
      %5871 = vmatprep.subr.bf16.mxu0 0
      %5872 = vmatpush2.bf16.msra.mxu0 %v5282
      %5873 = vmatprep.subr.bf16.mxu0 0
      %5874 = vmatpush2.bf16.msra.mxu0 %v5281
      %5875 = vmatprep.subr.bf16.mxu0 0
      %5876 = vmatpush2.bf16.msra.mxu0 %v5280
      %5877 = vmatprep.subr.bf16.mxu0 0
      %5878 = vmatpush2.bf16.msra.mxu0 %v5279
      %5879 = vmatprep.subr.bf16.mxu0 0
      %5880 = vmatpush2.bf16.msra.mxu0 %v5278
      %5881 = vmatprep.mubr.bf16.mxu0 %v4483
      %5882 = vmatmul.mubr.bf16.gmra.mxu0 %v4416
      %v5883 = vpop.f32.mrf.mxu0
      %v5884 = vadd.f32 %v5723, %v5883
      %v5885 = vpop.f32.mrf.mxu0
      %v5886 = vpop.f32.mrf.mxu0
      %v5887 = vadd.f32 %v5726, %v5886
      %v5888 = vpop.f32.mrf.mxu0
      %5889 = vmatprep.mubr.bf16.mxu0 %v4495
      %5890 = vmatmul.mubr.bf16.gmra.mxu0 %v4418
      %v5891 = vpop.f32.mrf.mxu0
      %v5892 = vadd.f32 %v5731, %v5891
      %v5893 = vpop.f32.mrf.mxu0
      %v5894 = vpop.f32.mrf.mxu0
      %v5895 = vadd.f32 %v5734, %v5894
      %v5896 = vpop.f32.mrf.mxu0
      %5897 = vmatprep.mubr.bf16.mxu0 %v4507
      %5898 = vmatmul.mubr.bf16.gmra.mxu0 %v4420
      %v5899 = vpop.f32.mrf.mxu0
      %v5900 = vadd.f32 %v5739, %v5899
      %v5901 = vpop.f32.mrf.mxu0
      %v5902 = vpop.f32.mrf.mxu0
      %v5903 = vadd.f32 %v5742, %v5902
      %v5904 = vpop.f32.mrf.mxu0
      %5905 = vmatprep.mubr.bf16.mxu0 %v4519
      %5906 = vmatmul.mubr.bf16.gmra.mxu0 %v4422
      %v5907 = vpop.f32.mrf.mxu0
      %v5908 = vadd.f32 %v5747, %v5907
      %v5909 = vpop.f32.mrf.mxu0
      %v5910 = vpop.f32.mrf.mxu0
      %v5911 = vadd.f32 %v5750, %v5910
      %v5912 = vpop.f32.mrf.mxu0
      %5913 = vmatprep.mubr.bf16.mxu0 %v4531
      %5914 = vmatmul.mubr.bf16.gmra.mxu0 %v4424
      %v5915 = vpop.f32.mrf.mxu0
      %v5916 = vadd.f32 %v5755, %v5915
      %v5917 = vpop.f32.mrf.mxu0
      %v5918 = vpop.f32.mrf.mxu0
      %v5919 = vadd.f32 %v5758, %v5918
      %v5920 = vpop.f32.mrf.mxu0
      %5921 = vmatprep.mubr.bf16.mxu0 %v4543
      %5922 = vmatmul.mubr.bf16.gmra.mxu0 %v4426
      %v5923 = vpop.f32.mrf.mxu0
      %v5924 = vadd.f32 %v5763, %v5923
      %v5925 = vpop.f32.mrf.mxu0
      %v5926 = vpop.f32.mrf.mxu0
      %v5927 = vadd.f32 %v5766, %v5926
      %v5928 = vpop.f32.mrf.mxu0
      %5929 = vmatprep.mubr.bf16.mxu0 %v4555
      %5930 = vmatmul.mubr.bf16.gmra.mxu0 %v4428
      %v5931 = vpop.f32.mrf.mxu0
      %v5932 = vadd.f32 %v5771, %v5931
      %v5933 = vpop.f32.mrf.mxu0
      %v5934 = vpop.f32.mrf.mxu0
      %v5935 = vadd.f32 %v5774, %v5934
      %v5936 = vpop.f32.mrf.mxu0
      %5937 = vmatprep.mubr.bf16.mxu0 %v4567
      %5938 = vmatmul.mubr.bf16.gmra.mxu0 %v4430
      %v5939 = vpop.f32.mrf.mxu0
      %v5940 = vadd.f32 %v5779, %v5939
      %v5941 = vpop.f32.mrf.mxu0
      %v5942 = vpop.f32.mrf.mxu0
      %v5943 = vadd.f32 %v5782, %v5942
      %v5944 = vpop.f32.mrf.mxu0
      %5945 = vmatprep.mubr.bf16.mxu0 %v4579
      %5946 = vmatmul.mubr.bf16.gmra.mxu0 %v4432
      %v5947 = vpop.f32.mrf.mxu0
      %v5948 = vadd.f32 %v5787, %v5947
      %v5949 = vpop.f32.mrf.mxu0
      %v5950 = vpop.f32.mrf.mxu0
      %v5951 = vadd.f32 %v5790, %v5950
      %v5952 = vpop.f32.mrf.mxu0
      %5953 = vmatprep.mubr.bf16.mxu0 %v4591
      %5954 = vmatmul.mubr.bf16.gmra.mxu0 %v4434
      %v5955 = vpop.f32.mrf.mxu0
      %v5956 = vadd.f32 %v5795, %v5955
      %v5957 = vpop.f32.mrf.mxu0
      %v5958 = vpop.f32.mrf.mxu0
      %v5959 = vadd.f32 %v5798, %v5958
      %v5960 = vpop.f32.mrf.mxu0
      %5961 = vmatprep.mubr.bf16.mxu0 %v4603
      %5962 = vmatmul.mubr.bf16.gmra.mxu0 %v4436
      %v5963 = vpop.f32.mrf.mxu0
      %v5964 = vadd.f32 %v5803, %v5963
      %v5965 = vpop.f32.mrf.mxu0
      %v5966 = vpop.f32.mrf.mxu0
      %v5967 = vadd.f32 %v5806, %v5966
      %v5968 = vpop.f32.mrf.mxu0
      %5969 = vmatprep.mubr.bf16.mxu0 %v4615
      %5970 = vmatmul.mubr.bf16.gmra.mxu0 %v4438
      %v5971 = vpop.f32.mrf.mxu0
      %v5972 = vadd.f32 %v5811, %v5971
      %v5973 = vpop.f32.mrf.mxu0
      %v5974 = vpop.f32.mrf.mxu0
      %v5975 = vadd.f32 %v5814, %v5974
      %v5976 = vpop.f32.mrf.mxu0
      %5977 = vmatprep.mubr.bf16.mxu0 %v4627
      %5978 = vmatmul.mubr.bf16.gmra.mxu0 %v4440
      %v5979 = vpop.f32.mrf.mxu0
      %v5980 = vadd.f32 %v5819, %v5979
      %v5981 = vpop.f32.mrf.mxu0
      %v5982 = vpop.f32.mrf.mxu0
      %v5983 = vadd.f32 %v5822, %v5982
      %v5984 = vpop.f32.mrf.mxu0
      %5985 = vmatprep.mubr.bf16.mxu0 %v4639
      %5986 = vmatmul.mubr.bf16.gmra.mxu0 %v4442
      %v5987 = vpop.f32.mrf.mxu0
      %v5988 = vadd.f32 %v5827, %v5987
      %v5989 = vpop.f32.mrf.mxu0
      %v5990 = vpop.f32.mrf.mxu0
      %v5991 = vadd.f32 %v5830, %v5990
      %v5992 = vpop.f32.mrf.mxu0
      %5993 = vmatprep.mubr.bf16.mxu0 %v4763
      %5994 = vmatmul.mubr.bf16.gmra.mxu0 %v4444
      %v5995 = vpop.f32.mrf.mxu0
      %v5996 = vadd.f32 %v5835, %v5995
      %v5997 = vpop.f32.mrf.mxu0
      %v5998 = vpop.f32.mrf.mxu0
      %v5999 = vadd.f32 %v5838, %v5998
      %v6000 = vpop.f32.mrf.mxu0
      %6001 = vmatprep.mubr.bf16.mxu0 %v4782
      %6002 = vmatmul.mubr.bf16.gmra.mxu0 %v4446
      %v6003 = vpop.f32.mrf.mxu0
      %v6004 = vadd.f32 %v5843, %v6003
      %v6005 = vpop.f32.mrf.mxu0
      %v6006 = vpop.f32.mrf.mxu0
      %v6007 = vadd.f32 %v5846, %v6006
      %v6008 = vpop.f32.mrf.mxu0
      %6009 = vdwg.mxu0
      %6010 = vmatprep.subr.bf16.mxu0 0
      %6011 = vmatpush1.bf16.msra.mxu0 %v5293
      %6012 = vmatprep.subr.bf16.mxu0 0
      %6013 = vmatpush1.bf16.msra.mxu0 %v5292
      %6014 = vmatprep.subr.bf16.mxu0 0
      %6015 = vmatpush1.bf16.msra.mxu0 %v5291
      %6016 = vmatprep.subr.bf16.mxu0 0
      %6017 = vmatpush1.bf16.msra.mxu0 %v5290
      %6018 = vmatprep.subr.bf16.mxu0 0
      %6019 = vmatpush1.bf16.msra.mxu0 %v5289
      %6020 = vmatprep.subr.bf16.mxu0 0
      %6021 = vmatpush1.bf16.msra.mxu0 %v5288
      %6022 = vmatprep.subr.bf16.mxu0 0
      %6023 = vmatpush1.bf16.msra.mxu0 %v5287
      %6024 = vmatprep.subr.bf16.mxu0 0
      %6025 = vmatpush1.bf16.msra.mxu0 %v5286
      %6026 = vmatprep.subr.bf16.mxu0 0
      %6027 = vmatpush2.bf16.msra.mxu0 0
      %6028 = vmatprep.subr.bf16.mxu0 0
      %6029 = vmatpush2.bf16.msra.mxu0 0
      %6030 = vmatprep.subr.bf16.mxu0 0
      %6031 = vmatpush2.bf16.msra.mxu0 0
      %6032 = vmatprep.subr.bf16.mxu0 0
      %6033 = vmatpush2.bf16.msra.mxu0 0
      %6034 = vmatprep.subr.bf16.mxu0 0
      %6035 = vmatpush2.bf16.msra.mxu0 0
      %6036 = vmatprep.subr.bf16.mxu0 0
      %6037 = vmatpush2.bf16.msra.mxu0 0
      %6038 = vmatprep.subr.bf16.mxu0 0
      %6039 = vmatpush2.bf16.msra.mxu0 0
      %6040 = vmatprep.subr.bf16.mxu0 0
      %6041 = vmatpush2.bf16.msra.mxu0 0
      %6042 = vmatprep.mubr.bf16.mxu0 0
      %6043 = vmatmul.mubr.bf16.gmra.mxu0 %v4696
      %v6044 = vpop.f32.mrf.mxu0
      %v6045 = vadd.f32 %v5884, %v6044
      %v6046 = vpop.f32.mrf.mxu0
      %v6047 = vpop.f32.mrf.mxu0
      %v6048 = vadd.f32 %v5887, %v6047
      %v6049 = vpop.f32.mrf.mxu0
      %6050 = vmatprep.mubr.bf16.mxu0 0
      %6051 = vmatmul.mubr.bf16.gmra.mxu0 %v4699
      %v6052 = vpop.f32.mrf.mxu0
      %v6053 = vadd.f32 %v5892, %v6052
      %v6054 = vpop.f32.mrf.mxu0
      %v6055 = vpop.f32.mrf.mxu0
      %v6056 = vadd.f32 %v5895, %v6055
      %v6057 = vpop.f32.mrf.mxu0
      %6058 = vmatprep.mubr.bf16.mxu0 0
      %6059 = vmatmul.mubr.bf16.gmra.mxu0 %v4702
      %v6060 = vpop.f32.mrf.mxu0
      %v6061 = vadd.f32 %v5900, %v6060
      %v6062 = vpop.f32.mrf.mxu0
      %v6063 = vpop.f32.mrf.mxu0
      %v6064 = vadd.f32 %v5903, %v6063
      %v6065 = vpop.f32.mrf.mxu0
      %6066 = vmatprep.mubr.bf16.mxu0 0
      %6067 = vmatmul.mubr.bf16.gmra.mxu0 %v4705
      %v6068 = vpop.f32.mrf.mxu0
      %v6069 = vadd.f32 %v5908, %v6068
      %v6070 = vpop.f32.mrf.mxu0
      %v6071 = vpop.f32.mrf.mxu0
      %v6072 = vadd.f32 %v5911, %v6071
      %v6073 = vpop.f32.mrf.mxu0
      %6074 = vmatprep.mubr.bf16.mxu0 0
      %6075 = vmatmul.mubr.bf16.gmra.mxu0 %v4708
      %v6076 = vpop.f32.mrf.mxu0
      %v6077 = vadd.f32 %v5916, %v6076
      %v6078 = vpop.f32.mrf.mxu0
      %v6079 = vpop.f32.mrf.mxu0
      %v6080 = vadd.f32 %v5919, %v6079
      %v6081 = vpop.f32.mrf.mxu0
      %6082 = vmatprep.mubr.bf16.mxu0 0
      %6083 = vmatmul.mubr.bf16.gmra.mxu0 %v4711
      %v6084 = vpop.f32.mrf.mxu0
      %v6085 = vadd.f32 %v5924, %v6084
      %v6086 = vpop.f32.mrf.mxu0
      %v6087 = vpop.f32.mrf.mxu0
      %v6088 = vadd.f32 %v5927, %v6087
      %v6089 = vpop.f32.mrf.mxu0
      %6090 = vmatprep.mubr.bf16.mxu0 0
      %6091 = vmatmul.mubr.bf16.gmra.mxu0 %v4714
      %v6092 = vpop.f32.mrf.mxu0
      %v6093 = vadd.f32 %v5932, %v6092
      %v6094 = vpop.f32.mrf.mxu0
      %v6095 = vpop.f32.mrf.mxu0
      %v6096 = vadd.f32 %v5935, %v6095
      %v6097 = vpop.f32.mrf.mxu0
      %6098 = vmatprep.mubr.bf16.mxu0 0
      %6099 = vmatmul.mubr.bf16.gmra.mxu0 %v4717
      %v6100 = vpop.f32.mrf.mxu0
      %v6101 = vadd.f32 %v5940, %v6100
      %v6102 = vpop.f32.mrf.mxu0
      %v6103 = vpop.f32.mrf.mxu0
      %v6104 = vadd.f32 %v5943, %v6103
      %v6105 = vpop.f32.mrf.mxu0
      %6106 = vmatprep.mubr.bf16.mxu0 0
      %6107 = vmatmul.mubr.bf16.gmra.mxu0 %v4720
      %v6108 = vpop.f32.mrf.mxu0
      %v6109 = vadd.f32 %v5948, %v6108
      %v6110 = vpop.f32.mrf.mxu0
      %v6111 = vpop.f32.mrf.mxu0
      %v6112 = vadd.f32 %v5951, %v6111
      %v6113 = vpop.f32.mrf.mxu0
      %6114 = vmatprep.mubr.bf16.mxu0 0
      %6115 = vmatmul.mubr.bf16.gmra.mxu0 %v4723
      %v6116 = vpop.f32.mrf.mxu0
      %v6117 = vadd.f32 %v5956, %v6116
      %v6118 = vpop.f32.mrf.mxu0
      %v6119 = vpop.f32.mrf.mxu0
      %v6120 = vadd.f32 %v5959, %v6119
      %v6121 = vpop.f32.mrf.mxu0
      %6122 = vmatprep.mubr.bf16.mxu0 0
      %6123 = vmatmul.mubr.bf16.gmra.mxu0 %v4726
      %v6124 = vpop.f32.mrf.mxu0
      %v6125 = vadd.f32 %v5964, %v6124
      %v6126 = vpop.f32.mrf.mxu0
      %v6127 = vpop.f32.mrf.mxu0
      %v6128 = vadd.f32 %v5967, %v6127
      %v6129 = vpop.f32.mrf.mxu0
      %6130 = vmatprep.mubr.bf16.mxu0 0
      %6131 = vmatmul.mubr.bf16.gmra.mxu0 %v4729
      %v6132 = vpop.f32.mrf.mxu0
      %v6133 = vadd.f32 %v5972, %v6132
      %v6134 = vpop.f32.mrf.mxu0
      %v6135 = vpop.f32.mrf.mxu0
      %v6136 = vadd.f32 %v5975, %v6135
      %v6137 = vpop.f32.mrf.mxu0
      %6138 = vmatprep.mubr.bf16.mxu0 0
      %6139 = vmatmul.mubr.bf16.gmra.mxu0 %v4732
      %v6140 = vpop.f32.mrf.mxu0
      %v6141 = vadd.f32 %v5980, %v6140
      %v6142 = vpop.f32.mrf.mxu0
      %v6143 = vpop.f32.mrf.mxu0
      %v6144 = vadd.f32 %v5983, %v6143
      %v6145 = vpop.f32.mrf.mxu0
      %6146 = vmatprep.mubr.bf16.mxu0 0
      %6147 = vmatmul.mubr.bf16.gmra.mxu0 %v4735
      %v6148 = vpop.f32.mrf.mxu0
      %v6149 = vadd.f32 %v5988, %v6148
      %v6150 = vpop.f32.mrf.mxu0
      %v6151 = vpop.f32.mrf.mxu0
      %v6152 = vadd.f32 %v5991, %v6151
      %v6153 = vpop.f32.mrf.mxu0
      %6154 = vmatprep.mubr.bf16.mxu0 0
      %6155 = vmatmul.mubr.bf16.gmra.mxu0 %v4769
      %v6156 = vpop.f32.mrf.mxu0
      %v6157 = vadd.f32 %v5996, %v6156
      %v6158 = vpop.f32.mrf.mxu0
      %v6159 = vpop.f32.mrf.mxu0
      %v6160 = vadd.f32 %v5999, %v6159
      %v6161 = vpop.f32.mrf.mxu0
      %6162 = vmatprep.mubr.bf16.mxu0 0
      %6163 = vmatmul.mubr.bf16.gmra.mxu0 %v4788
      %v6164 = vpop.f32.mrf.mxu0
      %v6165 = vadd.f32 %v6004, %v6164
      %v6166 = vpop.f32.mrf.mxu0
      %v6167 = vpop.f32.mrf.mxu0
      %v6168 = vadd.f32 %v6007, %v6167
      %v6169 = vpop.f32.mrf.mxu0
      %6170 = vdwg.mxu0
      %v6171 = vld [vmem:[%s6] sm:$0x1]
      %v6172 = vlaneseq
      %v6173 = vshrl.u32 %v6172, 7
      %v6174 = vsub.s32 0, %v6173
      %v6175 = vrot.slane %v6171, %v6174
      %v6176 = vmul.f32 %v6045, %v6175
      %v6177 = vmul.f32 %v6048, %v6175
      %v6178 = vmul.f32 %v6053, %v6175
      %v6179 = vmul.f32 %v6056, %v6175
      %v6180 = vmul.f32 %v6061, %v6175
      %v6181 = vmul.f32 %v6064, %v6175
      %v6182 = vmul.f32 %v6069, %v6175
      %v6183 = vmul.f32 %v6072, %v6175
      %v6184 = vmul.f32 %v6077, %v6175
      %v6185 = vmul.f32 %v6080, %v6175
      %v6186 = vmul.f32 %v6085, %v6175
      %v6187 = vmul.f32 %v6088, %v6175
      %v6188 = vmul.f32 %v6093, %v6175
      %v6189 = vmul.f32 %v6096, %v6175
      %v6190 = vmul.f32 %v6101, %v6175
      %v6191 = vmul.f32 %v6104, %v6175
      %v6192 = vmul.f32 %v6109, %v6175
      %v6193 = vmul.f32 %v6112, %v6175
      %v6194 = vmul.f32 %v6117, %v6175
      %v6195 = vmul.f32 %v6120, %v6175
      %v6196 = vmul.f32 %v6125, %v6175
      %v6197 = vmul.f32 %v6128, %v6175
      %v6198 = vmul.f32 %v6133, %v6175
      %v6199 = vmul.f32 %v6136, %v6175
      %v6200 = vmul.f32 %v6141, %v6175
      %v6201 = vmul.f32 %v6144, %v6175
      %v6202 = vmul.f32 %v6149, %v6175
      %v6203 = vmul.f32 %v6152, %v6175
      %v6204 = vmul.f32 %v6157, %v6175
      %v6205 = vmul.f32 %v6160, %v6175
      %v6206 = vmul.f32 %v6165, %v6175
      %v6207 = vmul.f32 %v6168, %v6175
      %v6208 = vld [vmem:[%s6 + $0x1] sm:$0x1]
      %v6209 = vlaneseq
      %v6210 = vshrl.u32 %v6209, 7
      %v6211 = vsub.s32 0, %v6210
      %v6212 = vrot.slane %v6208, %v6211
      %v6213 = vadd.f32 %v6176, %v6212
      %v6214 = vadd.f32 %v6177, %v6212
      %v6215 = vadd.f32 %v6178, %v6212
      %v6216 = vadd.f32 %v6179, %v6212
      %v6217 = vadd.f32 %v6180, %v6212
      %v6218 = vadd.f32 %v6181, %v6212
      %v6219 = vadd.f32 %v6182, %v6212
      %v6220 = vadd.f32 %v6183, %v6212
      %v6221 = vadd.f32 %v6184, %v6212
      %v6222 = vadd.f32 %v6185, %v6212
      %v6223 = vadd.f32 %v6186, %v6212
      %v6224 = vadd.f32 %v6187, %v6212
      %v6225 = vadd.f32 %v6188, %v6212
      %v6226 = vadd.f32 %v6189, %v6212
      %v6227 = vadd.f32 %v6190, %v6212
      %v6228 = vadd.f32 %v6191, %v6212
      %v6229 = vadd.f32 %v6192, %v6212
      %v6230 = vadd.f32 %v6193, %v6212
      %v6231 = vadd.f32 %v6194, %v6212
      %v6232 = vadd.f32 %v6195, %v6212
      %v6233 = vadd.f32 %v6196, %v6212
      %v6234 = vadd.f32 %v6197, %v6212
      %v6235 = vadd.f32 %v6198, %v6212
      %v6236 = vadd.f32 %v6199, %v6212
      %v6237 = vadd.f32 %v6200, %v6212
      %v6238 = vadd.f32 %v6201, %v6212
      %v6239 = vadd.f32 %v6202, %v6212
      %v6240 = vadd.f32 %v6203, %v6212
      %v6241 = vadd.f32 %v6204, %v6212
      %v6242 = vadd.f32 %v6205, %v6212
      %v6243 = vadd.f32 %v6206, %v6212
      %v6244 = vadd.f32 %v6207, %v6212
      %v6245 = vmax.f32 %v6213, 0.0
      %v6246 = vmax.f32 %v6214, 0.0
      %v6247 = vmax.f32 %v6215, 0.0
      %v6248 = vmax.f32 %v6216, 0.0
      %v6249 = vmax.f32 %v6217, 0.0
      %v6250 = vmax.f32 %v6218, 0.0
      %v6251 = vmax.f32 %v6219, 0.0
      %v6252 = vmax.f32 %v6220, 0.0
      %v6253 = vmax.f32 %v6221, 0.0
      %v6254 = vmax.f32 %v6222, 0.0
      %v6255 = vmax.f32 %v6223, 0.0
      %v6256 = vmax.f32 %v6224, 0.0
      %v6257 = vmax.f32 %v6225, 0.0
      %v6258 = vmax.f32 %v6226, 0.0
      %v6259 = vmax.f32 %v6227, 0.0
      %v6260 = vmax.f32 %v6228, 0.0
      %v6261 = vmax.f32 %v6229, 0.0
      %v6262 = vmax.f32 %v6230, 0.0
      %v6263 = vmax.f32 %v6231, 0.0
      %v6264 = vmax.f32 %v6232, 0.0
      %v6265 = vmax.f32 %v6233, 0.0
      %v6266 = vmax.f32 %v6234, 0.0
      %v6267 = vmax.f32 %v6235, 0.0
      %v6268 = vmax.f32 %v6236, 0.0
      %v6269 = vmax.f32 %v6237, 0.0
      %v6270 = vmax.f32 %v6238, 0.0
      %v6271 = vmax.f32 %v6239, 0.0
      %v6272 = vmax.f32 %v6240, 0.0
      %v6273 = vmax.f32 %v6241, 0.0
      %v6274 = vmax.f32 %v6242, 0.0
      %v6275 = vmax.f32 %v6243, 0.0
      %v6276 = vmax.f32 %v6244, 0.0
      %6277 = vst [vmem:[%s278] sm:$0xff] %v6245
      %6278 = vst [vmem:[%s278 + $0x8] sm:$0xff] %v6246
      %6279 = vst [vmem:[%s278 + $0x10] sm:$0xff] %v6247
      %6280 = vst [vmem:[%s278 + $0x18] sm:$0xff] %v6248
      %6281 = vst [vmem:[%s278 + $0x20] sm:$0xff] %v6249
      %6282 = vst [vmem:[%s278 + $0x28] sm:$0xff] %v6250
      %6283 = vst [vmem:[%s278 + $0x30] sm:$0xff] %v6251
      %6284 = vst [vmem:[%s278 + $0x38] sm:$0xff] %v6252
      %6285 = vst [vmem:[%s278 + $0x40] sm:$0xff] %v6253
      %6286 = vst [vmem:[%s278 + $0x48] sm:$0xff] %v6254
      %6287 = vst [vmem:[%s278 + $0x50] sm:$0xff] %v6255
      %6288 = vst [vmem:[%s278 + $0x58] sm:$0xff] %v6256
      %6289 = vst [vmem:[%s278 + $0x60] sm:$0xff] %v6257
      %6290 = vst [vmem:[%s278 + $0x68] sm:$0xff] %v6258
      %6291 = vst [vmem:[%s278 + $0x70] sm:$0xff] %v6259
      %6292 = vst [vmem:[%s278 + $0x78] sm:$0xff] %v6260
      %6293 = vst [vmem:[%s278 + $0x80] sm:$0xff] %v6261
      %6294 = vst [vmem:[%s278 + $0x88] sm:$0xff] %v6262
      %6295 = vst [vmem:[%s278 + $0x90] sm:$0xff] %v6263
      %6296 = vst [vmem:[%s278 + $0x98] sm:$0xff] %v6264
      %6297 = vst [vmem:[%s278 + $0xa0] sm:$0xff] %v6265
      %6298 = vst [vmem:[%s278 + $0xa8] sm:$0xff] %v6266
      %6299 = vst [vmem:[%s278 + $0xb0] sm:$0xff] %v6267
      %6300 = vst [vmem:[%s278 + $0xb8] sm:$0xff] %v6268
      %6301 = vst [vmem:[%s278 + $0xc0] sm:$0xff] %v6269
      %6302 = vst [vmem:[%s278 + $0xc8] sm:$0xff] %v6270
      %6303 = vst [vmem:[%s278 + $0xd0] sm:$0xff] %v6271
      %6304 = vst [vmem:[%s278 + $0xd8] sm:$0xff] %v6272
      %6305 = vst [vmem:[%s278 + $0xe0] sm:$0xff] %v6273
      %6306 = vst [vmem:[%s278 + $0xe8] sm:$0xff] %v6274
      %6307 = vst [vmem:[%s278 + $0xf0] sm:$0xff] %v6275
      %6308 = vst [vmem:[%s278 + $0xf8] sm:$0xff] %v6276
      %p6309 = scmp.lt.s32.totalorder %s18, 1
      %s6310 = scalar_select %p6309, %s18, 1
      %s6311 = smul.addr %s6310, 32
      %s6312 = smul.addr %s6311, 8
      %s6313 = scalar_lea.vmem %s7, %s6312
      // Predicated region
      $region49: #{model_viz_forward.1} parent=47 // pred_check
        %p6314 = pneg %p188
      $region50: #{model_viz_forward.1} parent=47 // pred_check_branch
        %6316 = sbr.rel (%p6314) target = $region52
      $region51: #{model_viz_forward.1} parent=47 // pred_region
        _
      $region52: #{model_viz_forward.1} parent=47 // pred_fallthru
        _
    $region48: #{model_viz_forward.1} parent=5 // pred_fallthru
      _
    %p6317 = scmp.le.s32.totalorder 2, %s13
    // Predicated region
    $region53: #{model_viz_forward.1} parent=5 // pred_check
      %p6318 = pneg %p6317
    $region54: #{model_viz_forward.1} parent=5 // pred_check_branch
      %6320 = sbr.rel (%p6318) target = $region56
    $region55: #{model_viz_forward.1} parent=5 // pred_region
      %s6321 = ssub.s32 %s13, 2
      // Predicated region
      $region57: #{model_viz_forward.1} parent=55 // pred_check
        %p6322 = pneg %p194
      $region58: #{model_viz_forward.1} parent=55 // pred_check_branch
        %6324 = sbr.rel (%p6322) target = $region60
      $region59: #{model_viz_forward.1} parent=55 // pred_region
        %p6325 = scmp.lt.s32.totalorder %s19, 1
        %s6326 = scalar_select %p6325, %s19, 1
        %s6327 = smul.addr %s6326, 32
        %s6328 = smul.addr %s6327, 8
        %s6329 = scalar_lea.vmem %s7, %s6328
      $region60: #{model_viz_forward.1} parent=55 // pred_fallthru
        _
    $region56: #{model_viz_forward.1} parent=5 // pred_fallthru
      _
  $region6: #{model_viz_forward.1} parent=0 // loop_footer
    %s17 = sadd.s32 1, %s13
  $region7: #{model_viz_forward.1} parent=0 // loop_footer_branch
    %12 = sbr.rel target = $region3
  $region8: #{model_viz_forward.1} parent=0 // loop_exit
    _

</llo_original>
